<compile_context>
chip_gen: v5e
topology: v5e:2x2
jax: 0.10.0
libtpu: 0.0.40
codegen_flags: <defaults>
</compile_context>

<pallas_src>
import jax
import jax.numpy as jnp
from jax import lax
from jax.experimental import pallas as pl
from jax.experimental.pallas import tpu as pltpu

Z_SIZE = 50
Z_PAD = 64          # layer-1 K dim padded to a lane-friendly size
H1, H2, H3 = 256, 512, 768
BN_EPS = 1e-5


def _supports_bf16_vpu():
    """bf16 elementwise is native on v6e/v7x; v5e and older emulate it."""
    try:
        kind = jax.devices()[0].device_kind.lower()
    except Exception:
        return False
    for old in ("v2", "v3", "v4", "v5"):
        if old in kind:
            return False
    return True


def _const_block_spec(shape):
    """Constant-index weight tile: fetched once, VMEM-resident, single-buffered."""
    try:
        return pl.BlockSpec(shape, lambda i: (0, 0), pipeline_mode=pl.Buffered(1))
    except TypeError:  # older jax without pipeline_mode kwarg
        return pl.BlockSpec(shape, lambda i: (0, 0))


def _make_kernel(groups_per_step: int, group_batch: int, elementwise_bf16: bool):
    rows = groups_per_step * group_batch
    inv_b = 1.0 / float(group_batch)

    def kernel(z_ref,
               w1_ref, g1_ref, be1_ref,
               w2_ref, g2_ref, be2_ref,
               w3_ref, g3_ref, be3_ref,
               out_ref):
        def linear_bn(x_bf16, w_ref, g_ref, be_ref, *, bf16_out):
            # MXU matmul: bf16 operands, f32 accumulation.  Linear bias is
            # intentionally omitted (training-mode BN cancels it exactly).
            h = jnp.dot(x_bf16, w_ref[...].astype(jnp.bfloat16),
                        preferred_element_type=jnp.float32)          # (rows,F) f32
            f = h.shape[-1]
            h3 = h.reshape(groups_per_step, group_batch, f)
            # One-pass per-group stats in f32 (no full-width diff temporary).
            s = jnp.sum(h3, axis=1, keepdims=True)                    # (G,1,F)
            ss = jnp.sum(h3 * h3, axis=1, keepdims=True)              # (G,1,F)
            mean = s * inv_b
            var = jnp.maximum(ss * inv_b - mean * mean, 0.0)
            scale = g_ref[...] * lax.rsqrt(var + BN_EPS)              # (G,1,F)
            shift = be_ref[...] - mean * scale                        # (G,1,F)
            if bf16_out:
                y = (h3.astype(jnp.bfloat16) * scale.astype(jnp.bfloat16)
                     + shift.astype(jnp.bfloat16))
            else:
                y = h3 * scale + shift
            return y.reshape(rows, f)

        x0 = z_ref[...].astype(jnp.bfloat16)
        a1 = jnp.maximum(
            linear_bn(x0, w1_ref, g1_ref, be1_ref, bf16_out=elementwise_bf16), 0.0)
        a2 = jnp.maximum(
            linear_bn(a1.astype(jnp.bfloat16), w2_ref, g2_ref, be2_ref,
                      bf16_out=elementwise_bf16), 0.0)
        # Final layer: normalize + tanh in f32 (accuracy; v5e EUP has no bf16).
        a3 = linear_bn(a2.astype(jnp.bfloat16), w3_ref, g3_ref, be3_ref,
                       bf16_out=False)
        out_ref[...] = jnp.tanh(a3).astype(out_ref.dtype)

    return kernel


def _pick_groups_per_step(num_groups: int, bn_batch: int, target_rows: int = 512):
    """Default tiling: ~512-row steps, and >=2 grid steps whenever possible so
    the 'parallel' grid axis can be sharded across v7x's two TensorCores."""
    if num_groups == 1:
        return 1
    if bn_batch % 8 != 0:
        # Multi-step tiling needs sublane-aligned row blocks; fall back to one step.
        return num_groups
    max_gps = max(1, num_groups // 2)                   # guarantee >= 2 steps
    gps_target = max(1, min(max_gps, target_rows // bn_batch))
    for d in range(gps_target, 0, -1):
        if num_groups % d == 0:
            return d
    return 1


def generator_forward(z, params, *, bn_batch=None, rows_per_step=None,
                      elementwise_bf16=None, out_dtype=jnp.float32):
    """Fused Generator forward.

    z: (N, Z_SIZE) float32.  Returns (N, 768) `out_dtype` (default f32).

    bn_batch: size of one BatchNorm batch (one group == one PyTorch forward
      call).  Default: the whole input is a single BN batch.
    rows_per_step: rows per grid step (multiple of bn_batch).  Default picks
      ~512 rows and >=2 steps when the group structure allows.
    elementwise_bf16: run layer-1/2 normalize+affine+ReLU in bf16 (auto:
      enabled on v6e/v7x, disabled on v5e and older).
    """
    n = z.shape[0]
    if bn_batch is None:
        bn_batch = n
    assert n % bn_batch == 0, "N must be a multiple of bn_batch"
    num_groups = n // bn_batch

    if elementwise_bf16 is None:
        elementwise_bf16 = _supports_bf16_vpu()

    if rows_per_step is None:
        rows_per_step = _pick_groups_per_step(num_groups, bn_batch) * bn_batch

    assert rows_per_step % bn_batch == 0 and n % rows_per_step == 0
    groups_per_step = rows_per_step // bn_batch
    num_steps = n // rows_per_step
    if num_steps > 1:
        assert rows_per_step % 8 == 0, "tiled batch blocks must be sublane-aligned"
    if groups_per_step > 1:
        assert bn_batch % 8 == 0, "stacked BN groups require bn_batch % 8 == 0"

    # Pad z's feature dim to match the (possibly zero-padded) w1 K dimension.
    zk = params["w1"].shape[0]
    if z.shape[1] < zk:
        z = jnp.pad(z, ((0, 0), (0, zk - z.shape[1])))

    weight_args = (
        params["w1"], params["g1"], params["be1"],
        params["w2"], params["g2"], params["be2"],
        params["w3"], params["g3"], params["be3"],
    )

    in_specs = [pl.BlockSpec((rows_per_step, zk), lambda i: (i, 0))]
    in_specs += [_const_block_spec(p.shape) for p in weight_args]
    out_spec = pl.BlockSpec((rows_per_step, H3), lambda i: (i, 0))

    out_itemsize = jnp.dtype(out_dtype).itemsize
    flops = 2 * n * (zk * H1 + H1 * H2 + H2 * H3)
    weight_bytes = sum(int(p.size) * p.dtype.itemsize for p in weight_args)
    bytes_accessed = int(z.size * z.dtype.itemsize + n * H3 * out_itemsize
                         + weight_bytes)
    cost = pl.CostEstimate(flops=flops, transcendentals=n * H3,
                           bytes_accessed=bytes_accessed)

    # Explicit scoped-VMEM budget: double-buffered z/out tiles + f32
    # intermediates + resident weights, with headroom.  Keeps bigger tiles
    # compiling on v5e (16 MiB default) while staying inside v7x's 64 MiB.
    per_step_io = 2 * rows_per_step * (zk * z.dtype.itemsize + H3 * out_itemsize)
    per_step_act = 2 * rows_per_step * (H1 + H2 + H3) * 4
    vmem_limit = int(min(max(32 << 20,
                             (weight_bytes + per_step_io + per_step_act) * 3 // 2),
                         56 << 20))

    return pl.pallas_call(
        _make_kernel(groups_per_step, bn_batch, elementwise_bf16),
        grid=(num_steps,),
        in_specs=in_specs,
        out_specs=out_spec,
        out_shape=jax.ShapeDtypeStruct((n, H3), out_dtype),
        compiler_params=pltpu.CompilerParams(
            dimension_semantics=("parallel",),   # shard steps across v7x's 2 TCs
            vmem_limit_bytes=vmem_limit),
        cost_estimate=cost,
    )(z, *weight_args)


def init_params(key):
    """PyTorch-style init.  nn.Linear(in,out): W (out,in), b (out,), both
    U(-1/sqrt(in), 1/sqrt(in)).  W stored pre-transposed as (in,out); 1-D
    params stored as (1,F) rows for a clean (sublane, lane) layout."""
    ks = jax.random.split(key, 6)

    def lin(kw, kb, fan_in, fan_out):
        bound = 1.0 / (fan_in ** 0.5)
        w = jax.random.uniform(kw, (fan_in, fan_out), jnp.float32, -bound, bound)
        b = jax.random.uniform(kb, (1, fan_out), jnp.float32, -bound, bound)
        return w, b

    w1, b1 = lin(ks[0], ks[1], Z_SIZE, H1)
    w2, b2 = lin(ks[2], ks[3], H1, H2)
    w3, b3 = lin(ks[4], ks[5], H2, H3)
    return {
        "w1": w1, "b1": b1, "g1": jnp.ones((1, H1), jnp.float32), "be1": jnp.zeros((1, H1), jnp.float32),
        "w2": w2, "b2": b2, "g2": jnp.ones((1, H2), jnp.float32), "be2": jnp.zeros((1, H2), jnp.float32),
        "w3": w3, "b3": b3, "g3": jnp.ones((1, H3), jnp.float32), "be3": jnp.zeros((1, H3), jnp.float32),
    }


def to_kernel_params(p):
    """Kernel-side params: bf16 weights (halve HBM traffic, native MXU dtype),
    w1 zero-padded along K from 50 to 64, f32 BN affine.  Linear biases are
    dropped (cancelled exactly by training-mode BN)."""
    out = {}
    for i in (1, 2, 3):
        w = p[f"w{i}"].astype(jnp.bfloat16)
        if i == 1:
            w = jnp.pad(w, ((0, Z_PAD - w.shape[0]), (0, 0)))
        out[f"w{i}"] = w
        out[f"g{i}"] = p[f"g{i}"]
        out[f"be{i}"] = p[f"be{i}"]
    return out


def reference_forward(z, p, *, bn_batch=None):
    """Pure-JAX f32 reference, biases included (module semantics)."""
    n = z.shape[0]
    if bn_batch is None:
        bn_batch = n
    g = n // bn_batch

    def layer(x, w, b, gamma, beta, act):
        h = (x @ w + b).reshape(g, bn_batch, -1)
        mean = jnp.mean(h, axis=1, keepdims=True)
        var = jnp.mean((h - mean) ** 2, axis=1, keepdims=True)
        hn = (h - mean) / jnp.sqrt(var + BN_EPS)
        return act((hn * gamma + beta).reshape(n, -1))

    out = layer(z, p["w1"], p["b1"], p["g1"], p["be1"], jax.nn.relu)
    out = layer(out, p["w2"], p["b2"], p["g2"], p["be2"], jax.nn.relu)
    out = layer(out, p["w3"], p["b3"], p["g3"], p["be3"], jnp.tanh)
    return out


if __name__ == "__main__":
    key = jax.random.PRNGKey(0)
    k1, k2, kp = jax.random.split(key, 3)

    params = init_params(kp)
    kparams = to_kernel_params(params)

    # Case 1: exact module semantics -- whole input is one BN batch
    # (blca_batch_size stand-in), single grid step.
    B = 32
    z1 = jax.random.normal(k1, (B, Z_SIZE), dtype=jnp.float32)
    out1 = jax.block_until_ready(generator_forward(z1, kparams))
    ref1 = reference_forward(z1, params)
    assert out1.shape == (B, H3)
    assert float(jnp.max(jnp.abs(out1 - ref1))) < 1.5e-1   # bf16 tolerance
    assert float(jnp.mean(jnp.abs(out1 - ref1))) < 1.5e-2

    # Case 2: 32 independent BN batches of 8 stacked into one kernel call.
    # Default heuristic -> 128-row steps, 2 grid steps (megacore-shardable);
    # weights stay VMEM-resident across steps.
    G, GB = 32, 8
    z2 = jax.random.normal(k2, (G * GB, Z_SIZE), dtype=jnp.float32)
    out2 = jax.block_until_ready(generator_forward(z2, kparams, bn_batch=GB))
    ref2 = reference_forward(z2, params, bn_batch=GB)
    assert out2.shape == (G * GB, H3)
    assert float(jnp.max(jnp.abs(out2 - ref2))) < 1.5e-1
    assert float(jnp.mean(jnp.abs(out2 - ref2))) < 1.5e-2

    print("KERNEL_OK")
</pallas_src>

<mosaic_0001>
module attributes {stable_mosaic.version = 11 : i64} {
  func.func @kernel(%arg0: i32, %arg1: memref<32x64xf32, #tpu.memory_space<vmem>>, %arg2: memref<64x256xbf16, #tpu.memory_space<vmem>>, %arg3: memref<1x256xf32, #tpu.memory_space<vmem>>, %arg4: memref<1x256xf32, #tpu.memory_space<vmem>>, %arg5: memref<256x512xbf16, #tpu.memory_space<vmem>>, %arg6: memref<1x512xf32, #tpu.memory_space<vmem>>, %arg7: memref<1x512xf32, #tpu.memory_space<vmem>>, %arg8: memref<512x768xbf16, #tpu.memory_space<vmem>>, %arg9: memref<1x768xf32, #tpu.memory_space<vmem>>, %arg10: memref<1x768xf32, #tpu.memory_space<vmem>>, %arg11: memref<32x768xf32, #tpu.memory_space<vmem>>) attributes {dimension_semantics = [#tpu.dimension_semantics<parallel>], iteration_bounds = array<i64: 1>, scalar_prefetch = 0 : i64, scratch_operands = 0 : i64, tpu.core_type = #tpu.core_type<tc>, window_params = [{transform_indices = @transform_0, window_bounds = array<i64: 32, 64>}, {pipeline_mode = #tpu.pipeline_mode<synchronous>, transform_indices = @transform_1, window_bounds = array<i64: 64, 256>}, {pipeline_mode = #tpu.pipeline_mode<synchronous>, transform_indices = @transform_2, window_bounds = array<i64: 1, 256>}, {pipeline_mode = #tpu.pipeline_mode<synchronous>, transform_indices = @transform_3, window_bounds = array<i64: 1, 256>}, {pipeline_mode = #tpu.pipeline_mode<synchronous>, transform_indices = @transform_4, window_bounds = array<i64: 256, 512>}, {pipeline_mode = #tpu.pipeline_mode<synchronous>, transform_indices = @transform_5, window_bounds = array<i64: 1, 512>}, {pipeline_mode = #tpu.pipeline_mode<synchronous>, transform_indices = @transform_6, window_bounds = array<i64: 1, 512>}, {pipeline_mode = #tpu.pipeline_mode<synchronous>, transform_indices = @transform_7, window_bounds = array<i64: 512, 768>}, {pipeline_mode = #tpu.pipeline_mode<synchronous>, transform_indices = @transform_8, window_bounds = array<i64: 1, 768>}, {pipeline_mode = #tpu.pipeline_mode<synchronous>, transform_indices = @transform_9, window_bounds = array<i64: 1, 768>}, {transform_indices = @transform_10, window_bounds = array<i64: 32, 768>}]} {
    %c0 = arith.constant 0 : index
    %c0_0 = arith.constant 0 : index
    %0 = vector.load %arg1[%c0, %c0_0] : memref<32x64xf32, #tpu.memory_space<vmem>>, vector<32x64xf32>
    %1 = arith.truncf %0 : vector<32x64xf32> to vector<32x64xbf16>
    %c0_1 = arith.constant 0 : index
    %c0_2 = arith.constant 0 : index
    %2 = vector.load %arg2[%c0_1, %c0_2] : memref<64x256xbf16, #tpu.memory_space<vmem>>, vector<64x256xbf16>
    %cst = arith.constant dense<0.000000e+00> : vector<32x256xf32>
    %3 = tpu.matmul %1, %2, %cst {dimension_numbers = #tpu.dot_dimension_numbers<[1], [0], [0], [1], [0, 0, 1, 1], [], []>} : vector<32x64xbf16>, vector<64x256xbf16>, vector<32x256xf32> -> vector<32x256xf32>
    %4 = vector.shape_cast %3 : vector<32x256xf32> to vector<1x32x256xf32>
    %cst_3 = arith.constant dense<0.000000e+00> : vector<1x256xf32>
    %5 = vector.multi_reduction <add>, %4, %cst_3 [1] : vector<1x32x256xf32> to vector<1x256xf32>
    %6 = vector.shape_cast %5 : vector<1x256xf32> to vector<1x1x256xf32>
    %7 = arith.mulf %4, %4 : vector<1x32x256xf32>
    %cst_4 = arith.constant dense<0.000000e+00> : vector<1x256xf32>
    %8 = vector.multi_reduction <add>, %7, %cst_4 [1] : vector<1x32x256xf32> to vector<1x256xf32>
    %9 = vector.shape_cast %8 : vector<1x256xf32> to vector<1x1x256xf32>
    %cst_5 = arith.constant 3.125000e-02 : f32
    %10 = vector.broadcast %cst_5 : f32 to vector<1x1x256xf32>
    %11 = arith.mulf %6, %10 : vector<1x1x256xf32>
    %cst_6 = arith.constant 3.125000e-02 : f32
    %12 = vector.broadcast %cst_6 : f32 to vector<1x1x256xf32>
    %13 = arith.mulf %9, %12 : vector<1x1x256xf32>
    %14 = arith.mulf %11, %11 : vector<1x1x256xf32>
    %15 = arith.subf %13, %14 : vector<1x1x256xf32>
    %cst_7 = arith.constant 0.000000e+00 : f32
    %16 = vector.broadcast %cst_7 : f32 to vector<1x1x256xf32>
    %17 = arith.maximumf %15, %16 : vector<1x1x256xf32>
    %c0_8 = arith.constant 0 : index
    %c0_9 = arith.constant 0 : index
    %18 = vector.load %arg3[%c0_8, %c0_9] : memref<1x256xf32, #tpu.memory_space<vmem>>, vector<1x256xf32>
    %cst_10 = arith.constant 9.99999974E-6 : f32
    %19 = vector.broadcast %cst_10 : f32 to vector<1x1x256xf32>
    %20 = arith.addf %17, %19 : vector<1x1x256xf32>
    %21 = math.rsqrt %20 : vector<1x1x256xf32>
    %22 = vector.shape_cast %18 : vector<1x256xf32> to vector<1x1x256xf32>
    %23 = arith.mulf %22, %21 : vector<1x1x256xf32>
    %c0_11 = arith.constant 0 : index
    %c0_12 = arith.constant 0 : index
    %24 = vector.load %arg4[%c0_11, %c0_12] : memref<1x256xf32, #tpu.memory_space<vmem>>, vector<1x256xf32>
    %25 = arith.mulf %11, %23 : vector<1x1x256xf32>
    %26 = vector.shape_cast %24 : vector<1x256xf32> to vector<1x1x256xf32>
    %27 = arith.subf %26, %25 : vector<1x1x256xf32>
    %28 = arith.truncf %4 : vector<1x32x256xf32> to vector<1x32x256xbf16>
    %29 = arith.truncf %23 : vector<1x1x256xf32> to vector<1x1x256xbf16>
    %30 = vector.broadcast %29 : vector<1x1x256xbf16> to vector<1x32x256xbf16>
    %31 = arith.mulf %28, %30 : vector<1x32x256xbf16>
    %32 = arith.truncf %27 : vector<1x1x256xf32> to vector<1x1x256xbf16>
    %33 = vector.broadcast %32 : vector<1x1x256xbf16> to vector<1x32x256xbf16>
    %34 = arith.addf %31, %33 : vector<1x32x256xbf16>
    %35 = vector.shape_cast %34 : vector<1x32x256xbf16> to vector<32x256xbf16>
    %cst_13 = arith.constant 0.000000e+00 : bf16
    %36 = vector.broadcast %cst_13 : bf16 to vector<32x256xbf16>
    %37 = arith.maximumf %35, %36 : vector<32x256xbf16>
    %c0_14 = arith.constant 0 : index
    %c0_15 = arith.constant 0 : index
    %38 = vector.load %arg5[%c0_14, %c0_15] : memref<256x512xbf16, #tpu.memory_space<vmem>>, vector<256x512xbf16>
    %cst_16 = arith.constant dense<0.000000e+00> : vector<32x512xf32>
    %39 = tpu.matmul %37, %38, %cst_16 {dimension_numbers = #tpu.dot_dimension_numbers<[1], [0], [0], [1], [0, 0, 1, 1], [], []>} : vector<32x256xbf16>, vector<256x512xbf16>, vector<32x512xf32> -> vector<32x512xf32>
    %40 = vector.shape_cast %39 : vector<32x512xf32> to vector<1x32x512xf32>
    %cst_17 = arith.constant dense<0.000000e+00> : vector<1x512xf32>
    %41 = vector.multi_reduction <add>, %40, %cst_17 [1] : vector<1x32x512xf32> to vector<1x512xf32>
    %42 = vector.shape_cast %41 : vector<1x512xf32> to vector<1x1x512xf32>
    %43 = arith.mulf %40, %40 : vector<1x32x512xf32>
    %cst_18 = arith.constant dense<0.000000e+00> : vector<1x512xf32>
    %44 = vector.multi_reduction <add>, %43, %cst_18 [1] : vector<1x32x512xf32> to vector<1x512xf32>
    %45 = vector.shape_cast %44 : vector<1x512xf32> to vector<1x1x512xf32>
    %cst_19 = arith.constant 3.125000e-02 : f32
    %46 = vector.broadcast %cst_19 : f32 to vector<1x1x512xf32>
    %47 = arith.mulf %42, %46 : vector<1x1x512xf32>
    %cst_20 = arith.constant 3.125000e-02 : f32
    %48 = vector.broadcast %cst_20 : f32 to vector<1x1x512xf32>
    %49 = arith.mulf %45, %48 : vector<1x1x512xf32>
    %50 = arith.mulf %47, %47 : vector<1x1x512xf32>
    %51 = arith.subf %49, %50 : vector<1x1x512xf32>
    %cst_21 = arith.constant 0.000000e+00 : f32
    %52 = vector.broadcast %cst_21 : f32 to vector<1x1x512xf32>
    %53 = arith.maximumf %51, %52 : vector<1x1x512xf32>
    %c0_22 = arith.constant 0 : index
    %c0_23 = arith.constant 0 : index
    %54 = vector.load %arg6[%c0_22, %c0_23] : memref<1x512xf32, #tpu.memory_space<vmem>>, vector<1x512xf32>
    %cst_24 = arith.constant 9.99999974E-6 : f32
    %55 = vector.broadcast %cst_24 : f32 to vector<1x1x512xf32>
    %56 = arith.addf %53, %55 : vector<1x1x512xf32>
    %57 = math.rsqrt %56 : vector<1x1x512xf32>
    %58 = vector.shape_cast %54 : vector<1x512xf32> to vector<1x1x512xf32>
    %59 = arith.mulf %58, %57 : vector<1x1x512xf32>
    %c0_25 = arith.constant 0 : index
    %c0_26 = arith.constant 0 : index
    %60 = vector.load %arg7[%c0_25, %c0_26] : memref<1x512xf32, #tpu.memory_space<vmem>>, vector<1x512xf32>
    %61 = arith.mulf %47, %59 : vector<1x1x512xf32>
    %62 = vector.shape_cast %60 : vector<1x512xf32> to vector<1x1x512xf32>
    %63 = arith.subf %62, %61 : vector<1x1x512xf32>
    %64 = arith.truncf %40 : vector<1x32x512xf32> to vector<1x32x512xbf16>
    %65 = arith.truncf %59 : vector<1x1x512xf32> to vector<1x1x512xbf16>
    %66 = vector.broadcast %65 : vector<1x1x512xbf16> to vector<1x32x512xbf16>
    %67 = arith.mulf %64, %66 : vector<1x32x512xbf16>
    %68 = arith.truncf %63 : vector<1x1x512xf32> to vector<1x1x512xbf16>
    %69 = vector.broadcast %68 : vector<1x1x512xbf16> to vector<1x32x512xbf16>
    %70 = arith.addf %67, %69 : vector<1x32x512xbf16>
    %71 = vector.shape_cast %70 : vector<1x32x512xbf16> to vector<32x512xbf16>
    %cst_27 = arith.constant 0.000000e+00 : bf16
    %72 = vector.broadcast %cst_27 : bf16 to vector<32x512xbf16>
    %73 = arith.maximumf %71, %72 : vector<32x512xbf16>
    %c0_28 = arith.constant 0 : index
    %c0_29 = arith.constant 0 : index
    %74 = vector.load %arg8[%c0_28, %c0_29] : memref<512x768xbf16, #tpu.memory_space<vmem>>, vector<512x768xbf16>
    %cst_30 = arith.constant dense<0.000000e+00> : vector<32x768xf32>
    %75 = tpu.matmul %73, %74, %cst_30 {dimension_numbers = #tpu.dot_dimension_numbers<[1], [0], [0], [1], [0, 0, 1, 1], [], []>} : vector<32x512xbf16>, vector<512x768xbf16>, vector<32x768xf32> -> vector<32x768xf32>
    %76 = vector.shape_cast %75 : vector<32x768xf32> to vector<1x32x768xf32>
    %cst_31 = arith.constant dense<0.000000e+00> : vector<1x768xf32>
    %77 = vector.multi_reduction <add>, %76, %cst_31 [1] : vector<1x32x768xf32> to vector<1x768xf32>
    %78 = vector.shape_cast %77 : vector<1x768xf32> to vector<1x1x768xf32>
    %79 = arith.mulf %76, %76 : vector<1x32x768xf32>
    %cst_32 = arith.constant dense<0.000000e+00> : vector<1x768xf32>
    %80 = vector.multi_reduction <add>, %79, %cst_32 [1] : vector<1x32x768xf32> to vector<1x768xf32>
    %81 = vector.shape_cast %80 : vector<1x768xf32> to vector<1x1x768xf32>
    %cst_33 = arith.constant 3.125000e-02 : f32
    %82 = vector.broadcast %cst_33 : f32 to vector<1x1x768xf32>
    %83 = arith.mulf %78, %82 : vector<1x1x768xf32>
    %cst_34 = arith.constant 3.125000e-02 : f32
    %84 = vector.broadcast %cst_34 : f32 to vector<1x1x768xf32>
    %85 = arith.mulf %81, %84 : vector<1x1x768xf32>
    %86 = arith.mulf %83, %83 : vector<1x1x768xf32>
    %87 = arith.subf %85, %86 : vector<1x1x768xf32>
    %cst_35 = arith.constant 0.000000e+00 : f32
    %88 = vector.broadcast %cst_35 : f32 to vector<1x1x768xf32>
    %89 = arith.maximumf %87, %88 : vector<1x1x768xf32>
    %c0_36 = arith.constant 0 : index
    %c0_37 = arith.constant 0 : index
    %90 = vector.load %arg9[%c0_36, %c0_37] : memref<1x768xf32, #tpu.memory_space<vmem>>, vector<1x768xf32>
    %cst_38 = arith.constant 9.99999974E-6 : f32
    %91 = vector.broadcast %cst_38 : f32 to vector<1x1x768xf32>
    %92 = arith.addf %89, %91 : vector<1x1x768xf32>
    %93 = math.rsqrt %92 : vector<1x1x768xf32>
    %94 = vector.shape_cast %90 : vector<1x768xf32> to vector<1x1x768xf32>
    %95 = arith.mulf %94, %93 : vector<1x1x768xf32>
    %c0_39 = arith.constant 0 : index
    %c0_40 = arith.constant 0 : index
    %96 = vector.load %arg10[%c0_39, %c0_40] : memref<1x768xf32, #tpu.memory_space<vmem>>, vector<1x768xf32>
    %97 = arith.mulf %83, %95 : vector<1x1x768xf32>
    %98 = vector.shape_cast %96 : vector<1x768xf32> to vector<1x1x768xf32>
    %99 = arith.subf %98, %97 : vector<1x1x768xf32>
    %100 = vector.broadcast %95 : vector<1x1x768xf32> to vector<1x32x768xf32>
    %101 = arith.mulf %76, %100 : vector<1x32x768xf32>
    %102 = vector.broadcast %99 : vector<1x1x768xf32> to vector<1x32x768xf32>
    %103 = arith.addf %101, %102 : vector<1x32x768xf32>
    %104 = vector.shape_cast %103 : vector<1x32x768xf32> to vector<32x768xf32>
    %105 = math.tanh %104 : vector<32x768xf32>
    %c0_41 = arith.constant 0 : index
    %c0_42 = arith.constant 0 : index
    %106 = vector.load %arg11[%c0_41, %c0_42] : memref<32x768xf32, #tpu.memory_space<vmem>>, vector<32x768xf32>
    tpu.vector_store %arg11[%c0_41, %c0_42], %105 {strides = array<i32>} : memref<32x768xf32, #tpu.memory_space<vmem>>, vector<32x768xf32>,
    return
  }
  func.func @transform_0(%arg0: i32) -> (i32, i32) {
    %c0_i32 = arith.constant 0 : i32
    %c0_i32_0 = arith.constant 0 : i32
    return %arg0, %c0_i32 : i32, i32
  }
  func.func @transform_1(%arg0: i32) -> (i32, i32) {
    %c0_i32 = arith.constant 0 : i32
    %c0_i32_0 = arith.constant 0 : i32
    %c0_i32_1 = arith.constant 0 : i32
    return %c0_i32, %c0_i32_0 : i32, i32
  }
  func.func @transform_2(%arg0: i32) -> (i32, i32) {
    %c0_i32 = arith.constant 0 : i32
    %c0_i32_0 = arith.constant 0 : i32
    %c0_i32_1 = arith.constant 0 : i32
    return %c0_i32, %c0_i32_0 : i32, i32
  }
  func.func @transform_3(%arg0: i32) -> (i32, i32) {
    %c0_i32 = arith.constant 0 : i32
    %c0_i32_0 = arith.constant 0 : i32
    %c0_i32_1 = arith.constant 0 : i32
    return %c0_i32, %c0_i32_0 : i32, i32
  }
  func.func @transform_4(%arg0: i32) -> (i32, i32) {
    %c0_i32 = arith.constant 0 : i32
    %c0_i32_0 = arith.constant 0 : i32
    %c0_i32_1 = arith.constant 0 : i32
    return %c0_i32, %c0_i32_0 : i32, i32
  }
  func.func @transform_5(%arg0: i32) -> (i32, i32) {
    %c0_i32 = arith.constant 0 : i32
    %c0_i32_0 = arith.constant 0 : i32
    %c0_i32_1 = arith.constant 0 : i32
    return %c0_i32, %c0_i32_0 : i32, i32
  }
  func.func @transform_6(%arg0: i32) -> (i32, i32) {
    %c0_i32 = arith.constant 0 : i32
    %c0_i32_0 = arith.constant 0 : i32
    %c0_i32_1 = arith.constant 0 : i32
    return %c0_i32, %c0_i32_0 : i32, i32
  }
  func.func @transform_7(%arg0: i32) -> (i32, i32) {
    %c0_i32 = arith.constant 0 : i32
    %c0_i32_0 = arith.constant 0 : i32
    %c0_i32_1 = arith.constant 0 : i32
    return %c0_i32, %c0_i32_0 : i32, i32
  }
  func.func @transform_8(%arg0: i32) -> (i32, i32) {
    %c0_i32 = arith.constant 0 : i32
    %c0_i32_0 = arith.constant 0 : i32
    %c0_i32_1 = arith.constant 0 : i32
    return %c0_i32, %c0_i32_0 : i32, i32
  }
  func.func @transform_9(%arg0: i32) -> (i32, i32) {
    %c0_i32 = arith.constant 0 : i32
    %c0_i32_0 = arith.constant 0 : i32
    %c0_i32_1 = arith.constant 0 : i32
    return %c0_i32, %c0_i32_0 : i32, i32
  }
  func.func @transform_10(%arg0: i32) -> (i32, i32) {
    %c0_i32 = arith.constant 0 : i32
    %c0_i32_0 = arith.constant 0 : i32
    return %arg0, %c0_i32 : i32, i32
  }
}

</mosaic_0001>

<llo_original>
// kernel: tpu_custom_call.1
$region0: #{tpu_custom_call.1}
  #allocation0 [shape = 'u32[]', space=smem, size = 0x4, offset = 0x4, fixed_abs, tag = 'smem constant byte address 0x4 - core index']
  #allocation1 [shape = 'u32[72,128]{1,0:T(1,128)}', space=vmem, size = 0x9000, scoped, tag = 'internal scratch']
  %s0 = inlined_call_operand.hbm [shape: f32[32,64], index: 0, kind: input, shape index: {}]
  %s1 = inlined_call_operand.hbm [shape: bf16[64,256], index: 1, kind: input, shape index: {}]
  %s2 = inlined_call_operand.hbm [shape: f32[1,256], index: 2, kind: input, shape index: {}]
  %s3 = inlined_call_operand.hbm [shape: f32[1,256], index: 3, kind: input, shape index: {}]
  %s4 = inlined_call_operand.hbm [shape: bf16[256,512], index: 4, kind: input, shape index: {}]
  %s5 = inlined_call_operand.hbm [shape: f32[1,512], index: 5, kind: input, shape index: {}]
  %s6 = inlined_call_operand.hbm [shape: f32[1,512], index: 6, kind: input, shape index: {}]
  %s7 = inlined_call_operand.hbm [shape: bf16[512,768], index: 7, kind: input, shape index: {}]
  %s8 = inlined_call_operand.vmem [shape: f32[1,768], index: 8, kind: input, shape index: {}]
  %s9 = inlined_call_operand.hbm [shape: f32[1,768], index: 9, kind: input, shape index: {}]
  %s10 = inlined_call_operand.hbm [shape: f32[32,768], index: 10, kind: output, shape index: {}]
  %s11 = sld [smem:[#allocation0]]
  $region86: #{tpu_custom_call.1} parent=0
    _
  %s13 = ssub.s32 1, %s11
  %s14 = scalar_select 0, %s13, %s11
  $region1: #{tpu_custom_call.1} parent=0
    #allocation2 [shape = 'u8[16384]{0}', space=vmem, size = 0x4000, scoped, tag = 'input window, operand 0, single buffered']
    #allocation3 [shape = 's32[1]{0}', space=sflag, size = 0x4, scoped, tag = 'scoped memory for tpu_custom_call.1']
    #allocation4 [shape = 's32[1]{0}', space=sflag, size = 0x4, scoped, tag = 'scoped memory for tpu_custom_call.1']
    #allocation5 [shape = 'u8[32768]{0}', space=vmem, size = 0x8000, scoped, tag = 'input window, operand 1, single buffered']
    #allocation6 [shape = 's32[1]{0}', space=sflag, size = 0x4, scoped, tag = 'scoped memory for tpu_custom_call.1']
    #allocation7 [shape = 'u8[1024]{0}', space=vmem, size = 0x400, scoped, tag = 'input window, operand 2, single buffered']
    #allocation8 [shape = 'u8[1024]{0}', space=vmem, size = 0x400, scoped, tag = 'input window, operand 3, single buffered']
    #allocation9 [shape = 's32[1]{0}', space=sflag, size = 0x4, scoped, tag = 'scoped memory for tpu_custom_call.1']
    #allocation10 [shape = 'u8[262144]{0}', space=vmem, size = 0x40000, scoped, tag = 'input window, operand 4, single buffered']
    #allocation11 [shape = 'u8[2048]{0}', space=vmem, size = 0x800, scoped, tag = 'input window, operand 5, single buffered']
    #allocation12 [shape = 's32[1]{0}', space=sflag, size = 0x4, scoped, tag = 'scoped memory for tpu_custom_call.1']
    #allocation13 [shape = 'u8[2048]{0}', space=vmem, size = 0x800, scoped, tag = 'input window, operand 6, single buffered']
    #allocation14 [shape = 'u8[786432]{0}', space=vmem, size = 0xc0000, scoped, tag = 'input window, operand 7, single buffered']
    #allocation15 [shape = 's32[1]{0}', space=sflag, size = 0x4, scoped, tag = 'scoped memory for tpu_custom_call.1']
    #allocation16 [shape = 'u8[3072]{0}', space=vmem, size = 0xc00, scoped, tag = 'input window, operand 9, single buffered']
    #allocation17 [shape = 'u8[98304]{0}', space=vmem, size = 0x18000, scoped, tag = 'output window, operand 0, single buffered']
    %15 = vsyncpa [#allocation3], 0
    %16 = vsyncpa [#allocation6], 0
    %17 = vsyncpa [#allocation9], 0
    %18 = vsyncpa [#allocation12], 0
    %19 = vsyncpa [#allocation15], 0
    %20 = vsyncpa [#allocation4], 0
    // Predicated region
    $region2: #{tpu_custom_call.1} parent=1 // pred_check
      _
    $region3: #{tpu_custom_call.1} parent=1 // pred_check_branch
      %22 = sbr.rel (0) target = $region5
    $region4: #{tpu_custom_call.1} parent=1 // pred_region
      %24 = vsyncadd [#allocation3], 0
      %s25 = sshll.u32 %s0, 4
      %s26 = int_to_ptr.hbm [resolvable:$true] %s25
      %s27 = sshll.u32 [#allocation2], 4
      %s28 = int_to_ptr.vmem [resolvable:$true] %s27
      %33 = dma.hbm_to_vmem [thread:$0]  %s26, 512, %s28, [#allocation3], 128, 128, 8
    $region5: #{tpu_custom_call.1} parent=1 // pred_fallthru
      _
    // Predicated region
    $region6: #{tpu_custom_call.1} parent=1 // pred_check
      _
    $region7: #{tpu_custom_call.1} parent=1 // pred_check_branch
      %35 = sbr.rel (0) target = $region9
    $region8: #{tpu_custom_call.1} parent=1 // pred_region
      %37 = vsyncadd [#allocation6], 0
      %s38 = sshll.u32 %s1, 4
      %s39 = int_to_ptr.hbm [resolvable:$true] %s38
      %s40 = sshll.u32 [#allocation5], 4
      %s41 = int_to_ptr.vmem [resolvable:$true] %s40
      %46 = dma.hbm_to_vmem [thread:$0]  %s39, 1024, %s41, [#allocation6], 128, 128, 8
    $region9: #{tpu_custom_call.1} parent=1 // pred_fallthru
      _
    // Predicated region
    $region10: #{tpu_custom_call.1} parent=1 // pred_check
      _
    $region11: #{tpu_custom_call.1} parent=1 // pred_check_branch
      %48 = sbr.rel (0) target = $region13
    $region12: #{tpu_custom_call.1} parent=1 // pred_region
      %50 = vsyncadd [#allocation6], 0
      %s52 = sshll.u32 %s2, 4
      %s53 = int_to_ptr.hbm [resolvable:$true] %s52
      %s54 = sshll.u32 [#allocation7], 4
      %s55 = int_to_ptr.vmem [resolvable:$true] %s54
      %57 = dma.hbm_to_vmem [thread:$0]  %s53, 32, %s55, [#allocation6]
    $region13: #{tpu_custom_call.1} parent=1 // pred_fallthru
      _
    // Predicated region
    $region14: #{tpu_custom_call.1} parent=1 // pred_check
      _
    $region15: #{tpu_custom_call.1} parent=1 // pred_check_branch
      %59 = sbr.rel (0) target = $region17
    $region16: #{tpu_custom_call.1} parent=1 // pred_region
      %61 = vsyncadd [#allocation9], 0
      %s63 = sshll.u32 %s3, 4
      %s64 = int_to_ptr.hbm [resolvable:$true] %s63
      %s65 = sshll.u32 [#allocation8], 4
      %s66 = int_to_ptr.vmem [resolvable:$true] %s65
      %68 = dma.hbm_to_vmem [thread:$0]  %s64, 32, %s66, [#allocation9]
    $region17: #{tpu_custom_call.1} parent=1 // pred_fallthru
      _
    // Predicated region
    $region18: #{tpu_custom_call.1} parent=1 // pred_check
      _
    $region19: #{tpu_custom_call.1} parent=1 // pred_check_branch
      %70 = sbr.rel (0) target = $region21
    $region20: #{tpu_custom_call.1} parent=1 // pred_region
      %72 = vsyncadd [#allocation9], 0
      %s73 = sshll.u32 %s4, 4
      %s74 = int_to_ptr.hbm [resolvable:$true] %s73
      %s75 = sshll.u32 [#allocation10], 4
      %s76 = int_to_ptr.vmem [resolvable:$true] %s75
      %81 = dma.hbm_to_vmem [thread:$0]  %s74, 8192, %s76, [#allocation9], 256, 256, 16
    $region21: #{tpu_custom_call.1} parent=1 // pred_fallthru
      _
    // Predicated region
    $region22: #{tpu_custom_call.1} parent=1 // pred_check
      _
    $region23: #{tpu_custom_call.1} parent=1 // pred_check_branch
      %83 = sbr.rel (0) target = $region25
    $region24: #{tpu_custom_call.1} parent=1 // pred_region
      %85 = vsyncadd [#allocation12], 0
      %s87 = sshll.u32 %s5, 4
      %s88 = int_to_ptr.hbm [resolvable:$true] %s87
      %s89 = sshll.u32 [#allocation11], 4
      %s90 = int_to_ptr.vmem [resolvable:$true] %s89
      %92 = dma.hbm_to_vmem [thread:$0]  %s88, 64, %s90, [#allocation12]
    $region25: #{tpu_custom_call.1} parent=1 // pred_fallthru
      _
    // Predicated region
    $region26: #{tpu_custom_call.1} parent=1 // pred_check
      _
    $region27: #{tpu_custom_call.1} parent=1 // pred_check_branch
      %94 = sbr.rel (0) target = $region29
    $region28: #{tpu_custom_call.1} parent=1 // pred_region
      %96 = vsyncadd [#allocation12], 0
      %s98 = sshll.u32 %s6, 4
      %s99 = int_to_ptr.hbm [resolvable:$true] %s98
      %s100 = sshll.u32 [#allocation13], 4
      %s101 = int_to_ptr.vmem [resolvable:$true] %s100
      %103 = dma.hbm_to_vmem [thread:$0]  %s99, 64, %s101, [#allocation12]
    $region29: #{tpu_custom_call.1} parent=1 // pred_fallthru
      _
    // Predicated region
    $region30: #{tpu_custom_call.1} parent=1 // pred_check
      _
    $region31: #{tpu_custom_call.1} parent=1 // pred_check_branch
      %105 = sbr.rel (0) target = $region33
    $region32: #{tpu_custom_call.1} parent=1 // pred_region
      %107 = vsyncadd [#allocation15], 0
      %s108 = sshll.u32 %s7, 4
      %s109 = int_to_ptr.hbm [resolvable:$true] %s108
      %s110 = sshll.u32 [#allocation14], 4
      %s111 = int_to_ptr.vmem [resolvable:$true] %s110
      %116 = dma.hbm_to_vmem [thread:$0]  %s109, 24576, %s111, [#allocation15], 384, 384, 24
    $region33: #{tpu_custom_call.1} parent=1 // pred_fallthru
      _
    // Predicated region
    $region34: #{tpu_custom_call.1} parent=1 // pred_check
      _
    $region35: #{tpu_custom_call.1} parent=1 // pred_check_branch
      %118 = sbr.rel (0) target = $region37
    $region36: #{tpu_custom_call.1} parent=1 // pred_region
      _
    $region37: #{tpu_custom_call.1} parent=1 // pred_fallthru
      _
    // Predicated region
    $region38: #{tpu_custom_call.1} parent=1 // pred_check
      _
    $region39: #{tpu_custom_call.1} parent=1 // pred_check_branch
      %120 = sbr.rel (0) target = $region41
    $region40: #{tpu_custom_call.1} parent=1 // pred_region
      %122 = vsyncadd [#allocation15], 0
      %s124 = sshll.u32 %s9, 4
      %s125 = int_to_ptr.hbm [resolvable:$true] %s124
      %s126 = sshll.u32 [#allocation16], 4
      %s127 = int_to_ptr.vmem [resolvable:$true] %s126
      %129 = dma.hbm_to_vmem [thread:$0]  %s125, 96, %s127, [#allocation15]
    $region41: #{tpu_custom_call.1} parent=1 // pred_fallthru
      _
    // Predicated region
    $region42: #{tpu_custom_call.1} parent=1 // pred_check
      _
    $region43: #{tpu_custom_call.1} parent=1 // pred_check_branch
      %131 = sbr.rel (0) target = $region45
    $region44: #{tpu_custom_call.1} parent=1 // pred_region
      %133 = dma.done [#allocation3], 512
    $region45: #{tpu_custom_call.1} parent=1 // pred_fallthru
      _
    // Predicated region
    $region46: #{tpu_custom_call.1} parent=1 // pred_check
      _
    $region47: #{tpu_custom_call.1} parent=1 // pred_check_branch
      %135 = sbr.rel (0) target = $region49
    $region48: #{tpu_custom_call.1} parent=1 // pred_region
      %137 = dma.done [#allocation6], 1024
    $region49: #{tpu_custom_call.1} parent=1 // pred_fallthru
      _
    // Predicated region
    $region50: #{tpu_custom_call.1} parent=1 // pred_check
      _
    $region51: #{tpu_custom_call.1} parent=1 // pred_check_branch
      %139 = sbr.rel (0) target = $region53
    $region52: #{tpu_custom_call.1} parent=1 // pred_region
      %141 = dma.done [#allocation6], 32
    $region53: #{tpu_custom_call.1} parent=1 // pred_fallthru
      _
    // Predicated region
    $region54: #{tpu_custom_call.1} parent=1 // pred_check
      _
    $region55: #{tpu_custom_call.1} parent=1 // pred_check_branch
      %143 = sbr.rel (0) target = $region57
    $region56: #{tpu_custom_call.1} parent=1 // pred_region
      %145 = dma.done [#allocation9], 32
    $region57: #{tpu_custom_call.1} parent=1 // pred_fallthru
      _
    // Predicated region
    $region58: #{tpu_custom_call.1} parent=1 // pred_check
      _
    $region59: #{tpu_custom_call.1} parent=1 // pred_check_branch
      %147 = sbr.rel (0) target = $region61
    $region60: #{tpu_custom_call.1} parent=1 // pred_region
      %149 = dma.done [#allocation9], 8192
    $region61: #{tpu_custom_call.1} parent=1 // pred_fallthru
      _
    // Predicated region
    $region62: #{tpu_custom_call.1} parent=1 // pred_check
      _
    $region63: #{tpu_custom_call.1} parent=1 // pred_check_branch
      %151 = sbr.rel (0) target = $region65
    $region64: #{tpu_custom_call.1} parent=1 // pred_region
      %153 = dma.done [#allocation12], 64
    $region65: #{tpu_custom_call.1} parent=1 // pred_fallthru
      _
    // Predicated region
    $region66: #{tpu_custom_call.1} parent=1 // pred_check
      _
    $region67: #{tpu_custom_call.1} parent=1 // pred_check_branch
      %155 = sbr.rel (0) target = $region69
    $region68: #{tpu_custom_call.1} parent=1 // pred_region
      %157 = dma.done [#allocation12], 64
    $region69: #{tpu_custom_call.1} parent=1 // pred_fallthru
      _
    // Predicated region
    $region70: #{tpu_custom_call.1} parent=1 // pred_check
      _
    $region71: #{tpu_custom_call.1} parent=1 // pred_check_branch
      %159 = sbr.rel (0) target = $region73
    $region72: #{tpu_custom_call.1} parent=1 // pred_region
      %161 = dma.done [#allocation15], 24576
    $region73: #{tpu_custom_call.1} parent=1 // pred_fallthru
      _
    // Predicated region
    $region74: #{tpu_custom_call.1} parent=1 // pred_check
      _
    $region75: #{tpu_custom_call.1} parent=1 // pred_check_branch
      %163 = sbr.rel (0) target = $region77
    $region76: #{tpu_custom_call.1} parent=1 // pred_region
      %165 = dma.done [#allocation15], 96
    $region77: #{tpu_custom_call.1} parent=1 // pred_fallthru
      _
    %v167 = vld [vmem:[#allocation2] sm:$0xff]
    %v168 = vld [vmem:[#allocation2 + $0x8] sm:$0xff]
    %v169 = vld [vmem:[#allocation2 + $0x10] sm:$0xff]
    %v170 = vld [vmem:[#allocation2 + $0x18] sm:$0xff]
    %v171 = vpack.c.bf16 %v168, %v167
    %v172 = vpack.c.bf16 %v170, %v169
    %v173 = vld [vmem:[#allocation5] sm:$0xff]
    %v174 = vld [vmem:[#allocation5 + $0x8] sm:$0xff]
    %v175 = vld [vmem:[#allocation5 + $0x10] sm:$0xff]
    %v176 = vld [vmem:[#allocation5 + $0x18] sm:$0xff]
    %v177 = vld [vmem:[#allocation5 + $0x20] sm:$0xff]
    %v178 = vld [vmem:[#allocation5 + $0x28] sm:$0xff]
    %v179 = vld [vmem:[#allocation5 + $0x30] sm:$0xff]
    %v180 = vld [vmem:[#allocation5 + $0x38] sm:$0xff]
    %v189 = vunpack.c.l.b16 %v173
    %v190 = vunpack.c.h.b16 %v173
    %v191 = vunpack.c.l.b16 %v174
    %v192 = vunpack.c.h.b16 %v174
    %v193 = vunpack.c.l.b16 %v175
    %v194 = vunpack.c.h.b16 %v175
    %v195 = vunpack.c.l.b16 %v176
    %v196 = vunpack.c.h.b16 %v176
    %v197 = vunpack.c.l.b16 %v177
    %v198 = vunpack.c.h.b16 %v177
    %v199 = vunpack.c.l.b16 %v178
    %v200 = vunpack.c.h.b16 %v178
    %v201 = vunpack.c.l.b16 %v179
    %v202 = vunpack.c.h.b16 %v179
    %v203 = vunpack.c.l.b16 %v180
    %v204 = vunpack.c.h.b16 %v180
    %v205 = vpack.c.b16 %v191, %v189
    %v206 = vpack.c.b16 %v192, %v190
    %v207 = vpack.c.b16 %v195, %v193
    %v208 = vpack.c.b16 %v196, %v194
    %v209 = vpack.c.b16 %v199, %v197
    %v210 = vpack.c.b16 %v200, %v198
    %v211 = vpack.c.b16 %v203, %v201
    %v212 = vpack.c.b16 %v204, %v202
    %vm221 = vcmask 523264
    %v223 = vsel %vm221, %v171, 0
    %v226 = vsel %vm221, %v172, 0
    %228 = vmatpush.bf16.msra.mxu0 0
    %229 = vmatpush.bf16.msra.mxu0 0
    %230 = vmatpush.bf16.msra.mxu0 0
    %231 = vmatpush.bf16.msra.mxu0 0
    %232 = vmatpush.bf16.msra.mxu0 %v211
    %233 = vmatpush.bf16.msra.mxu0 %v209
    %234 = vmatpush.bf16.msra.mxu0 %v207
    %235 = vmatpush.bf16.msra.mxu0 %v205
    %236 = vmatmul.bf16.gmra.mxu0 %v223
    %v237 = vpop.f32.mrf.mxu0
    %v238 = vadd.f32 0.0, %v237
    %v239 = vpop.f32.mrf.mxu0
    %v240 = vadd.f32 0.0, %v239
    %241 = vmatmul.bf16.gmra.mxu0 %v226
    %v242 = vpop.f32.mrf.mxu0
    %v243 = vadd.f32 0.0, %v242
    %v244 = vpop.f32.mrf.mxu0
    %v245 = vadd.f32 0.0, %v244
    %246 = vdwg.mxu0
    %247 = vmatpush.bf16.msra.mxu0 0
    %248 = vmatpush.bf16.msra.mxu0 0
    %249 = vmatpush.bf16.msra.mxu0 0
    %250 = vmatpush.bf16.msra.mxu0 0
    %251 = vmatpush.bf16.msra.mxu0 %v212
    %252 = vmatpush.bf16.msra.mxu0 %v210
    %253 = vmatpush.bf16.msra.mxu0 %v208
    %254 = vmatpush.bf16.msra.mxu0 %v206
    %255 = vmatmul.bf16.gmra.mxu0 %v223
    %v256 = vpop.f32.mrf.mxu0
    %v257 = vadd.f32 0.0, %v256
    %v258 = vpop.f32.mrf.mxu0
    %v259 = vadd.f32 0.0, %v258
    %260 = vmatmul.bf16.gmra.mxu0 %v226
    %v261 = vpop.f32.mrf.mxu0
    %v262 = vadd.f32 0.0, %v261
    %v263 = vpop.f32.mrf.mxu0
    %v264 = vadd.f32 0.0, %v263
    %265 = vdwg.mxu0
    %v266 = vadd.f32 %v238, %v240
    %v267 = vadd.f32 %v266, %v243
    %v268 = vadd.f32 %v267, %v245
    %v269 = vrot.slane %v268, 4
    %v270 = vadd.f32 %v268, %v269
    %v271 = vrot.slane %v270, 2
    %v272 = vadd.f32 %v270, %v271
    %v273 = vrot.slane %v272, 1
    %v274 = vadd.f32 %v272, %v273
    %v275 = vadd.f32 %v257, %v259
    %v276 = vadd.f32 %v275, %v262
    %v277 = vadd.f32 %v276, %v264
    %v278 = vrot.slane %v277, 4
    %v279 = vadd.f32 %v277, %v278
    %v280 = vrot.slane %v279, 2
    %v281 = vadd.f32 %v279, %v280
    %v282 = vrot.slane %v281, 1
    %v283 = vadd.f32 %v281, %v282
    %v284 = vmul.f32 %v238, %v238
    %v285 = vmul.f32 %v257, %v257
    %v286 = vmul.f32 %v240, %v240
    %v287 = vmul.f32 %v259, %v259
    %v288 = vmul.f32 %v243, %v243
    %v289 = vmul.f32 %v262, %v262
    %v290 = vmul.f32 %v245, %v245
    %v291 = vmul.f32 %v264, %v264
    %v292 = vadd.f32 %v284, %v286
    %v293 = vadd.f32 %v292, %v288
    %v294 = vadd.f32 %v293, %v290
    %v295 = vrot.slane %v294, 4
    %v296 = vadd.f32 %v294, %v295
    %v297 = vrot.slane %v296, 2
    %v298 = vadd.f32 %v296, %v297
    %v299 = vrot.slane %v298, 1
    %v300 = vadd.f32 %v298, %v299
    %v301 = vadd.f32 %v285, %v287
    %v302 = vadd.f32 %v301, %v289
    %v303 = vadd.f32 %v302, %v291
    %v304 = vrot.slane %v303, 4
    %v305 = vadd.f32 %v303, %v304
    %v306 = vrot.slane %v305, 2
    %v307 = vadd.f32 %v305, %v306
    %v308 = vrot.slane %v307, 1
    %v309 = vadd.f32 %v307, %v308
    %v310 = vmul.f32 %v274, 0.03125
    %v311 = vmul.f32 %v283, 0.03125
    %v312 = vmul.f32 %v300, 0.03125
    %v313 = vmul.f32 %v309, 0.03125
    %v314 = vmul.f32 %v310, %v310
    %v315 = vmul.f32 %v311, %v311
    %v316 = vsub.f32 %v312, %v314
    %v317 = vsub.f32 %v313, %v315
    %v318 = vmax.f32 %v316, 0.0
    %v319 = vmax.f32 %v317, 0.0
    %v320 = vld [vmem:[#allocation7] sm:$0x3]
    %v321 = vadd.f32 %v318, 1e-05
    %v322 = vadd.f32 %v319, 1e-05
    %v323 = vrsqrt.pop %v321
    %v324 = vmul.f32 %v323, %v321
    %v325 = vmul.f32 %v324, %v323
    %v326 = vmul.f32 0.5, %v325
    %v327 = vsub.f32 1.5, %v326
    %v328 = vmul.f32 %v323, %v327
    %vm329 = vweird.f32 %v321
    %vm330 = vweird.f32 %v323
    %vm331 = vmor %vm329, %vm330
    %v332 = vsel %vm331, %v323, %v328
    %v333 = vrsqrt.pop %v322
    %v334 = vmul.f32 %v333, %v322
    %v335 = vmul.f32 %v334, %v333
    %v336 = vmul.f32 0.5, %v335
    %v337 = vsub.f32 1.5, %v336
    %v338 = vmul.f32 %v333, %v337
    %vm339 = vweird.f32 %v322
    %vm340 = vweird.f32 %v333
    %vm341 = vmor %vm339, %vm340
    %v342 = vsel %vm341, %v333, %v338
    %v345 = vrot.slane %v342, 7
    %vm346 = vcmask 1040384
    %v347 = vsel %vm346, %v332, %v345
    %v349 = vmul.f32 %v320, %v347
    %v350 = vld [vmem:[#allocation8] sm:$0x3]
    %v352 = vperm.slane %v349, 0
    %v353 = vperm.slane %v349, 1
    %v356 = vmul.f32 %v310, %v352
    %v357 = vmul.f32 %v311, %v353
    %v360 = vrot.slane %v357, 7
    %v361 = vsel %vm346, %v356, %v360
    %v363 = vsub.f32 %v350, %v361
    %v364 = vpack.c.bf16 %v257, %v238
    %v365 = vpack.c.bf16 %v259, %v240
    %v366 = vpack.c.bf16 %v262, %v243
    %v367 = vpack.c.bf16 %v264, %v245
    %v368 = vpack.c.bf16 %v353, %v352
    %v370 = vunpack.c.l.b16 %v368
    %v371 = vunpack.c.h.b16 %v368
    %v372 = vpack.c.b16 %v370, %v370
    %v373 = vpack.c.b16 %v371, %v371
    %v375 = vpack.i.b16 %v372, %v372
    %v377 = vperm.slane %v375, 0
    %v379 = vpack.i.b16 %v373, %v373
    %v381 = vperm.slane %v379, 0
    %v382 = vunpack.c.l.bf16 %v364
    %v383 = vunpack.c.h.bf16 %v364
    %v384 = vunpack.c.l.bf16 %v365
    %v385 = vunpack.c.h.bf16 %v365
    %v386 = vunpack.c.l.bf16 %v366
    %v387 = vunpack.c.h.bf16 %v366
    %v388 = vunpack.c.l.bf16 %v367
    %v389 = vunpack.c.h.bf16 %v367
    %v390 = vunpack.c.l.bf16 %v377
    %v391 = vunpack.c.l.bf16 %v381
    %v392 = vmul.f32 %v382, %v390
    %v393 = vmul.f32 %v383, %v391
    %v394 = vmul.f32 %v384, %v390
    %v395 = vmul.f32 %v385, %v391
    %v396 = vmul.f32 %v386, %v390
    %v397 = vmul.f32 %v387, %v391
    %v398 = vmul.f32 %v388, %v390
    %v399 = vmul.f32 %v389, %v391
    %v400 = vpack.c.bf16 %v393, %v392
    %v401 = vpack.c.bf16 %v395, %v394
    %v402 = vpack.c.bf16 %v397, %v396
    %v403 = vpack.c.bf16 %v399, %v398
    %v405 = vperm.slane %v363, 0
    %v406 = vperm.slane %v363, 1
    %v409 = vpack.c.bf16 %v406, %v405
    %v411 = vunpack.c.l.b16 %v409
    %v412 = vunpack.c.h.b16 %v409
    %v413 = vpack.c.b16 %v411, %v411
    %v414 = vpack.c.b16 %v412, %v412
    %v416 = vpack.i.b16 %v413, %v413
    %v418 = vperm.slane %v416, 0
    %v420 = vpack.i.b16 %v414, %v414
    %v422 = vperm.slane %v420, 0
    %v423 = vunpack.c.l.bf16 %v400
    %v424 = vunpack.c.h.bf16 %v400
    %v425 = vunpack.c.l.bf16 %v401
    %v426 = vunpack.c.h.bf16 %v401
    %v427 = vunpack.c.l.bf16 %v402
    %v428 = vunpack.c.h.bf16 %v402
    %v429 = vunpack.c.l.bf16 %v403
    %v430 = vunpack.c.h.bf16 %v403
    %v431 = vunpack.c.l.bf16 %v418
    %v432 = vunpack.c.l.bf16 %v422
    %v433 = vadd.f32 %v423, %v431
    %v434 = vadd.f32 %v424, %v432
    %v435 = vadd.f32 %v425, %v431
    %v436 = vadd.f32 %v426, %v432
    %v437 = vadd.f32 %v427, %v431
    %v438 = vadd.f32 %v428, %v432
    %v439 = vadd.f32 %v429, %v431
    %v440 = vadd.f32 %v430, %v432
    %v441 = vpack.c.bf16 %v434, %v433
    %v442 = vpack.c.bf16 %v436, %v435
    %v443 = vpack.c.bf16 %v438, %v437
    %v444 = vpack.c.bf16 %v440, %v439
    %v445 = vunpack.c.l.bf16 %v441
    %v446 = vunpack.c.h.bf16 %v441
    %v447 = vunpack.c.l.bf16 %v442
    %v448 = vunpack.c.h.bf16 %v442
    %v449 = vunpack.c.l.bf16 %v443
    %v450 = vunpack.c.h.bf16 %v443
    %v451 = vunpack.c.l.bf16 %v444
    %v452 = vunpack.c.h.bf16 %v444
    %v453 = vmax.f32 %v445, 0.0
    %v454 = vmax.f32 %v446, 0.0
    %v455 = vmax.f32 %v447, 0.0
    %v456 = vmax.f32 %v448, 0.0
    %v457 = vmax.f32 %v449, 0.0
    %v458 = vmax.f32 %v450, 0.0
    %v459 = vmax.f32 %v451, 0.0
    %v460 = vmax.f32 %v452, 0.0
    %v461 = vpack.c.bf16 %v455, %v453
    %v462 = vpack.c.bf16 %v456, %v454
    %v463 = vpack.c.bf16 %v459, %v457
    %v464 = vpack.c.bf16 %v460, %v458
    %v465 = vld [vmem:[#allocation10] sm:$0xff]
    %v466 = vld [vmem:[#allocation10 + $0x8] sm:$0xff]
    %v467 = vld [vmem:[#allocation10 + $0x10] sm:$0xff]
    %v468 = vld [vmem:[#allocation10 + $0x18] sm:$0xff]
    %v469 = vld [vmem:[#allocation10 + $0x20] sm:$0xff]
    %v470 = vld [vmem:[#allocation10 + $0x28] sm:$0xff]
    %v471 = vld [vmem:[#allocation10 + $0x30] sm:$0xff]
    %v472 = vld [vmem:[#allocation10 + $0x38] sm:$0xff]
    %v473 = vld [vmem:[#allocation10 + $0x40] sm:$0xff]
    %v474 = vld [vmem:[#allocation10 + $0x48] sm:$0xff]
    %v475 = vld [vmem:[#allocation10 + $0x50] sm:$0xff]
    %v476 = vld [vmem:[#allocation10 + $0x58] sm:$0xff]
    %v477 = vld [vmem:[#allocation10 + $0x60] sm:$0xff]
    %v478 = vld [vmem:[#allocation10 + $0x68] sm:$0xff]
    %v479 = vld [vmem:[#allocation10 + $0x70] sm:$0xff]
    %v480 = vld [vmem:[#allocation10 + $0x78] sm:$0xff]
    %v481 = vld [vmem:[#allocation10 + $0x80] sm:$0xff]
    %v482 = vld [vmem:[#allocation10 + $0x88] sm:$0xff]
    %v483 = vld [vmem:[#allocation10 + $0x90] sm:$0xff]
    %v484 = vld [vmem:[#allocation10 + $0x98] sm:$0xff]
    %v485 = vld [vmem:[#allocation10 + $0xa0] sm:$0xff]
    %v486 = vld [vmem:[#allocation10 + $0xa8] sm:$0xff]
    %v487 = vld [vmem:[#allocation10 + $0xb0] sm:$0xff]
    %v488 = vld [vmem:[#allocation10 + $0xb8] sm:$0xff]
    %v489 = vld [vmem:[#allocation10 + $0xc0] sm:$0xff]
    %v490 = vld [vmem:[#allocation10 + $0xc8] sm:$0xff]
    %v491 = vld [vmem:[#allocation10 + $0xd0] sm:$0xff]
    %v492 = vld [vmem:[#allocation10 + $0xd8] sm:$0xff]
    %v493 = vld [vmem:[#allocation10 + $0xe0] sm:$0xff]
    %v494 = vld [vmem:[#allocation10 + $0xe8] sm:$0xff]
    %v495 = vld [vmem:[#allocation10 + $0xf0] sm:$0xff]
    %v496 = vld [vmem:[#allocation10 + $0xf8] sm:$0xff]
    %v497 = vld [vmem:[#allocation10 + $0x100] sm:$0xff]
    %v498 = vld [vmem:[#allocation10 + $0x108] sm:$0xff]
    %v499 = vld [vmem:[#allocation10 + $0x110] sm:$0xff]
    %v500 = vld [vmem:[#allocation10 + $0x118] sm:$0xff]
    %v501 = vld [vmem:[#allocation10 + $0x120] sm:$0xff]
    %v502 = vld [vmem:[#allocation10 + $0x128] sm:$0xff]
    %v503 = vld [vmem:[#allocation10 + $0x130] sm:$0xff]
    %v504 = vld [vmem:[#allocation10 + $0x138] sm:$0xff]
    %v505 = vld [vmem:[#allocation10 + $0x140] sm:$0xff]
    %v506 = vld [vmem:[#allocation10 + $0x148] sm:$0xff]
    %v507 = vld [vmem:[#allocation10 + $0x150] sm:$0xff]
    %v508 = vld [vmem:[#allocation10 + $0x158] sm:$0xff]
    %v509 = vld [vmem:[#allocation10 + $0x160] sm:$0xff]
    %v510 = vld [vmem:[#allocation10 + $0x168] sm:$0xff]
    %v511 = vld [vmem:[#allocation10 + $0x170] sm:$0xff]
    %v512 = vld [vmem:[#allocation10 + $0x178] sm:$0xff]
    %v513 = vld [vmem:[#allocation10 + $0x180] sm:$0xff]
    %v514 = vld [vmem:[#allocation10 + $0x188] sm:$0xff]
    %v515 = vld [vmem:[#allocation10 + $0x190] sm:$0xff]
    %v516 = vld [vmem:[#allocation10 + $0x198] sm:$0xff]
    %v517 = vld [vmem:[#allocation10 + $0x1a0] sm:$0xff]
    %v518 = vld [vmem:[#allocation10 + $0x1a8] sm:$0xff]
    %v519 = vld [vmem:[#allocation10 + $0x1b0] sm:$0xff]
    %v520 = vld [vmem:[#allocation10 + $0x1b8] sm:$0xff]
    %v521 = vld [vmem:[#allocation10 + $0x1c0] sm:$0xff]
    %v522 = vld [vmem:[#allocation10 + $0x1c8] sm:$0xff]
    %v523 = vld [vmem:[#allocation10 + $0x1d0] sm:$0xff]
    %v524 = vld [vmem:[#allocation10 + $0x1d8] sm:$0xff]
    %v525 = vld [vmem:[#allocation10 + $0x1e0] sm:$0xff]
    %v526 = vld [vmem:[#allocation10 + $0x1e8] sm:$0xff]
    %v527 = vld [vmem:[#allocation10 + $0x1f0] sm:$0xff]
    %v528 = vld [vmem:[#allocation10 + $0x1f8] sm:$0xff]
    %v593 = vunpack.c.l.b16 %v465
    %v594 = vunpack.c.h.b16 %v465
    %v595 = vunpack.c.l.b16 %v466
    %v596 = vunpack.c.h.b16 %v466
    %v597 = vunpack.c.l.b16 %v467
    %v598 = vunpack.c.h.b16 %v467
    %v599 = vunpack.c.l.b16 %v468
    %v600 = vunpack.c.h.b16 %v468
    %v601 = vunpack.c.l.b16 %v469
    %v602 = vunpack.c.h.b16 %v469
    %v603 = vunpack.c.l.b16 %v470
    %v604 = vunpack.c.h.b16 %v470
    %v605 = vunpack.c.l.b16 %v471
    %v606 = vunpack.c.h.b16 %v471
    %v607 = vunpack.c.l.b16 %v472
    %v608 = vunpack.c.h.b16 %v472
    %v609 = vunpack.c.l.b16 %v473
    %v610 = vunpack.c.h.b16 %v473
    %v611 = vunpack.c.l.b16 %v474
    %v612 = vunpack.c.h.b16 %v474
    %v613 = vunpack.c.l.b16 %v475
    %v614 = vunpack.c.h.b16 %v475
    %v615 = vunpack.c.l.b16 %v476
    %v616 = vunpack.c.h.b16 %v476
    %v617 = vunpack.c.l.b16 %v477
    %v618 = vunpack.c.h.b16 %v477
    %v619 = vunpack.c.l.b16 %v478
    %v620 = vunpack.c.h.b16 %v478
    %v621 = vunpack.c.l.b16 %v479
    %v622 = vunpack.c.h.b16 %v479
    %v623 = vunpack.c.l.b16 %v480
    %v624 = vunpack.c.h.b16 %v480
    %v625 = vunpack.c.l.b16 %v481
    %v626 = vunpack.c.h.b16 %v481
    %v627 = vunpack.c.l.b16 %v482
    %v628 = vunpack.c.h.b16 %v482
    %v629 = vunpack.c.l.b16 %v483
    %v630 = vunpack.c.h.b16 %v483
    %v631 = vunpack.c.l.b16 %v484
    %v632 = vunpack.c.h.b16 %v484
    %v633 = vunpack.c.l.b16 %v485
    %v634 = vunpack.c.h.b16 %v485
    %v635 = vunpack.c.l.b16 %v486
    %v636 = vunpack.c.h.b16 %v486
    %v637 = vunpack.c.l.b16 %v487
    %v638 = vunpack.c.h.b16 %v487
    %v639 = vunpack.c.l.b16 %v488
    %v640 = vunpack.c.h.b16 %v488
    %v641 = vunpack.c.l.b16 %v489
    %v642 = vunpack.c.h.b16 %v489
    %v643 = vunpack.c.l.b16 %v490
    %v644 = vunpack.c.h.b16 %v490
    %v645 = vunpack.c.l.b16 %v491
    %v646 = vunpack.c.h.b16 %v491
    %v647 = vunpack.c.l.b16 %v492
    %v648 = vunpack.c.h.b16 %v492
    %v649 = vunpack.c.l.b16 %v493
    %v650 = vunpack.c.h.b16 %v493
    %v651 = vunpack.c.l.b16 %v494
    %v652 = vunpack.c.h.b16 %v494
    %v653 = vunpack.c.l.b16 %v495
    %v654 = vunpack.c.h.b16 %v495
    %v655 = vunpack.c.l.b16 %v496
    %v656 = vunpack.c.h.b16 %v496
    %v657 = vunpack.c.l.b16 %v497
    %v658 = vunpack.c.h.b16 %v497
    %v659 = vunpack.c.l.b16 %v498
    %v660 = vunpack.c.h.b16 %v498
    %v661 = vunpack.c.l.b16 %v499
    %v662 = vunpack.c.h.b16 %v499
    %v663 = vunpack.c.l.b16 %v500
    %v664 = vunpack.c.h.b16 %v500
    %v665 = vunpack.c.l.b16 %v501
    %v666 = vunpack.c.h.b16 %v501
    %v667 = vunpack.c.l.b16 %v502
    %v668 = vunpack.c.h.b16 %v502
    %v669 = vunpack.c.l.b16 %v503
    %v670 = vunpack.c.h.b16 %v503
    %v671 = vunpack.c.l.b16 %v504
    %v672 = vunpack.c.h.b16 %v504
    %v673 = vunpack.c.l.b16 %v505
    %v674 = vunpack.c.h.b16 %v505
    %v675 = vunpack.c.l.b16 %v506
    %v676 = vunpack.c.h.b16 %v506
    %v677 = vunpack.c.l.b16 %v507
    %v678 = vunpack.c.h.b16 %v507
    %v679 = vunpack.c.l.b16 %v508
    %v680 = vunpack.c.h.b16 %v508
    %v681 = vunpack.c.l.b16 %v509
    %v682 = vunpack.c.h.b16 %v509
    %v683 = vunpack.c.l.b16 %v510
    %v684 = vunpack.c.h.b16 %v510
    %v685 = vunpack.c.l.b16 %v511
    %v686 = vunpack.c.h.b16 %v511
    %v687 = vunpack.c.l.b16 %v512
    %v688 = vunpack.c.h.b16 %v512
    %v689 = vunpack.c.l.b16 %v513
    %v690 = vunpack.c.h.b16 %v513
    %v691 = vunpack.c.l.b16 %v514
    %v692 = vunpack.c.h.b16 %v514
    %v693 = vunpack.c.l.b16 %v515
    %v694 = vunpack.c.h.b16 %v515
    %v695 = vunpack.c.l.b16 %v516
    %v696 = vunpack.c.h.b16 %v516
    %v697 = vunpack.c.l.b16 %v517
    %v698 = vunpack.c.h.b16 %v517
    %v699 = vunpack.c.l.b16 %v518
    %v700 = vunpack.c.h.b16 %v518
    %v701 = vunpack.c.l.b16 %v519
    %v702 = vunpack.c.h.b16 %v519
    %v703 = vunpack.c.l.b16 %v520
    %v704 = vunpack.c.h.b16 %v520
    %v705 = vunpack.c.l.b16 %v521
    %v706 = vunpack.c.h.b16 %v521
    %v707 = vunpack.c.l.b16 %v522
    %v708 = vunpack.c.h.b16 %v522
    %v709 = vunpack.c.l.b16 %v523
    %v710 = vunpack.c.h.b16 %v523
    %v711 = vunpack.c.l.b16 %v524
    %v712 = vunpack.c.h.b16 %v524
    %v713 = vunpack.c.l.b16 %v525
    %v714 = vunpack.c.h.b16 %v525
    %v715 = vunpack.c.l.b16 %v526
    %v716 = vunpack.c.h.b16 %v526
    %v717 = vunpack.c.l.b16 %v527
    %v718 = vunpack.c.h.b16 %v527
    %v719 = vunpack.c.l.b16 %v528
    %v720 = vunpack.c.h.b16 %v528
    %v721 = vpack.c.b16 %v597, %v593
    %v722 = vpack.c.b16 %v598, %v594
    %v723 = vpack.c.b16 %v599, %v595
    %v724 = vpack.c.b16 %v600, %v596
    %v725 = vpack.c.b16 %v605, %v601
    %v726 = vpack.c.b16 %v606, %v602
    %v727 = vpack.c.b16 %v607, %v603
    %v728 = vpack.c.b16 %v608, %v604
    %v729 = vpack.c.b16 %v613, %v609
    %v730 = vpack.c.b16 %v614, %v610
    %v731 = vpack.c.b16 %v615, %v611
    %v732 = vpack.c.b16 %v616, %v612
    %v733 = vpack.c.b16 %v621, %v617
    %v734 = vpack.c.b16 %v622, %v618
    %v735 = vpack.c.b16 %v623, %v619
    %v736 = vpack.c.b16 %v624, %v620
    %v737 = vpack.c.b16 %v629, %v625
    %v738 = vpack.c.b16 %v630, %v626
    %v739 = vpack.c.b16 %v631, %v627
    %v740 = vpack.c.b16 %v632, %v628
    %v741 = vpack.c.b16 %v637, %v633
    %v742 = vpack.c.b16 %v638, %v634
    %v743 = vpack.c.b16 %v639, %v635
    %v744 = vpack.c.b16 %v640, %v636
    %v745 = vpack.c.b16 %v645, %v641
    %v746 = vpack.c.b16 %v646, %v642
    %v747 = vpack.c.b16 %v647, %v643
    %v748 = vpack.c.b16 %v648, %v644
    %v749 = vpack.c.b16 %v653, %v649
    %v750 = vpack.c.b16 %v654, %v650
    %v751 = vpack.c.b16 %v655, %v651
    %v752 = vpack.c.b16 %v656, %v652
    %v753 = vpack.c.b16 %v661, %v657
    %v754 = vpack.c.b16 %v662, %v658
    %v755 = vpack.c.b16 %v663, %v659
    %v756 = vpack.c.b16 %v664, %v660
    %v757 = vpack.c.b16 %v669, %v665
    %v758 = vpack.c.b16 %v670, %v666
    %v759 = vpack.c.b16 %v671, %v667
    %v760 = vpack.c.b16 %v672, %v668
    %v761 = vpack.c.b16 %v677, %v673
    %v762 = vpack.c.b16 %v678, %v674
    %v763 = vpack.c.b16 %v679, %v675
    %v764 = vpack.c.b16 %v680, %v676
    %v765 = vpack.c.b16 %v685, %v681
    %v766 = vpack.c.b16 %v686, %v682
    %v767 = vpack.c.b16 %v687, %v683
    %v768 = vpack.c.b16 %v688, %v684
    %v769 = vpack.c.b16 %v693, %v689
    %v770 = vpack.c.b16 %v694, %v690
    %v771 = vpack.c.b16 %v695, %v691
    %v772 = vpack.c.b16 %v696, %v692
    %v773 = vpack.c.b16 %v701, %v697
    %v774 = vpack.c.b16 %v702, %v698
    %v775 = vpack.c.b16 %v703, %v699
    %v776 = vpack.c.b16 %v704, %v700
    %v777 = vpack.c.b16 %v709, %v705
    %v778 = vpack.c.b16 %v710, %v706
    %v779 = vpack.c.b16 %v711, %v707
    %v780 = vpack.c.b16 %v712, %v708
    %v781 = vpack.c.b16 %v717, %v713
    %v782 = vpack.c.b16 %v718, %v714
    %v783 = vpack.c.b16 %v719, %v715
    %v784 = vpack.c.b16 %v720, %v716
    %849 = vmatpush.bf16.msra.mxu0 %v749
    %850 = vmatpush.bf16.msra.mxu0 %v745
    %851 = vmatpush.bf16.msra.mxu0 %v741
    %852 = vmatpush.bf16.msra.mxu0 %v737
    %853 = vmatpush.bf16.msra.mxu0 %v733
    %854 = vmatpush.bf16.msra.mxu0 %v729
    %855 = vmatpush.bf16.msra.mxu0 %v725
    %856 = vmatpush.bf16.msra.mxu0 %v721
    %857 = vmatmul.bf16.gmra.mxu0 %v461
    %v858 = vpop.f32.mrf.mxu0
    %v859 = vadd.f32 0.0, %v858
    %v860 = vpop.f32.mrf.mxu0
    %v861 = vadd.f32 0.0, %v860
    %862 = vmatmul.bf16.gmra.mxu0 %v463
    %v863 = vpop.f32.mrf.mxu0
    %v864 = vadd.f32 0.0, %v863
    %v865 = vpop.f32.mrf.mxu0
    %v866 = vadd.f32 0.0, %v865
    %867 = vdwg.mxu0
    %868 = vmatpush.bf16.msra.mxu0 %v781
    %869 = vmatpush.bf16.msra.mxu0 %v777
    %870 = vmatpush.bf16.msra.mxu0 %v773
    %871 = vmatpush.bf16.msra.mxu0 %v769
    %872 = vmatpush.bf16.msra.mxu0 %v765
    %873 = vmatpush.bf16.msra.mxu0 %v761
    %874 = vmatpush.bf16.msra.mxu0 %v757
    %875 = vmatpush.bf16.msra.mxu0 %v753
    %876 = vmatmul.bf16.gmra.mxu0 %v462
    %v877 = vpop.f32.mrf.mxu0
    %v878 = vadd.f32 %v859, %v877
    %v879 = vpop.f32.mrf.mxu0
    %v880 = vadd.f32 %v861, %v879
    %881 = vmatmul.bf16.gmra.mxu0 %v464
    %v882 = vpop.f32.mrf.mxu0
    %v883 = vadd.f32 %v864, %v882
    %v884 = vpop.f32.mrf.mxu0
    %v885 = vadd.f32 %v866, %v884
    %886 = vdwg.mxu0
    %887 = vmatpush.bf16.msra.mxu0 %v750
    %888 = vmatpush.bf16.msra.mxu0 %v746
    %889 = vmatpush.bf16.msra.mxu0 %v742
    %890 = vmatpush.bf16.msra.mxu0 %v738
    %891 = vmatpush.bf16.msra.mxu0 %v734
    %892 = vmatpush.bf16.msra.mxu0 %v730
    %893 = vmatpush.bf16.msra.mxu0 %v726
    %894 = vmatpush.bf16.msra.mxu0 %v722
    %895 = vmatmul.bf16.gmra.mxu0 %v461
    %v896 = vpop.f32.mrf.mxu0
    %v897 = vadd.f32 0.0, %v896
    %v898 = vpop.f32.mrf.mxu0
    %v899 = vadd.f32 0.0, %v898
    %900 = vmatmul.bf16.gmra.mxu0 %v463
    %v901 = vpop.f32.mrf.mxu0
    %v902 = vadd.f32 0.0, %v901
    %v903 = vpop.f32.mrf.mxu0
    %v904 = vadd.f32 0.0, %v903
    %905 = vdwg.mxu0
    %906 = vmatpush.bf16.msra.mxu0 %v782
    %907 = vmatpush.bf16.msra.mxu0 %v778
    %908 = vmatpush.bf16.msra.mxu0 %v774
    %909 = vmatpush.bf16.msra.mxu0 %v770
    %910 = vmatpush.bf16.msra.mxu0 %v766
    %911 = vmatpush.bf16.msra.mxu0 %v762
    %912 = vmatpush.bf16.msra.mxu0 %v758
    %913 = vmatpush.bf16.msra.mxu0 %v754
    %914 = vmatmul.bf16.gmra.mxu0 %v462
    %v915 = vpop.f32.mrf.mxu0
    %v916 = vadd.f32 %v897, %v915
    %v917 = vpop.f32.mrf.mxu0
    %v918 = vadd.f32 %v899, %v917
    %919 = vmatmul.bf16.gmra.mxu0 %v464
    %v920 = vpop.f32.mrf.mxu0
    %v921 = vadd.f32 %v902, %v920
    %v922 = vpop.f32.mrf.mxu0
    %v923 = vadd.f32 %v904, %v922
    %924 = vdwg.mxu0
    %925 = vmatpush.bf16.msra.mxu0 %v751
    %926 = vmatpush.bf16.msra.mxu0 %v747
    %927 = vmatpush.bf16.msra.mxu0 %v743
    %928 = vmatpush.bf16.msra.mxu0 %v739
    %929 = vmatpush.bf16.msra.mxu0 %v735
    %930 = vmatpush.bf16.msra.mxu0 %v731
    %931 = vmatpush.bf16.msra.mxu0 %v727
    %932 = vmatpush.bf16.msra.mxu0 %v723
    %933 = vmatmul.bf16.gmra.mxu0 %v461
    %v934 = vpop.f32.mrf.mxu0
    %v935 = vadd.f32 0.0, %v934
    %v936 = vpop.f32.mrf.mxu0
    %v937 = vadd.f32 0.0, %v936
    %938 = vmatmul.bf16.gmra.mxu0 %v463
    %v939 = vpop.f32.mrf.mxu0
    %v940 = vadd.f32 0.0, %v939
    %v941 = vpop.f32.mrf.mxu0
    %v942 = vadd.f32 0.0, %v941
    %943 = vdwg.mxu0
    %944 = vmatpush.bf16.msra.mxu0 %v783
    %945 = vmatpush.bf16.msra.mxu0 %v779
    %946 = vmatpush.bf16.msra.mxu0 %v775
    %947 = vmatpush.bf16.msra.mxu0 %v771
    %948 = vmatpush.bf16.msra.mxu0 %v767
    %949 = vmatpush.bf16.msra.mxu0 %v763
    %950 = vmatpush.bf16.msra.mxu0 %v759
    %951 = vmatpush.bf16.msra.mxu0 %v755
    %952 = vmatmul.bf16.gmra.mxu0 %v462
    %v953 = vpop.f32.mrf.mxu0
    %v954 = vadd.f32 %v935, %v953
    %v955 = vpop.f32.mrf.mxu0
    %v956 = vadd.f32 %v937, %v955
    %957 = vmatmul.bf16.gmra.mxu0 %v464
    %v958 = vpop.f32.mrf.mxu0
    %v959 = vadd.f32 %v940, %v958
    %v960 = vpop.f32.mrf.mxu0
    %v961 = vadd.f32 %v942, %v960
    %962 = vdwg.mxu0
    %963 = vmatpush.bf16.msra.mxu0 %v752
    %964 = vmatpush.bf16.msra.mxu0 %v748
    %965 = vmatpush.bf16.msra.mxu0 %v744
    %966 = vmatpush.bf16.msra.mxu0 %v740
    %967 = vmatpush.bf16.msra.mxu0 %v736
    %968 = vmatpush.bf16.msra.mxu0 %v732
    %969 = vmatpush.bf16.msra.mxu0 %v728
    %970 = vmatpush.bf16.msra.mxu0 %v724
    %971 = vmatmul.bf16.gmra.mxu0 %v461
    %v972 = vpop.f32.mrf.mxu0
    %v973 = vadd.f32 0.0, %v972
    %v974 = vpop.f32.mrf.mxu0
    %v975 = vadd.f32 0.0, %v974
    %976 = vmatmul.bf16.gmra.mxu0 %v463
    %v977 = vpop.f32.mrf.mxu0
    %v978 = vadd.f32 0.0, %v977
    %v979 = vpop.f32.mrf.mxu0
    %v980 = vadd.f32 0.0, %v979
    %981 = vdwg.mxu0
    %982 = vmatpush.bf16.msra.mxu0 %v784
    %983 = vmatpush.bf16.msra.mxu0 %v780
    %984 = vmatpush.bf16.msra.mxu0 %v776
    %985 = vmatpush.bf16.msra.mxu0 %v772
    %986 = vmatpush.bf16.msra.mxu0 %v768
    %987 = vmatpush.bf16.msra.mxu0 %v764
    %988 = vmatpush.bf16.msra.mxu0 %v760
    %989 = vmatpush.bf16.msra.mxu0 %v756
    %990 = vmatmul.bf16.gmra.mxu0 %v462
    %v991 = vpop.f32.mrf.mxu0
    %v992 = vadd.f32 %v973, %v991
    %v993 = vpop.f32.mrf.mxu0
    %v994 = vadd.f32 %v975, %v993
    %995 = vmatmul.bf16.gmra.mxu0 %v464
    %v996 = vpop.f32.mrf.mxu0
    %v997 = vadd.f32 %v978, %v996
    %v998 = vpop.f32.mrf.mxu0
    %v999 = vadd.f32 %v980, %v998
    %1000 = vdwg.mxu0
    %v1001 = vadd.f32 %v878, %v880
    %v1002 = vadd.f32 %v1001, %v883
    %v1003 = vadd.f32 %v1002, %v885
    %v1004 = vrot.slane %v1003, 4
    %v1005 = vadd.f32 %v1003, %v1004
    %v1006 = vrot.slane %v1005, 2
    %v1007 = vadd.f32 %v1005, %v1006
    %v1008 = vrot.slane %v1007, 1
    %v1009 = vadd.f32 %v1007, %v1008
    %v1010 = vadd.f32 %v916, %v918
    %v1011 = vadd.f32 %v1010, %v921
    %v1012 = vadd.f32 %v1011, %v923
    %v1013 = vrot.slane %v1012, 4
    %v1014 = vadd.f32 %v1012, %v1013
    %v1015 = vrot.slane %v1014, 2
    %v1016 = vadd.f32 %v1014, %v1015
    %v1017 = vrot.slane %v1016, 1
    %v1018 = vadd.f32 %v1016, %v1017
    %v1019 = vadd.f32 %v954, %v956
    %v1020 = vadd.f32 %v1019, %v959
    %v1021 = vadd.f32 %v1020, %v961
    %v1022 = vrot.slane %v1021, 4
    %v1023 = vadd.f32 %v1021, %v1022
    %v1024 = vrot.slane %v1023, 2
    %v1025 = vadd.f32 %v1023, %v1024
    %v1026 = vrot.slane %v1025, 1
    %v1027 = vadd.f32 %v1025, %v1026
    %v1028 = vadd.f32 %v992, %v994
    %v1029 = vadd.f32 %v1028, %v997
    %v1030 = vadd.f32 %v1029, %v999
    %v1031 = vrot.slane %v1030, 4
    %v1032 = vadd.f32 %v1030, %v1031
    %v1033 = vrot.slane %v1032, 2
    %v1034 = vadd.f32 %v1032, %v1033
    %v1035 = vrot.slane %v1034, 1
    %v1036 = vadd.f32 %v1034, %v1035
    %v1037 = vmul.f32 %v878, %v878
    %v1038 = vmul.f32 %v916, %v916
    %v1039 = vmul.f32 %v954, %v954
    %v1040 = vmul.f32 %v992, %v992
    %v1041 = vmul.f32 %v880, %v880
    %v1042 = vmul.f32 %v918, %v918
    %v1043 = vmul.f32 %v956, %v956
    %v1044 = vmul.f32 %v994, %v994
    %v1045 = vmul.f32 %v883, %v883
    %v1046 = vmul.f32 %v921, %v921
    %v1047 = vmul.f32 %v959, %v959
    %v1048 = vmul.f32 %v997, %v997
    %v1049 = vmul.f32 %v885, %v885
    %v1050 = vmul.f32 %v923, %v923
    %v1051 = vmul.f32 %v961, %v961
    %v1052 = vmul.f32 %v999, %v999
    %v1053 = vadd.f32 %v1037, %v1041
    %v1054 = vadd.f32 %v1053, %v1045
    %v1055 = vadd.f32 %v1054, %v1049
    %v1056 = vrot.slane %v1055, 4
    %v1057 = vadd.f32 %v1055, %v1056
    %v1058 = vrot.slane %v1057, 2
    %v1059 = vadd.f32 %v1057, %v1058
    %v1060 = vrot.slane %v1059, 1
    %v1061 = vadd.f32 %v1059, %v1060
    %v1062 = vadd.f32 %v1038, %v1042
    %v1063 = vadd.f32 %v1062, %v1046
    %v1064 = vadd.f32 %v1063, %v1050
    %v1065 = vrot.slane %v1064, 4
    %v1066 = vadd.f32 %v1064, %v1065
    %v1067 = vrot.slane %v1066, 2
    %v1068 = vadd.f32 %v1066, %v1067
    %v1069 = vrot.slane %v1068, 1
    %v1070 = vadd.f32 %v1068, %v1069
    %v1071 = vadd.f32 %v1039, %v1043
    %v1072 = vadd.f32 %v1071, %v1047
    %v1073 = vadd.f32 %v1072, %v1051
    %v1074 = vrot.slane %v1073, 4
    %v1075 = vadd.f32 %v1073, %v1074
    %v1076 = vrot.slane %v1075, 2
    %v1077 = vadd.f32 %v1075, %v1076
    %v1078 = vrot.slane %v1077, 1
    %v1079 = vadd.f32 %v1077, %v1078
    %v1080 = vadd.f32 %v1040, %v1044
    %v1081 = vadd.f32 %v1080, %v1048
    %v1082 = vadd.f32 %v1081, %v1052
    %v1083 = vrot.slane %v1082, 4
    %v1084 = vadd.f32 %v1082, %v1083
    %v1085 = vrot.slane %v1084, 2
    %v1086 = vadd.f32 %v1084, %v1085
    %v1087 = vrot.slane %v1086, 1
    %v1088 = vadd.f32 %v1086, %v1087
    %v1089 = vmul.f32 %v1009, 0.03125
    %v1090 = vmul.f32 %v1018, 0.03125
    %v1091 = vmul.f32 %v1027, 0.03125
    %v1092 = vmul.f32 %v1036, 0.03125
    %v1093 = vmul.f32 %v1061, 0.03125
    %v1094 = vmul.f32 %v1070, 0.03125
    %v1095 = vmul.f32 %v1079, 0.03125
    %v1096 = vmul.f32 %v1088, 0.03125
    %v1097 = vmul.f32 %v1089, %v1089
    %v1098 = vmul.f32 %v1090, %v1090
    %v1099 = vmul.f32 %v1091, %v1091
    %v1100 = vmul.f32 %v1092, %v1092
    %v1101 = vsub.f32 %v1093, %v1097
    %v1102 = vsub.f32 %v1094, %v1098
    %v1103 = vsub.f32 %v1095, %v1099
    %v1104 = vsub.f32 %v1096, %v1100
    %v1105 = vmax.f32 %v1101, 0.0
    %v1106 = vmax.f32 %v1102, 0.0
    %v1107 = vmax.f32 %v1103, 0.0
    %v1108 = vmax.f32 %v1104, 0.0
    %v1109 = vld [vmem:[#allocation11] sm:$0xf]
    %v1110 = vadd.f32 %v1105, 1e-05
    %v1111 = vadd.f32 %v1106, 1e-05
    %v1112 = vadd.f32 %v1107, 1e-05
    %v1113 = vadd.f32 %v1108, 1e-05
    %v1114 = vrsqrt.pop %v1110
    %v1115 = vmul.f32 %v1114, %v1110
    %v1116 = vmul.f32 %v1115, %v1114
    %v1117 = vmul.f32 0.5, %v1116
    %v1118 = vsub.f32 1.5, %v1117
    %v1119 = vmul.f32 %v1114, %v1118
    %vm1120 = vweird.f32 %v1110
    %vm1121 = vweird.f32 %v1114
    %vm1122 = vmor %vm1120, %vm1121
    %v1123 = vsel %vm1122, %v1114, %v1119
    %v1124 = vrsqrt.pop %v1111
    %v1125 = vmul.f32 %v1124, %v1111
    %v1126 = vmul.f32 %v1125, %v1124
    %v1127 = vmul.f32 0.5, %v1126
    %v1128 = vsub.f32 1.5, %v1127
    %v1129 = vmul.f32 %v1124, %v1128
    %vm1130 = vweird.f32 %v1111
    %vm1131 = vweird.f32 %v1124
    %vm1132 = vmor %vm1130, %vm1131
    %v1133 = vsel %vm1132, %v1124, %v1129
    %v1134 = vrsqrt.pop %v1112
    %v1135 = vmul.f32 %v1134, %v1112
    %v1136 = vmul.f32 %v1135, %v1134
    %v1137 = vmul.f32 0.5, %v1136
    %v1138 = vsub.f32 1.5, %v1137
    %v1139 = vmul.f32 %v1134, %v1138
    %vm1140 = vweird.f32 %v1112
    %vm1141 = vweird.f32 %v1134
    %vm1142 = vmor %vm1140, %vm1141
    %v1143 = vsel %vm1142, %v1134, %v1139
    %v1144 = vrsqrt.pop %v1113
    %v1145 = vmul.f32 %v1144, %v1113
    %v1146 = vmul.f32 %v1145, %v1144
    %v1147 = vmul.f32 0.5, %v1146
    %v1148 = vsub.f32 1.5, %v1147
    %v1149 = vmul.f32 %v1144, %v1148
    %vm1150 = vweird.f32 %v1113
    %vm1151 = vweird.f32 %v1144
    %vm1152 = vmor %vm1150, %vm1151
    %v1153 = vsel %vm1152, %v1144, %v1149
    %v1158 = vrot.slane %v1133, 7
    %v1159 = vrot.slane %v1143, 6
    %v1160 = vrot.slane %v1153, 5
    %v1161 = vsel %vm346, %v1123, %v1158
    %vm1162 = vcmask 1042434
    %v1163 = vsel %vm1162, %v1159, %v1160
    %vm1164 = vcmask 1041408
    %v1165 = vsel %vm1164, %v1161, %v1163
    %v1167 = vmul.f32 %v1109, %v1165
    %v1168 = vld [vmem:[#allocation13] sm:$0xf]
    %v1170 = vperm.slane %v1167, 0
    %v1171 = vperm.slane %v1167, 1
    %v1172 = vperm.slane %v1167, 2
    %v1173 = vperm.slane %v1167, 3
    %v1178 = vmul.f32 %v1089, %v1170
    %v1179 = vmul.f32 %v1090, %v1171
    %v1180 = vmul.f32 %v1091, %v1172
    %v1181 = vmul.f32 %v1092, %v1173
    %v1186 = vrot.slane %v1179, 7
    %v1187 = vrot.slane %v1180, 6
    %v1188 = vrot.slane %v1181, 5
    %v1189 = vsel %vm346, %v1178, %v1186
    %v1190 = vsel %vm1162, %v1187, %v1188
    %v1191 = vsel %vm1164, %v1189, %v1190
    %v1193 = vsub.f32 %v1168, %v1191
    %v1194 = vpack.c.bf16 %v916, %v878
    %v1195 = vpack.c.bf16 %v992, %v954
    %v1196 = vpack.c.bf16 %v918, %v880
    %v1197 = vpack.c.bf16 %v994, %v956
    %v1198 = vpack.c.bf16 %v921, %v883
    %v1199 = vpack.c.bf16 %v997, %v959
    %v1200 = vpack.c.bf16 %v923, %v885
    %v1201 = vpack.c.bf16 %v999, %v961
    %v1202 = vpack.c.bf16 %v1171, %v1170
    %v1203 = vpack.c.bf16 %v1173, %v1172
    %v1206 = vunpack.c.l.b16 %v1202
    %v1207 = vunpack.c.h.b16 %v1202
    %v1208 = vunpack.c.l.b16 %v1203
    %v1209 = vunpack.c.h.b16 %v1203
    %v1210 = vpack.c.b16 %v1206, %v1206
    %v1211 = vpack.c.b16 %v1207, %v1207
    %v1212 = vpack.c.b16 %v1208, %v1208
    %v1213 = vpack.c.b16 %v1209, %v1209
    %v1215 = vpack.i.b16 %v1210, %v1210
    %v1217 = vperm.slane %v1215, 0
    %v1219 = vpack.i.b16 %v1211, %v1211
    %v1221 = vperm.slane %v1219, 0
    %v1223 = vpack.i.b16 %v1212, %v1212
    %v1225 = vperm.slane %v1223, 0
    %v1227 = vpack.i.b16 %v1213, %v1213
    %v1229 = vperm.slane %v1227, 0
    %v1230 = vunpack.c.l.bf16 %v1194
    %v1231 = vunpack.c.h.bf16 %v1194
    %v1232 = vunpack.c.l.bf16 %v1195
    %v1233 = vunpack.c.h.bf16 %v1195
    %v1234 = vunpack.c.l.bf16 %v1196
    %v1235 = vunpack.c.h.bf16 %v1196
    %v1236 = vunpack.c.l.bf16 %v1197
    %v1237 = vunpack.c.h.bf16 %v1197
    %v1238 = vunpack.c.l.bf16 %v1198
    %v1239 = vunpack.c.h.bf16 %v1198
    %v1240 = vunpack.c.l.bf16 %v1199
    %v1241 = vunpack.c.h.bf16 %v1199
    %v1242 = vunpack.c.l.bf16 %v1200
    %v1243 = vunpack.c.h.bf16 %v1200
    %v1244 = vunpack.c.l.bf16 %v1201
    %v1245 = vunpack.c.h.bf16 %v1201
    %v1246 = vunpack.c.l.bf16 %v1217
    %v1247 = vunpack.c.l.bf16 %v1221
    %v1248 = vunpack.c.l.bf16 %v1225
    %v1249 = vunpack.c.l.bf16 %v1229
    %v1250 = vmul.f32 %v1230, %v1246
    %v1251 = vmul.f32 %v1231, %v1247
    %v1252 = vmul.f32 %v1232, %v1248
    %v1253 = vmul.f32 %v1233, %v1249
    %v1254 = vmul.f32 %v1234, %v1246
    %v1255 = vmul.f32 %v1235, %v1247
    %v1256 = vmul.f32 %v1236, %v1248
    %v1257 = vmul.f32 %v1237, %v1249
    %v1258 = vmul.f32 %v1238, %v1246
    %v1259 = vmul.f32 %v1239, %v1247
    %v1260 = vmul.f32 %v1240, %v1248
    %v1261 = vmul.f32 %v1241, %v1249
    %v1262 = vmul.f32 %v1242, %v1246
    %v1263 = vmul.f32 %v1243, %v1247
    %v1264 = vmul.f32 %v1244, %v1248
    %v1265 = vmul.f32 %v1245, %v1249
    %v1266 = vpack.c.bf16 %v1251, %v1250
    %v1267 = vpack.c.bf16 %v1253, %v1252
    %v1268 = vpack.c.bf16 %v1255, %v1254
    %v1269 = vpack.c.bf16 %v1257, %v1256
    %v1270 = vpack.c.bf16 %v1259, %v1258
    %v1271 = vpack.c.bf16 %v1261, %v1260
    %v1272 = vpack.c.bf16 %v1263, %v1262
    %v1273 = vpack.c.bf16 %v1265, %v1264
    %v1275 = vperm.slane %v1193, 0
    %v1276 = vperm.slane %v1193, 1
    %v1277 = vperm.slane %v1193, 2
    %v1278 = vperm.slane %v1193, 3
    %v1283 = vpack.c.bf16 %v1276, %v1275
    %v1284 = vpack.c.bf16 %v1278, %v1277
    %v1287 = vunpack.c.l.b16 %v1283
    %v1288 = vunpack.c.h.b16 %v1283
    %v1289 = vunpack.c.l.b16 %v1284
    %v1290 = vunpack.c.h.b16 %v1284
    %v1291 = vpack.c.b16 %v1287, %v1287
    %v1292 = vpack.c.b16 %v1288, %v1288
    %v1293 = vpack.c.b16 %v1289, %v1289
    %v1294 = vpack.c.b16 %v1290, %v1290
    %v1296 = vpack.i.b16 %v1291, %v1291
    %v1298 = vperm.slane %v1296, 0
    %v1300 = vpack.i.b16 %v1292, %v1292
    %v1302 = vperm.slane %v1300, 0
    %v1304 = vpack.i.b16 %v1293, %v1293
    %v1306 = vperm.slane %v1304, 0
    %v1308 = vpack.i.b16 %v1294, %v1294
    %v1310 = vperm.slane %v1308, 0
    %v1311 = vunpack.c.l.bf16 %v1266
    %v1312 = vunpack.c.h.bf16 %v1266
    %v1313 = vunpack.c.l.bf16 %v1267
    %v1314 = vunpack.c.h.bf16 %v1267
    %v1315 = vunpack.c.l.bf16 %v1268
    %v1316 = vunpack.c.h.bf16 %v1268
    %v1317 = vunpack.c.l.bf16 %v1269
    %v1318 = vunpack.c.h.bf16 %v1269
    %v1319 = vunpack.c.l.bf16 %v1270
    %v1320 = vunpack.c.h.bf16 %v1270
    %v1321 = vunpack.c.l.bf16 %v1271
    %v1322 = vunpack.c.h.bf16 %v1271
    %v1323 = vunpack.c.l.bf16 %v1272
    %v1324 = vunpack.c.h.bf16 %v1272
    %v1325 = vunpack.c.l.bf16 %v1273
    %v1326 = vunpack.c.h.bf16 %v1273
    %v1327 = vunpack.c.l.bf16 %v1298
    %v1328 = vunpack.c.l.bf16 %v1302
    %v1329 = vunpack.c.l.bf16 %v1306
    %v1330 = vunpack.c.l.bf16 %v1310
    %v1331 = vadd.f32 %v1311, %v1327
    %v1332 = vadd.f32 %v1312, %v1328
    %v1333 = vadd.f32 %v1313, %v1329
    %v1334 = vadd.f32 %v1314, %v1330
    %v1335 = vadd.f32 %v1315, %v1327
    %v1336 = vadd.f32 %v1316, %v1328
    %v1337 = vadd.f32 %v1317, %v1329
    %v1338 = vadd.f32 %v1318, %v1330
    %v1339 = vadd.f32 %v1319, %v1327
    %v1340 = vadd.f32 %v1320, %v1328
    %v1341 = vadd.f32 %v1321, %v1329
    %v1342 = vadd.f32 %v1322, %v1330
    %v1343 = vadd.f32 %v1323, %v1327
    %v1344 = vadd.f32 %v1324, %v1328
    %v1345 = vadd.f32 %v1325, %v1329
    %v1346 = vadd.f32 %v1326, %v1330
    %v1347 = vpack.c.bf16 %v1332, %v1331
    %v1348 = vpack.c.bf16 %v1334, %v1333
    %v1349 = vpack.c.bf16 %v1336, %v1335
    %v1350 = vpack.c.bf16 %v1338, %v1337
    %v1351 = vpack.c.bf16 %v1340, %v1339
    %v1352 = vpack.c.bf16 %v1342, %v1341
    %v1353 = vpack.c.bf16 %v1344, %v1343
    %v1354 = vpack.c.bf16 %v1346, %v1345
    %v1355 = vunpack.c.l.bf16 %v1347
    %v1356 = vunpack.c.h.bf16 %v1347
    %v1357 = vunpack.c.l.bf16 %v1348
    %v1358 = vunpack.c.h.bf16 %v1348
    %v1359 = vunpack.c.l.bf16 %v1349
    %v1360 = vunpack.c.h.bf16 %v1349
    %v1361 = vunpack.c.l.bf16 %v1350
    %v1362 = vunpack.c.h.bf16 %v1350
    %v1363 = vunpack.c.l.bf16 %v1351
    %v1364 = vunpack.c.h.bf16 %v1351
    %v1365 = vunpack.c.l.bf16 %v1352
    %v1366 = vunpack.c.h.bf16 %v1352
    %v1367 = vunpack.c.l.bf16 %v1353
    %v1368 = vunpack.c.h.bf16 %v1353
    %v1369 = vunpack.c.l.bf16 %v1354
    %v1370 = vunpack.c.h.bf16 %v1354
    %v1371 = vmax.f32 %v1355, 0.0
    %v1372 = vmax.f32 %v1356, 0.0
    %v1373 = vmax.f32 %v1357, 0.0
    %v1374 = vmax.f32 %v1358, 0.0
    %v1375 = vmax.f32 %v1359, 0.0
    %v1376 = vmax.f32 %v1360, 0.0
    %v1377 = vmax.f32 %v1361, 0.0
    %v1378 = vmax.f32 %v1362, 0.0
    %v1379 = vmax.f32 %v1363, 0.0
    %v1380 = vmax.f32 %v1364, 0.0
    %v1381 = vmax.f32 %v1365, 0.0
    %v1382 = vmax.f32 %v1366, 0.0
    %v1383 = vmax.f32 %v1367, 0.0
    %v1384 = vmax.f32 %v1368, 0.0
    %v1385 = vmax.f32 %v1369, 0.0
    %v1386 = vmax.f32 %v1370, 0.0
    %v1387 = vpack.c.bf16 %v1375, %v1371
    %v1388 = vpack.c.bf16 %v1376, %v1372
    %v1389 = vpack.c.bf16 %v1377, %v1373
    %v1390 = vpack.c.bf16 %v1378, %v1374
    %v1391 = vpack.c.bf16 %v1383, %v1379
    %v1392 = vpack.c.bf16 %v1384, %v1380
    %v1393 = vpack.c.bf16 %v1385, %v1381
    %v1394 = vpack.c.bf16 %v1386, %v1382
    %v1395 = vld [vmem:[#allocation14] sm:$0xff]
    %v1396 = vld [vmem:[#allocation14 + $0x8] sm:$0xff]
    %v1397 = vld [vmem:[#allocation14 + $0x10] sm:$0xff]
    %v1398 = vld [vmem:[#allocation14 + $0x18] sm:$0xff]
    %v1399 = vld [vmem:[#allocation14 + $0x20] sm:$0xff]
    %v1400 = vld [vmem:[#allocation14 + $0x28] sm:$0xff]
    %v1401 = vld [vmem:[#allocation14 + $0x30] sm:$0xff]
    %v1402 = vld [vmem:[#allocation14 + $0x38] sm:$0xff]
    %v1403 = vld [vmem:[#allocation14 + $0x40] sm:$0xff]
    %v1404 = vld [vmem:[#allocation14 + $0x48] sm:$0xff]
    %v1405 = vld [vmem:[#allocation14 + $0x50] sm:$0xff]
    %v1406 = vld [vmem:[#allocation14 + $0x58] sm:$0xff]
    %v1407 = vld [vmem:[#allocation14 + $0x60] sm:$0xff]
    %v1408 = vld [vmem:[#allocation14 + $0x68] sm:$0xff]
    %v1409 = vld [vmem:[#allocation14 + $0x70] sm:$0xff]
    %v1410 = vld [vmem:[#allocation14 + $0x78] sm:$0xff]
    %v1411 = vld [vmem:[#allocation14 + $0x80] sm:$0xff]
    %v1412 = vld [vmem:[#allocation14 + $0x88] sm:$0xff]
    %v1413 = vld [vmem:[#allocation14 + $0x90] sm:$0xff]
    %v1414 = vld [vmem:[#allocation14 + $0x98] sm:$0xff]
    %v1415 = vld [vmem:[#allocation14 + $0xa0] sm:$0xff]
    %v1416 = vld [vmem:[#allocation14 + $0xa8] sm:$0xff]
    %v1417 = vld [vmem:[#allocation14 + $0xb0] sm:$0xff]
    %v1418 = vld [vmem:[#allocation14 + $0xb8] sm:$0xff]
    %v1419 = vld [vmem:[#allocation14 + $0xc0] sm:$0xff]
    %v1420 = vld [vmem:[#allocation14 + $0xc8] sm:$0xff]
    %v1421 = vld [vmem:[#allocation14 + $0xd0] sm:$0xff]
    %v1422 = vld [vmem:[#allocation14 + $0xd8] sm:$0xff]
    %v1423 = vld [vmem:[#allocation14 + $0xe0] sm:$0xff]
    %v1424 = vld [vmem:[#allocation14 + $0xe8] sm:$0xff]
    %v1425 = vld [vmem:[#allocation14 + $0xf0] sm:$0xff]
    %v1426 = vld [vmem:[#allocation14 + $0xf8] sm:$0xff]
    %v1427 = vld [vmem:[#allocation14 + $0x100] sm:$0xff]
    %v1428 = vld [vmem:[#allocation14 + $0x108] sm:$0xff]
    %v1429 = vld [vmem:[#allocation14 + $0x110] sm:$0xff]
    %v1430 = vld [vmem:[#allocation14 + $0x118] sm:$0xff]
    %v1431 = vld [vmem:[#allocation14 + $0x120] sm:$0xff]
    %v1432 = vld [vmem:[#allocation14 + $0x128] sm:$0xff]
    %v1433 = vld [vmem:[#allocation14 + $0x130] sm:$0xff]
    %v1434 = vld [vmem:[#allocation14 + $0x138] sm:$0xff]
    %v1435 = vld [vmem:[#allocation14 + $0x140] sm:$0xff]
    %v1436 = vld [vmem:[#allocation14 + $0x148] sm:$0xff]
    %v1437 = vld [vmem:[#allocation14 + $0x150] sm:$0xff]
    %v1438 = vld [vmem:[#allocation14 + $0x158] sm:$0xff]
    %v1439 = vld [vmem:[#allocation14 + $0x160] sm:$0xff]
    %v1440 = vld [vmem:[#allocation14 + $0x168] sm:$0xff]
    %v1441 = vld [vmem:[#allocation14 + $0x170] sm:$0xff]
    %v1442 = vld [vmem:[#allocation14 + $0x178] sm:$0xff]
    %v1443 = vld [vmem:[#allocation14 + $0x180] sm:$0xff]
    %v1444 = vld [vmem:[#allocation14 + $0x188] sm:$0xff]
    %v1445 = vld [vmem:[#allocation14 + $0x190] sm:$0xff]
    %v1446 = vld [vmem:[#allocation14 + $0x198] sm:$0xff]
    %v1447 = vld [vmem:[#allocation14 + $0x1a0] sm:$0xff]
    %v1448 = vld [vmem:[#allocation14 + $0x1a8] sm:$0xff]
    %v1449 = vld [vmem:[#allocation14 + $0x1b0] sm:$0xff]
    %v1450 = vld [vmem:[#allocation14 + $0x1b8] sm:$0xff]
    %v1451 = vld [vmem:[#allocation14 + $0x1c0] sm:$0xff]
    %v1452 = vld [vmem:[#allocation14 + $0x1c8] sm:$0xff]
    %v1453 = vld [vmem:[#allocation14 + $0x1d0] sm:$0xff]
    %v1454 = vld [vmem:[#allocation14 + $0x1d8] sm:$0xff]
    %v1455 = vld [vmem:[#allocation14 + $0x1e0] sm:$0xff]
    %v1456 = vld [vmem:[#allocation14 + $0x1e8] sm:$0xff]
    %v1457 = vld [vmem:[#allocation14 + $0x1f0] sm:$0xff]
    %v1458 = vld [vmem:[#allocation14 + $0x1f8] sm:$0xff]
    %v1459 = vld [vmem:[#allocation14 + $0x200] sm:$0xff]
    %v1460 = vld [vmem:[#allocation14 + $0x208] sm:$0xff]
    %v1461 = vld [vmem:[#allocation14 + $0x210] sm:$0xff]
    %v1462 = vld [vmem:[#allocation14 + $0x218] sm:$0xff]
    %v1463 = vld [vmem:[#allocation14 + $0x220] sm:$0xff]
    %v1464 = vld [vmem:[#allocation14 + $0x228] sm:$0xff]
    %v1465 = vld [vmem:[#allocation14 + $0x230] sm:$0xff]
    %v1466 = vld [vmem:[#allocation14 + $0x238] sm:$0xff]
    %v1467 = vld [vmem:[#allocation14 + $0x240] sm:$0xff]
    %v1468 = vld [vmem:[#allocation14 + $0x248] sm:$0xff]
    %v1469 = vld [vmem:[#allocation14 + $0x250] sm:$0xff]
    %v1470 = vld [vmem:[#allocation14 + $0x258] sm:$0xff]
    %v1471 = vld [vmem:[#allocation14 + $0x260] sm:$0xff]
    %v1472 = vld [vmem:[#allocation14 + $0x268] sm:$0xff]
    %v1473 = vld [vmem:[#allocation14 + $0x270] sm:$0xff]
    %v1474 = vld [vmem:[#allocation14 + $0x278] sm:$0xff]
    %v1475 = vld [vmem:[#allocation14 + $0x280] sm:$0xff]
    %v1476 = vld [vmem:[#allocation14 + $0x288] sm:$0xff]
    %v1477 = vld [vmem:[#allocation14 + $0x290] sm:$0xff]
    %v1478 = vld [vmem:[#allocation14 + $0x298] sm:$0xff]
    %v1479 = vld [vmem:[#allocation14 + $0x2a0] sm:$0xff]
    %v1480 = vld [vmem:[#allocation14 + $0x2a8] sm:$0xff]
    %v1481 = vld [vmem:[#allocation14 + $0x2b0] sm:$0xff]
    %v1482 = vld [vmem:[#allocation14 + $0x2b8] sm:$0xff]
    %v1483 = vld [vmem:[#allocation14 + $0x2c0] sm:$0xff]
    %v1484 = vld [vmem:[#allocation14 + $0x2c8] sm:$0xff]
    %v1485 = vld [vmem:[#allocation14 + $0x2d0] sm:$0xff]
    %v1486 = vld [vmem:[#allocation14 + $0x2d8] sm:$0xff]
    %v1487 = vld [vmem:[#allocation14 + $0x2e0] sm:$0xff]
    %v1488 = vld [vmem:[#allocation14 + $0x2e8] sm:$0xff]
    %v1489 = vld [vmem:[#allocation14 + $0x2f0] sm:$0xff]
    %v1490 = vld [vmem:[#allocation14 + $0x2f8] sm:$0xff]
    %v1491 = vld [vmem:[#allocation14 + $0x300] sm:$0xff]
    %v1492 = vld [vmem:[#allocation14 + $0x308] sm:$0xff]
    %v1493 = vld [vmem:[#allocation14 + $0x310] sm:$0xff]
    %v1494 = vld [vmem:[#allocation14 + $0x318] sm:$0xff]
    %v1495 = vld [vmem:[#allocation14 + $0x320] sm:$0xff]
    %v1496 = vld [vmem:[#allocation14 + $0x328] sm:$0xff]
    %v1497 = vld [vmem:[#allocation14 + $0x330] sm:$0xff]
    %v1498 = vld [vmem:[#allocation14 + $0x338] sm:$0xff]
    %v1499 = vld [vmem:[#allocation14 + $0x340] sm:$0xff]
    %v1500 = vld [vmem:[#allocation14 + $0x348] sm:$0xff]
    %v1501 = vld [vmem:[#allocation14 + $0x350] sm:$0xff]
    %v1502 = vld [vmem:[#allocation14 + $0x358] sm:$0xff]
    %v1503 = vld [vmem:[#allocation14 + $0x360] sm:$0xff]
    %v1504 = vld [vmem:[#allocation14 + $0x368] sm:$0xff]
    %v1505 = vld [vmem:[#allocation14 + $0x370] sm:$0xff]
    %v1506 = vld [vmem:[#allocation14 + $0x378] sm:$0xff]
    %v1507 = vld [vmem:[#allocation14 + $0x380] sm:$0xff]
    %v1508 = vld [vmem:[#allocation14 + $0x388] sm:$0xff]
    %v1509 = vld [vmem:[#allocation14 + $0x390] sm:$0xff]
    %v1510 = vld [vmem:[#allocation14 + $0x398] sm:$0xff]
    %v1511 = vld [vmem:[#allocation14 + $0x3a0] sm:$0xff]
    %v1512 = vld [vmem:[#allocation14 + $0x3a8] sm:$0xff]
    %v1513 = vld [vmem:[#allocation14 + $0x3b0] sm:$0xff]
    %v1514 = vld [vmem:[#allocation14 + $0x3b8] sm:$0xff]
    %v1515 = vld [vmem:[#allocation14 + $0x3c0] sm:$0xff]
    %v1516 = vld [vmem:[#allocation14 + $0x3c8] sm:$0xff]
    %v1517 = vld [vmem:[#allocation14 + $0x3d0] sm:$0xff]
    %v1518 = vld [vmem:[#allocation14 + $0x3d8] sm:$0xff]
    %v1519 = vld [vmem:[#allocation14 + $0x3e0] sm:$0xff]
    %v1520 = vld [vmem:[#allocation14 + $0x3e8] sm:$0xff]
    %v1521 = vld [vmem:[#allocation14 + $0x3f0] sm:$0xff]
    %v1522 = vld [vmem:[#allocation14 + $0x3f8] sm:$0xff]
    %v1523 = vld [vmem:[#allocation14 + $0x400] sm:$0xff]
    %v1524 = vld [vmem:[#allocation14 + $0x408] sm:$0xff]
    %v1525 = vld [vmem:[#allocation14 + $0x410] sm:$0xff]
    %v1526 = vld [vmem:[#allocation14 + $0x418] sm:$0xff]
    %v1527 = vld [vmem:[#allocation14 + $0x420] sm:$0xff]
    %v1528 = vld [vmem:[#allocation14 + $0x428] sm:$0xff]
    %v1529 = vld [vmem:[#allocation14 + $0x430] sm:$0xff]
    %v1530 = vld [vmem:[#allocation14 + $0x438] sm:$0xff]
    %v1531 = vld [vmem:[#allocation14 + $0x440] sm:$0xff]
    %v1532 = vld [vmem:[#allocation14 + $0x448] sm:$0xff]
    %v1533 = vld [vmem:[#allocation14 + $0x450] sm:$0xff]
    %v1534 = vld [vmem:[#allocation14 + $0x458] sm:$0xff]
    %v1535 = vld [vmem:[#allocation14 + $0x460] sm:$0xff]
    %v1536 = vld [vmem:[#allocation14 + $0x468] sm:$0xff]
    %v1537 = vld [vmem:[#allocation14 + $0x470] sm:$0xff]
    %v1538 = vld [vmem:[#allocation14 + $0x478] sm:$0xff]
    %v1539 = vld [vmem:[#allocation14 + $0x480] sm:$0xff]
    %v1540 = vld [vmem:[#allocation14 + $0x488] sm:$0xff]
    %v1541 = vld [vmem:[#allocation14 + $0x490] sm:$0xff]
    %v1542 = vld [vmem:[#allocation14 + $0x498] sm:$0xff]
    %v1543 = vld [vmem:[#allocation14 + $0x4a0] sm:$0xff]
    %v1544 = vld [vmem:[#allocation14 + $0x4a8] sm:$0xff]
    %v1545 = vld [vmem:[#allocation14 + $0x4b0] sm:$0xff]
    %v1546 = vld [vmem:[#allocation14 + $0x4b8] sm:$0xff]
    %v1547 = vld [vmem:[#allocation14 + $0x4c0] sm:$0xff]
    %v1548 = vld [vmem:[#allocation14 + $0x4c8] sm:$0xff]
    %v1549 = vld [vmem:[#allocation14 + $0x4d0] sm:$0xff]
    %v1550 = vld [vmem:[#allocation14 + $0x4d8] sm:$0xff]
    %v1551 = vld [vmem:[#allocation14 + $0x4e0] sm:$0xff]
    %v1552 = vld [vmem:[#allocation14 + $0x4e8] sm:$0xff]
    %v1553 = vld [vmem:[#allocation14 + $0x4f0] sm:$0xff]
    %v1554 = vld [vmem:[#allocation14 + $0x4f8] sm:$0xff]
    %v1555 = vld [vmem:[#allocation14 + $0x500] sm:$0xff]
    %v1556 = vld [vmem:[#allocation14 + $0x508] sm:$0xff]
    %v1557 = vld [vmem:[#allocation14 + $0x510] sm:$0xff]
    %v1558 = vld [vmem:[#allocation14 + $0x518] sm:$0xff]
    %v1559 = vld [vmem:[#allocation14 + $0x520] sm:$0xff]
    %v1560 = vld [vmem:[#allocation14 + $0x528] sm:$0xff]
    %v1561 = vld [vmem:[#allocation14 + $0x530] sm:$0xff]
    %v1562 = vld [vmem:[#allocation14 + $0x538] sm:$0xff]
    %v1563 = vld [vmem:[#allocation14 + $0x540] sm:$0xff]
    %v1564 = vld [vmem:[#allocation14 + $0x548] sm:$0xff]
    %v1565 = vld [vmem:[#allocation14 + $0x550] sm:$0xff]
    %v1566 = vld [vmem:[#allocation14 + $0x558] sm:$0xff]
    %v1567 = vld [vmem:[#allocation14 + $0x560] sm:$0xff]
    %v1568 = vld [vmem:[#allocation14 + $0x568] sm:$0xff]
    %v1569 = vld [vmem:[#allocation14 + $0x570] sm:$0xff]
    %v1570 = vld [vmem:[#allocation14 + $0x578] sm:$0xff]
    %v1571 = vld [vmem:[#allocation14 + $0x580] sm:$0xff]
    %v1572 = vld [vmem:[#allocation14 + $0x588] sm:$0xff]
    %v1573 = vld [vmem:[#allocation14 + $0x590] sm:$0xff]
    %v1574 = vld [vmem:[#allocation14 + $0x598] sm:$0xff]
    %v1575 = vld [vmem:[#allocation14 + $0x5a0] sm:$0xff]
    %v1576 = vld [vmem:[#allocation14 + $0x5a8] sm:$0xff]
    %v1577 = vld [vmem:[#allocation14 + $0x5b0] sm:$0xff]
    %v1578 = vld [vmem:[#allocation14 + $0x5b8] sm:$0xff]
    %v1579 = vld [vmem:[#allocation14 + $0x5c0] sm:$0xff]
    %v1580 = vld [vmem:[#allocation14 + $0x5c8] sm:$0xff]
    %v1581 = vld [vmem:[#allocation14 + $0x5d0] sm:$0xff]
    %v1582 = vld [vmem:[#allocation14 + $0x5d8] sm:$0xff]
    %v1583 = vld [vmem:[#allocation14 + $0x5e0] sm:$0xff]
    %v1584 = vld [vmem:[#allocation14 + $0x5e8] sm:$0xff]
    %v1585 = vld [vmem:[#allocation14 + $0x5f0] sm:$0xff]
    %v1586 = vld [vmem:[#allocation14 + $0x5f8] sm:$0xff]
    %v1779 = vunpack.c.l.b16 %v1395
    %v1780 = vunpack.c.h.b16 %v1395
    %v1781 = vunpack.c.l.b16 %v1396
    %v1782 = vunpack.c.h.b16 %v1396
    %v1783 = vunpack.c.l.b16 %v1397
    %v1784 = vunpack.c.h.b16 %v1397
    %v1785 = vunpack.c.l.b16 %v1398
    %v1786 = vunpack.c.h.b16 %v1398
    %v1787 = vunpack.c.l.b16 %v1399
    %v1788 = vunpack.c.h.b16 %v1399
    %v1789 = vunpack.c.l.b16 %v1400
    %v1790 = vunpack.c.h.b16 %v1400
    %v1791 = vunpack.c.l.b16 %v1401
    %v1792 = vunpack.c.h.b16 %v1401
    %v1793 = vunpack.c.l.b16 %v1402
    %v1794 = vunpack.c.h.b16 %v1402
    %v1795 = vunpack.c.l.b16 %v1403
    %v1796 = vunpack.c.h.b16 %v1403
    %v1797 = vunpack.c.l.b16 %v1404
    %v1798 = vunpack.c.h.b16 %v1404
    %v1799 = vunpack.c.l.b16 %v1405
    %v1800 = vunpack.c.h.b16 %v1405
    %v1801 = vunpack.c.l.b16 %v1406
    %v1802 = vunpack.c.h.b16 %v1406
    %v1803 = vunpack.c.l.b16 %v1407
    %v1804 = vunpack.c.h.b16 %v1407
    %v1805 = vunpack.c.l.b16 %v1408
    %v1806 = vunpack.c.h.b16 %v1408
    %v1807 = vunpack.c.l.b16 %v1409
    %v1808 = vunpack.c.h.b16 %v1409
    %v1809 = vunpack.c.l.b16 %v1410
    %v1810 = vunpack.c.h.b16 %v1410
    %v1811 = vunpack.c.l.b16 %v1411
    %v1812 = vunpack.c.h.b16 %v1411
    %v1813 = vunpack.c.l.b16 %v1412
    %v1814 = vunpack.c.h.b16 %v1412
    %v1815 = vunpack.c.l.b16 %v1413
    %v1816 = vunpack.c.h.b16 %v1413
    %v1817 = vunpack.c.l.b16 %v1414
    %v1818 = vunpack.c.h.b16 %v1414
    %v1819 = vunpack.c.l.b16 %v1415
    %v1820 = vunpack.c.h.b16 %v1415
    %v1821 = vunpack.c.l.b16 %v1416
    %v1822 = vunpack.c.h.b16 %v1416
    %v1823 = vunpack.c.l.b16 %v1417
    %v1824 = vunpack.c.h.b16 %v1417
    %v1825 = vunpack.c.l.b16 %v1418
    %v1826 = vunpack.c.h.b16 %v1418
    %v1827 = vunpack.c.l.b16 %v1419
    %v1828 = vunpack.c.h.b16 %v1419
    %v1829 = vunpack.c.l.b16 %v1420
    %v1830 = vunpack.c.h.b16 %v1420
    %v1831 = vunpack.c.l.b16 %v1421
    %v1832 = vunpack.c.h.b16 %v1421
    %v1833 = vunpack.c.l.b16 %v1422
    %v1834 = vunpack.c.h.b16 %v1422
    %v1835 = vunpack.c.l.b16 %v1423
    %v1836 = vunpack.c.h.b16 %v1423
    %v1837 = vunpack.c.l.b16 %v1424
    %v1838 = vunpack.c.h.b16 %v1424
    %v1839 = vunpack.c.l.b16 %v1425
    %v1840 = vunpack.c.h.b16 %v1425
    %v1841 = vunpack.c.l.b16 %v1426
    %v1842 = vunpack.c.h.b16 %v1426
    %v1843 = vunpack.c.l.b16 %v1427
    %v1844 = vunpack.c.h.b16 %v1427
    %v1845 = vunpack.c.l.b16 %v1428
    %v1846 = vunpack.c.h.b16 %v1428
    %v1847 = vunpack.c.l.b16 %v1429
    %v1848 = vunpack.c.h.b16 %v1429
    %v1849 = vunpack.c.l.b16 %v1430
    %v1850 = vunpack.c.h.b16 %v1430
    %v1851 = vunpack.c.l.b16 %v1431
    %v1852 = vunpack.c.h.b16 %v1431
    %v1853 = vunpack.c.l.b16 %v1432
    %v1854 = vunpack.c.h.b16 %v1432
    %v1855 = vunpack.c.l.b16 %v1433
    %v1856 = vunpack.c.h.b16 %v1433
    %v1857 = vunpack.c.l.b16 %v1434
    %v1858 = vunpack.c.h.b16 %v1434
    %v1859 = vunpack.c.l.b16 %v1435
    %v1860 = vunpack.c.h.b16 %v1435
    %v1861 = vunpack.c.l.b16 %v1436
    %v1862 = vunpack.c.h.b16 %v1436
    %v1863 = vunpack.c.l.b16 %v1437
    %v1864 = vunpack.c.h.b16 %v1437
    %v1865 = vunpack.c.l.b16 %v1438
    %v1866 = vunpack.c.h.b16 %v1438
    %v1867 = vunpack.c.l.b16 %v1439
    %v1868 = vunpack.c.h.b16 %v1439
    %v1869 = vunpack.c.l.b16 %v1440
    %v1870 = vunpack.c.h.b16 %v1440
    %v1871 = vunpack.c.l.b16 %v1441
    %v1872 = vunpack.c.h.b16 %v1441
    %v1873 = vunpack.c.l.b16 %v1442
    %v1874 = vunpack.c.h.b16 %v1442
    %v1875 = vunpack.c.l.b16 %v1443
    %v1876 = vunpack.c.h.b16 %v1443
    %v1877 = vunpack.c.l.b16 %v1444
    %v1878 = vunpack.c.h.b16 %v1444
    %v1879 = vunpack.c.l.b16 %v1445
    %v1880 = vunpack.c.h.b16 %v1445
    %v1881 = vunpack.c.l.b16 %v1446
    %v1882 = vunpack.c.h.b16 %v1446
    %v1883 = vunpack.c.l.b16 %v1447
    %v1884 = vunpack.c.h.b16 %v1447
    %v1885 = vunpack.c.l.b16 %v1448
    %v1886 = vunpack.c.h.b16 %v1448
    %v1887 = vunpack.c.l.b16 %v1449
    %v1888 = vunpack.c.h.b16 %v1449
    %v1889 = vunpack.c.l.b16 %v1450
    %v1890 = vunpack.c.h.b16 %v1450
    %v1891 = vunpack.c.l.b16 %v1451
    %v1892 = vunpack.c.h.b16 %v1451
    %v1893 = vunpack.c.l.b16 %v1452
    %v1894 = vunpack.c.h.b16 %v1452
    %v1895 = vunpack.c.l.b16 %v1453
    %v1896 = vunpack.c.h.b16 %v1453
    %v1897 = vunpack.c.l.b16 %v1454
    %v1898 = vunpack.c.h.b16 %v1454
    %v1899 = vunpack.c.l.b16 %v1455
    %v1900 = vunpack.c.h.b16 %v1455
    %v1901 = vunpack.c.l.b16 %v1456
    %v1902 = vunpack.c.h.b16 %v1456
    %v1903 = vunpack.c.l.b16 %v1457
    %v1904 = vunpack.c.h.b16 %v1457
    %v1905 = vunpack.c.l.b16 %v1458
    %v1906 = vunpack.c.h.b16 %v1458
    %v1907 = vunpack.c.l.b16 %v1459
    %v1908 = vunpack.c.h.b16 %v1459
    %v1909 = vunpack.c.l.b16 %v1460
    %v1910 = vunpack.c.h.b16 %v1460
    %v1911 = vunpack.c.l.b16 %v1461
    %v1912 = vunpack.c.h.b16 %v1461
    %v1913 = vunpack.c.l.b16 %v1462
    %v1914 = vunpack.c.h.b16 %v1462
    %v1915 = vunpack.c.l.b16 %v1463
    %v1916 = vunpack.c.h.b16 %v1463
    %v1917 = vunpack.c.l.b16 %v1464
    %v1918 = vunpack.c.h.b16 %v1464
    %v1919 = vunpack.c.l.b16 %v1465
    %v1920 = vunpack.c.h.b16 %v1465
    %v1921 = vunpack.c.l.b16 %v1466
    %v1922 = vunpack.c.h.b16 %v1466
    %v1923 = vunpack.c.l.b16 %v1467
    %v1924 = vunpack.c.h.b16 %v1467
    %v1925 = vunpack.c.l.b16 %v1468
    %v1926 = vunpack.c.h.b16 %v1468
    %v1927 = vunpack.c.l.b16 %v1469
    %v1928 = vunpack.c.h.b16 %v1469
    %v1929 = vunpack.c.l.b16 %v1470
    %v1930 = vunpack.c.h.b16 %v1470
    %v1931 = vunpack.c.l.b16 %v1471
    %v1932 = vunpack.c.h.b16 %v1471
    %v1933 = vunpack.c.l.b16 %v1472
    %v1934 = vunpack.c.h.b16 %v1472
    %v1935 = vunpack.c.l.b16 %v1473
    %v1936 = vunpack.c.h.b16 %v1473
    %v1937 = vunpack.c.l.b16 %v1474
    %v1938 = vunpack.c.h.b16 %v1474
    %v1939 = vunpack.c.l.b16 %v1475
    %v1940 = vunpack.c.h.b16 %v1475
    %v1941 = vunpack.c.l.b16 %v1476
    %v1942 = vunpack.c.h.b16 %v1476
    %v1943 = vunpack.c.l.b16 %v1477
    %v1944 = vunpack.c.h.b16 %v1477
    %v1945 = vunpack.c.l.b16 %v1478
    %v1946 = vunpack.c.h.b16 %v1478
    %v1947 = vunpack.c.l.b16 %v1479
    %v1948 = vunpack.c.h.b16 %v1479
    %v1949 = vunpack.c.l.b16 %v1480
    %v1950 = vunpack.c.h.b16 %v1480
    %v1951 = vunpack.c.l.b16 %v1481
    %v1952 = vunpack.c.h.b16 %v1481
    %v1953 = vunpack.c.l.b16 %v1482
    %v1954 = vunpack.c.h.b16 %v1482
    %v1955 = vunpack.c.l.b16 %v1483
    %v1956 = vunpack.c.h.b16 %v1483
    %v1957 = vunpack.c.l.b16 %v1484
    %v1958 = vunpack.c.h.b16 %v1484
    %v1959 = vunpack.c.l.b16 %v1485
    %v1960 = vunpack.c.h.b16 %v1485
    %v1961 = vunpack.c.l.b16 %v1486
    %v1962 = vunpack.c.h.b16 %v1486
    %v1963 = vunpack.c.l.b16 %v1487
    %v1964 = vunpack.c.h.b16 %v1487
    %v1965 = vunpack.c.l.b16 %v1488
    %v1966 = vunpack.c.h.b16 %v1488
    %v1967 = vunpack.c.l.b16 %v1489
    %v1968 = vunpack.c.h.b16 %v1489
    %v1969 = vunpack.c.l.b16 %v1490
    %v1970 = vunpack.c.h.b16 %v1490
    %v1971 = vunpack.c.l.b16 %v1491
    %v1972 = vunpack.c.h.b16 %v1491
    %v1973 = vunpack.c.l.b16 %v1492
    %v1974 = vunpack.c.h.b16 %v1492
    %v1975 = vunpack.c.l.b16 %v1493
    %v1976 = vunpack.c.h.b16 %v1493
    %v1977 = vunpack.c.l.b16 %v1494
    %v1978 = vunpack.c.h.b16 %v1494
    %v1979 = vunpack.c.l.b16 %v1495
    %v1980 = vunpack.c.h.b16 %v1495
    %v1981 = vunpack.c.l.b16 %v1496
    %v1982 = vunpack.c.h.b16 %v1496
    %v1983 = vunpack.c.l.b16 %v1497
    %v1984 = vunpack.c.h.b16 %v1497
    %v1985 = vunpack.c.l.b16 %v1498
    %v1986 = vunpack.c.h.b16 %v1498
    %v1987 = vunpack.c.l.b16 %v1499
    %v1988 = vunpack.c.h.b16 %v1499
    %v1989 = vunpack.c.l.b16 %v1500
    %v1990 = vunpack.c.h.b16 %v1500
    %v1991 = vunpack.c.l.b16 %v1501
    %v1992 = vunpack.c.h.b16 %v1501
    %v1993 = vunpack.c.l.b16 %v1502
    %v1994 = vunpack.c.h.b16 %v1502
    %v1995 = vunpack.c.l.b16 %v1503
    %v1996 = vunpack.c.h.b16 %v1503
    %v1997 = vunpack.c.l.b16 %v1504
    %v1998 = vunpack.c.h.b16 %v1504
    %v1999 = vunpack.c.l.b16 %v1505
    %v2000 = vunpack.c.h.b16 %v1505
    %v2001 = vunpack.c.l.b16 %v1506
    %v2002 = vunpack.c.h.b16 %v1506
    %v2003 = vunpack.c.l.b16 %v1507
    %v2004 = vunpack.c.h.b16 %v1507
    %v2005 = vunpack.c.l.b16 %v1508
    %v2006 = vunpack.c.h.b16 %v1508
    %v2007 = vunpack.c.l.b16 %v1509
    %v2008 = vunpack.c.h.b16 %v1509
    %v2009 = vunpack.c.l.b16 %v1510
    %v2010 = vunpack.c.h.b16 %v1510
    %v2011 = vunpack.c.l.b16 %v1511
    %v2012 = vunpack.c.h.b16 %v1511
    %v2013 = vunpack.c.l.b16 %v1512
    %v2014 = vunpack.c.h.b16 %v1512
    %v2015 = vunpack.c.l.b16 %v1513
    %v2016 = vunpack.c.h.b16 %v1513
    %v2017 = vunpack.c.l.b16 %v1514
    %v2018 = vunpack.c.h.b16 %v1514
    %v2019 = vunpack.c.l.b16 %v1515
    %v2020 = vunpack.c.h.b16 %v1515
    %v2021 = vunpack.c.l.b16 %v1516
    %v2022 = vunpack.c.h.b16 %v1516
    %v2023 = vunpack.c.l.b16 %v1517
    %v2024 = vunpack.c.h.b16 %v1517
    %v2025 = vunpack.c.l.b16 %v1518
    %v2026 = vunpack.c.h.b16 %v1518
    %v2027 = vunpack.c.l.b16 %v1519
    %v2028 = vunpack.c.h.b16 %v1519
    %v2029 = vunpack.c.l.b16 %v1520
    %v2030 = vunpack.c.h.b16 %v1520
    %v2031 = vunpack.c.l.b16 %v1521
    %v2032 = vunpack.c.h.b16 %v1521
    %v2033 = vunpack.c.l.b16 %v1522
    %v2034 = vunpack.c.h.b16 %v1522
    %v2035 = vunpack.c.l.b16 %v1523
    %v2036 = vunpack.c.h.b16 %v1523
    %v2037 = vunpack.c.l.b16 %v1524
    %v2038 = vunpack.c.h.b16 %v1524
    %v2039 = vunpack.c.l.b16 %v1525
    %v2040 = vunpack.c.h.b16 %v1525
    %v2041 = vunpack.c.l.b16 %v1526
    %v2042 = vunpack.c.h.b16 %v1526
    %v2043 = vunpack.c.l.b16 %v1527
    %v2044 = vunpack.c.h.b16 %v1527
    %v2045 = vunpack.c.l.b16 %v1528
    %v2046 = vunpack.c.h.b16 %v1528
    %v2047 = vunpack.c.l.b16 %v1529
    %v2048 = vunpack.c.h.b16 %v1529
    %v2049 = vunpack.c.l.b16 %v1530
    %v2050 = vunpack.c.h.b16 %v1530
    %v2051 = vunpack.c.l.b16 %v1531
    %v2052 = vunpack.c.h.b16 %v1531
    %v2053 = vunpack.c.l.b16 %v1532
    %v2054 = vunpack.c.h.b16 %v1532
    %v2055 = vunpack.c.l.b16 %v1533
    %v2056 = vunpack.c.h.b16 %v1533
    %v2057 = vunpack.c.l.b16 %v1534
    %v2058 = vunpack.c.h.b16 %v1534
    %v2059 = vunpack.c.l.b16 %v1535
    %v2060 = vunpack.c.h.b16 %v1535
    %v2061 = vunpack.c.l.b16 %v1536
    %v2062 = vunpack.c.h.b16 %v1536
    %v2063 = vunpack.c.l.b16 %v1537
    %v2064 = vunpack.c.h.b16 %v1537
    %v2065 = vunpack.c.l.b16 %v1538
    %v2066 = vunpack.c.h.b16 %v1538
    %v2067 = vunpack.c.l.b16 %v1539
    %v2068 = vunpack.c.h.b16 %v1539
    %v2069 = vunpack.c.l.b16 %v1540
    %v2070 = vunpack.c.h.b16 %v1540
    %v2071 = vunpack.c.l.b16 %v1541
    %v2072 = vunpack.c.h.b16 %v1541
    %v2073 = vunpack.c.l.b16 %v1542
    %v2074 = vunpack.c.h.b16 %v1542
    %v2075 = vunpack.c.l.b16 %v1543
    %v2076 = vunpack.c.h.b16 %v1543
    %v2077 = vunpack.c.l.b16 %v1544
    %v2078 = vunpack.c.h.b16 %v1544
    %v2079 = vunpack.c.l.b16 %v1545
    %v2080 = vunpack.c.h.b16 %v1545
    %v2081 = vunpack.c.l.b16 %v1546
    %v2082 = vunpack.c.h.b16 %v1546
    %v2083 = vunpack.c.l.b16 %v1547
    %v2084 = vunpack.c.h.b16 %v1547
    %v2085 = vunpack.c.l.b16 %v1548
    %v2086 = vunpack.c.h.b16 %v1548
    %v2087 = vunpack.c.l.b16 %v1549
    %v2088 = vunpack.c.h.b16 %v1549
    %v2089 = vunpack.c.l.b16 %v1550
    %v2090 = vunpack.c.h.b16 %v1550
    %v2091 = vunpack.c.l.b16 %v1551
    %v2092 = vunpack.c.h.b16 %v1551
    %v2093 = vunpack.c.l.b16 %v1552
    %v2094 = vunpack.c.h.b16 %v1552
    %v2095 = vunpack.c.l.b16 %v1553
    %v2096 = vunpack.c.h.b16 %v1553
    %v2097 = vunpack.c.l.b16 %v1554
    %v2098 = vunpack.c.h.b16 %v1554
    %v2099 = vunpack.c.l.b16 %v1555
    %v2100 = vunpack.c.h.b16 %v1555
    %v2101 = vunpack.c.l.b16 %v1556
    %v2102 = vunpack.c.h.b16 %v1556
    %v2103 = vunpack.c.l.b16 %v1557
    %v2104 = vunpack.c.h.b16 %v1557
    %v2105 = vunpack.c.l.b16 %v1558
    %v2106 = vunpack.c.h.b16 %v1558
    %v2107 = vunpack.c.l.b16 %v1559
    %v2108 = vunpack.c.h.b16 %v1559
    %v2109 = vunpack.c.l.b16 %v1560
    %v2110 = vunpack.c.h.b16 %v1560
    %v2111 = vunpack.c.l.b16 %v1561
    %v2112 = vunpack.c.h.b16 %v1561
    %v2113 = vunpack.c.l.b16 %v1562
    %v2114 = vunpack.c.h.b16 %v1562
    %v2115 = vunpack.c.l.b16 %v1563
    %v2116 = vunpack.c.h.b16 %v1563
    %v2117 = vunpack.c.l.b16 %v1564
    %v2118 = vunpack.c.h.b16 %v1564
    %v2119 = vunpack.c.l.b16 %v1565
    %v2120 = vunpack.c.h.b16 %v1565
    %v2121 = vunpack.c.l.b16 %v1566
    %v2122 = vunpack.c.h.b16 %v1566
    %v2123 = vunpack.c.l.b16 %v1567
    %v2124 = vunpack.c.h.b16 %v1567
    %v2125 = vunpack.c.l.b16 %v1568
    %v2126 = vunpack.c.h.b16 %v1568
    %v2127 = vunpack.c.l.b16 %v1569
    %v2128 = vunpack.c.h.b16 %v1569
    %v2129 = vunpack.c.l.b16 %v1570
    %v2130 = vunpack.c.h.b16 %v1570
    %v2131 = vunpack.c.l.b16 %v1571
    %v2132 = vunpack.c.h.b16 %v1571
    %v2133 = vunpack.c.l.b16 %v1572
    %v2134 = vunpack.c.h.b16 %v1572
    %v2135 = vunpack.c.l.b16 %v1573
    %v2136 = vunpack.c.h.b16 %v1573
    %v2137 = vunpack.c.l.b16 %v1574
    %v2138 = vunpack.c.h.b16 %v1574
    %v2139 = vunpack.c.l.b16 %v1575
    %v2140 = vunpack.c.h.b16 %v1575
    %v2141 = vunpack.c.l.b16 %v1576
    %v2142 = vunpack.c.h.b16 %v1576
    %v2143 = vunpack.c.l.b16 %v1577
    %v2144 = vunpack.c.h.b16 %v1577
    %v2145 = vunpack.c.l.b16 %v1578
    %v2146 = vunpack.c.h.b16 %v1578
    %v2147 = vunpack.c.l.b16 %v1579
    %v2148 = vunpack.c.h.b16 %v1579
    %v2149 = vunpack.c.l.b16 %v1580
    %v2150 = vunpack.c.h.b16 %v1580
    %v2151 = vunpack.c.l.b16 %v1581
    %v2152 = vunpack.c.h.b16 %v1581
    %v2153 = vunpack.c.l.b16 %v1582
    %v2154 = vunpack.c.h.b16 %v1582
    %v2155 = vunpack.c.l.b16 %v1583
    %v2156 = vunpack.c.h.b16 %v1583
    %v2157 = vunpack.c.l.b16 %v1584
    %v2158 = vunpack.c.h.b16 %v1584
    %v2159 = vunpack.c.l.b16 %v1585
    %v2160 = vunpack.c.h.b16 %v1585
    %v2161 = vunpack.c.l.b16 %v1586
    %v2162 = vunpack.c.h.b16 %v1586
    %v2163 = vpack.c.b16 %v1785, %v1779
    %v2164 = vpack.c.b16 %v1786, %v1780
    %v2165 = vpack.c.b16 %v1787, %v1781
    %v2166 = vpack.c.b16 %v1788, %v1782
    %v2167 = vpack.c.b16 %v1789, %v1783
    %v2168 = vpack.c.b16 %v1790, %v1784
    %v2169 = vpack.c.b16 %v1797, %v1791
    %v2170 = vpack.c.b16 %v1798, %v1792
    %v2171 = vpack.c.b16 %v1799, %v1793
    %v2172 = vpack.c.b16 %v1800, %v1794
    %v2173 = vpack.c.b16 %v1801, %v1795
    %v2174 = vpack.c.b16 %v1802, %v1796
    %v2175 = vpack.c.b16 %v1809, %v1803
    %v2176 = vpack.c.b16 %v1810, %v1804
    %v2177 = vpack.c.b16 %v1811, %v1805
    %v2178 = vpack.c.b16 %v1812, %v1806
    %v2179 = vpack.c.b16 %v1813, %v1807
    %v2180 = vpack.c.b16 %v1814, %v1808
    %v2181 = vpack.c.b16 %v1821, %v1815
    %v2182 = vpack.c.b16 %v1822, %v1816
    %v2183 = vpack.c.b16 %v1823, %v1817
    %v2184 = vpack.c.b16 %v1824, %v1818
    %v2185 = vpack.c.b16 %v1825, %v1819
    %v2186 = vpack.c.b16 %v1826, %v1820
    %v2187 = vpack.c.b16 %v1833, %v1827
    %v2188 = vpack.c.b16 %v1834, %v1828
    %v2189 = vpack.c.b16 %v1835, %v1829
    %v2190 = vpack.c.b16 %v1836, %v1830
    %v2191 = vpack.c.b16 %v1837, %v1831
    %v2192 = vpack.c.b16 %v1838, %v1832
    %v2193 = vpack.c.b16 %v1845, %v1839
    %v2194 = vpack.c.b16 %v1846, %v1840
    %v2195 = vpack.c.b16 %v1847, %v1841
    %v2196 = vpack.c.b16 %v1848, %v1842
    %v2197 = vpack.c.b16 %v1849, %v1843
    %v2198 = vpack.c.b16 %v1850, %v1844
    %v2199 = vpack.c.b16 %v1857, %v1851
    %v2200 = vpack.c.b16 %v1858, %v1852
    %v2201 = vpack.c.b16 %v1859, %v1853
    %v2202 = vpack.c.b16 %v1860, %v1854
    %v2203 = vpack.c.b16 %v1861, %v1855
    %v2204 = vpack.c.b16 %v1862, %v1856
    %v2205 = vpack.c.b16 %v1869, %v1863
    %v2206 = vpack.c.b16 %v1870, %v1864
    %v2207 = vpack.c.b16 %v1871, %v1865
    %v2208 = vpack.c.b16 %v1872, %v1866
    %v2209 = vpack.c.b16 %v1873, %v1867
    %v2210 = vpack.c.b16 %v1874, %v1868
    %v2211 = vpack.c.b16 %v1881, %v1875
    %v2212 = vpack.c.b16 %v1882, %v1876
    %v2213 = vpack.c.b16 %v1883, %v1877
    %v2214 = vpack.c.b16 %v1884, %v1878
    %v2215 = vpack.c.b16 %v1885, %v1879
    %v2216 = vpack.c.b16 %v1886, %v1880
    %v2217 = vpack.c.b16 %v1893, %v1887
    %v2218 = vpack.c.b16 %v1894, %v1888
    %v2219 = vpack.c.b16 %v1895, %v1889
    %v2220 = vpack.c.b16 %v1896, %v1890
    %v2221 = vpack.c.b16 %v1897, %v1891
    %v2222 = vpack.c.b16 %v1898, %v1892
    %v2223 = vpack.c.b16 %v1905, %v1899
    %v2224 = vpack.c.b16 %v1906, %v1900
    %v2225 = vpack.c.b16 %v1907, %v1901
    %v2226 = vpack.c.b16 %v1908, %v1902
    %v2227 = vpack.c.b16 %v1909, %v1903
    %v2228 = vpack.c.b16 %v1910, %v1904
    %v2229 = vpack.c.b16 %v1917, %v1911
    %v2230 = vpack.c.b16 %v1918, %v1912
    %v2231 = vpack.c.b16 %v1919, %v1913
    %v2232 = vpack.c.b16 %v1920, %v1914
    %v2233 = vpack.c.b16 %v1921, %v1915
    %v2234 = vpack.c.b16 %v1922, %v1916
    %v2235 = vpack.c.b16 %v1929, %v1923
    %v2236 = vpack.c.b16 %v1930, %v1924
    %v2237 = vpack.c.b16 %v1931, %v1925
    %v2238 = vpack.c.b16 %v1932, %v1926
    %v2239 = vpack.c.b16 %v1933, %v1927
    %v2240 = vpack.c.b16 %v1934, %v1928
    %v2241 = vpack.c.b16 %v1941, %v1935
    %v2242 = vpack.c.b16 %v1942, %v1936
    %v2243 = vpack.c.b16 %v1943, %v1937
    %v2244 = vpack.c.b16 %v1944, %v1938
    %v2245 = vpack.c.b16 %v1945, %v1939
    %v2246 = vpack.c.b16 %v1946, %v1940
    %v2247 = vpack.c.b16 %v1953, %v1947
    %v2248 = vpack.c.b16 %v1954, %v1948
    %v2249 = vpack.c.b16 %v1955, %v1949
    %v2250 = vpack.c.b16 %v1956, %v1950
    %v2251 = vpack.c.b16 %v1957, %v1951
    %v2252 = vpack.c.b16 %v1958, %v1952
    %v2253 = vpack.c.b16 %v1965, %v1959
    %v2254 = vpack.c.b16 %v1966, %v1960
    %v2255 = vpack.c.b16 %v1967, %v1961
    %v2256 = vpack.c.b16 %v1968, %v1962
    %v2257 = vpack.c.b16 %v1969, %v1963
    %v2258 = vpack.c.b16 %v1970, %v1964
    %v2259 = vpack.c.b16 %v1977, %v1971
    %v2260 = vpack.c.b16 %v1978, %v1972
    %v2261 = vpack.c.b16 %v1979, %v1973
    %v2262 = vpack.c.b16 %v1980, %v1974
    %v2263 = vpack.c.b16 %v1981, %v1975
    %v2264 = vpack.c.b16 %v1982, %v1976
    %v2265 = vpack.c.b16 %v1989, %v1983
    %v2266 = vpack.c.b16 %v1990, %v1984
    %v2267 = vpack.c.b16 %v1991, %v1985
    %v2268 = vpack.c.b16 %v1992, %v1986
    %v2269 = vpack.c.b16 %v1993, %v1987
    %v2270 = vpack.c.b16 %v1994, %v1988
    %v2271 = vpack.c.b16 %v2001, %v1995
    %v2272 = vpack.c.b16 %v2002, %v1996
    %v2273 = vpack.c.b16 %v2003, %v1997
    %v2274 = vpack.c.b16 %v2004, %v1998
    %v2275 = vpack.c.b16 %v2005, %v1999
    %v2276 = vpack.c.b16 %v2006, %v2000
    %v2277 = vpack.c.b16 %v2013, %v2007
    %v2278 = vpack.c.b16 %v2014, %v2008
    %v2279 = vpack.c.b16 %v2015, %v2009
    %v2280 = vpack.c.b16 %v2016, %v2010
    %v2281 = vpack.c.b16 %v2017, %v2011
    %v2282 = vpack.c.b16 %v2018, %v2012
    %v2283 = vpack.c.b16 %v2025, %v2019
    %v2284 = vpack.c.b16 %v2026, %v2020
    %v2285 = vpack.c.b16 %v2027, %v2021
    %v2286 = vpack.c.b16 %v2028, %v2022
    %v2287 = vpack.c.b16 %v2029, %v2023
    %v2288 = vpack.c.b16 %v2030, %v2024
    %v2289 = vpack.c.b16 %v2037, %v2031
    %v2290 = vpack.c.b16 %v2038, %v2032
    %v2291 = vpack.c.b16 %v2039, %v2033
    %v2292 = vpack.c.b16 %v2040, %v2034
    %v2293 = vpack.c.b16 %v2041, %v2035
    %v2294 = vpack.c.b16 %v2042, %v2036
    %v2295 = vpack.c.b16 %v2049, %v2043
    %v2296 = vpack.c.b16 %v2050, %v2044
    %v2297 = vpack.c.b16 %v2051, %v2045
    %v2298 = vpack.c.b16 %v2052, %v2046
    %v2299 = vpack.c.b16 %v2053, %v2047
    %v2300 = vpack.c.b16 %v2054, %v2048
    %v2301 = vpack.c.b16 %v2061, %v2055
    %v2302 = vpack.c.b16 %v2062, %v2056
    %v2303 = vpack.c.b16 %v2063, %v2057
    %v2304 = vpack.c.b16 %v2064, %v2058
    %v2305 = vpack.c.b16 %v2065, %v2059
    %v2306 = vpack.c.b16 %v2066, %v2060
    %v2307 = vpack.c.b16 %v2073, %v2067
    %v2308 = vpack.c.b16 %v2074, %v2068
    %v2309 = vpack.c.b16 %v2075, %v2069
    %v2310 = vpack.c.b16 %v2076, %v2070
    %v2311 = vpack.c.b16 %v2077, %v2071
    %v2312 = vpack.c.b16 %v2078, %v2072
    %v2313 = vpack.c.b16 %v2085, %v2079
    %v2314 = vpack.c.b16 %v2086, %v2080
    %v2315 = vpack.c.b16 %v2087, %v2081
    %v2316 = vpack.c.b16 %v2088, %v2082
    %v2317 = vpack.c.b16 %v2089, %v2083
    %v2318 = vpack.c.b16 %v2090, %v2084
    %v2319 = vpack.c.b16 %v2097, %v2091
    %v2320 = vpack.c.b16 %v2098, %v2092
    %v2321 = vpack.c.b16 %v2099, %v2093
    %v2322 = vpack.c.b16 %v2100, %v2094
    %v2323 = vpack.c.b16 %v2101, %v2095
    %v2324 = vpack.c.b16 %v2102, %v2096
    %v2325 = vpack.c.b16 %v2109, %v2103
    %v2326 = vpack.c.b16 %v2110, %v2104
    %v2327 = vpack.c.b16 %v2111, %v2105
    %v2328 = vpack.c.b16 %v2112, %v2106
    %v2329 = vpack.c.b16 %v2113, %v2107
    %v2330 = vpack.c.b16 %v2114, %v2108
    %v2331 = vpack.c.b16 %v2121, %v2115
    %v2332 = vpack.c.b16 %v2122, %v2116
    %v2333 = vpack.c.b16 %v2123, %v2117
    %v2334 = vpack.c.b16 %v2124, %v2118
    %v2335 = vpack.c.b16 %v2125, %v2119
    %v2336 = vpack.c.b16 %v2126, %v2120
    %v2337 = vpack.c.b16 %v2133, %v2127
    %v2338 = vpack.c.b16 %v2134, %v2128
    %v2339 = vpack.c.b16 %v2135, %v2129
    %v2340 = vpack.c.b16 %v2136, %v2130
    %v2341 = vpack.c.b16 %v2137, %v2131
    %v2342 = vpack.c.b16 %v2138, %v2132
    %v2343 = vpack.c.b16 %v2145, %v2139
    %v2344 = vpack.c.b16 %v2146, %v2140
    %v2345 = vpack.c.b16 %v2147, %v2141
    %v2346 = vpack.c.b16 %v2148, %v2142
    %v2347 = vpack.c.b16 %v2149, %v2143
    %v2348 = vpack.c.b16 %v2150, %v2144
    %v2349 = vpack.c.b16 %v2157, %v2151
    %v2350 = vpack.c.b16 %v2158, %v2152
    %v2351 = vpack.c.b16 %v2159, %v2153
    %v2352 = vpack.c.b16 %v2160, %v2154
    %v2353 = vpack.c.b16 %v2161, %v2155
    %v2354 = vpack.c.b16 %v2162, %v2156
    %2547 = vmatpush.bf16.msra.mxu0 %v2205
    %2548 = vmatpush.bf16.msra.mxu0 %v2199
    %2549 = vmatpush.bf16.msra.mxu0 %v2193
    %2550 = vmatpush.bf16.msra.mxu0 %v2187
    %2551 = vmatpush.bf16.msra.mxu0 %v2181
    %2552 = vmatpush.bf16.msra.mxu0 %v2175
    %2553 = vmatpush.bf16.msra.mxu0 %v2169
    %2554 = vmatpush.bf16.msra.mxu0 %v2163
    %2555 = vmatmul.bf16.gmra.mxu0 %v1387
    %v2556 = vpop.f32.mrf.mxu0
    %v2557 = vadd.f32 0.0, %v2556
    %v2558 = vpop.f32.mrf.mxu0
    %v2559 = vadd.f32 0.0, %v2558
    %2560 = vmatmul.bf16.gmra.mxu0 %v1391
    %v2561 = vpop.f32.mrf.mxu0
    %v2562 = vadd.f32 0.0, %v2561
    %v2563 = vpop.f32.mrf.mxu0
    %v2564 = vadd.f32 0.0, %v2563
    %2565 = vdwg.mxu0
    %2566 = vmatpush.bf16.msra.mxu0 %v2253
    %2567 = vmatpush.bf16.msra.mxu0 %v2247
    %2568 = vmatpush.bf16.msra.mxu0 %v2241
    %2569 = vmatpush.bf16.msra.mxu0 %v2235
    %2570 = vmatpush.bf16.msra.mxu0 %v2229
    %2571 = vmatpush.bf16.msra.mxu0 %v2223
    %2572 = vmatpush.bf16.msra.mxu0 %v2217
    %2573 = vmatpush.bf16.msra.mxu0 %v2211
    %2574 = vmatmul.bf16.gmra.mxu0 %v1388
    %v2575 = vpop.f32.mrf.mxu0
    %v2576 = vadd.f32 %v2557, %v2575
    %v2577 = vpop.f32.mrf.mxu0
    %v2578 = vadd.f32 %v2559, %v2577
    %2579 = vmatmul.bf16.gmra.mxu0 %v1392
    %v2580 = vpop.f32.mrf.mxu0
    %v2581 = vadd.f32 %v2562, %v2580
    %v2582 = vpop.f32.mrf.mxu0
    %v2583 = vadd.f32 %v2564, %v2582
    %2584 = vdwg.mxu0
    %2585 = vmatpush.bf16.msra.mxu0 %v2301
    %2586 = vmatpush.bf16.msra.mxu0 %v2295
    %2587 = vmatpush.bf16.msra.mxu0 %v2289
    %2588 = vmatpush.bf16.msra.mxu0 %v2283
    %2589 = vmatpush.bf16.msra.mxu0 %v2277
    %2590 = vmatpush.bf16.msra.mxu0 %v2271
    %2591 = vmatpush.bf16.msra.mxu0 %v2265
    %2592 = vmatpush.bf16.msra.mxu0 %v2259
    %2593 = vmatmul.bf16.gmra.mxu0 %v1389
    %v2594 = vpop.f32.mrf.mxu0
    %v2595 = vadd.f32 %v2576, %v2594
    %v2596 = vpop.f32.mrf.mxu0
    %v2597 = vadd.f32 %v2578, %v2596
    %2598 = vmatmul.bf16.gmra.mxu0 %v1393
    %v2599 = vpop.f32.mrf.mxu0
    %v2600 = vadd.f32 %v2581, %v2599
    %v2601 = vpop.f32.mrf.mxu0
    %v2602 = vadd.f32 %v2583, %v2601
    %2603 = vdwg.mxu0
    %2604 = vmatpush.bf16.msra.mxu0 %v2349
    %2605 = vmatpush.bf16.msra.mxu0 %v2343
    %2606 = vmatpush.bf16.msra.mxu0 %v2337
    %2607 = vmatpush.bf16.msra.mxu0 %v2331
    %2608 = vmatpush.bf16.msra.mxu0 %v2325
    %2609 = vmatpush.bf16.msra.mxu0 %v2319
    %2610 = vmatpush.bf16.msra.mxu0 %v2313
    %2611 = vmatpush.bf16.msra.mxu0 %v2307
    %2612 = vmatmul.bf16.gmra.mxu0 %v1390
    %v2613 = vpop.f32.mrf.mxu0
    %v2614 = vadd.f32 %v2595, %v2613
    %v2615 = vpop.f32.mrf.mxu0
    %v2616 = vadd.f32 %v2597, %v2615
    %2617 = vmatmul.bf16.gmra.mxu0 %v1394
    %v2618 = vpop.f32.mrf.mxu0
    %v2619 = vadd.f32 %v2600, %v2618
    %v2620 = vpop.f32.mrf.mxu0
    %v2621 = vadd.f32 %v2602, %v2620
    %2622 = vdwg.mxu0
    %2623 = vmatpush.bf16.msra.mxu0 %v2206
    %2624 = vmatpush.bf16.msra.mxu0 %v2200
    %2625 = vmatpush.bf16.msra.mxu0 %v2194
    %2626 = vmatpush.bf16.msra.mxu0 %v2188
    %2627 = vmatpush.bf16.msra.mxu0 %v2182
    %2628 = vmatpush.bf16.msra.mxu0 %v2176
    %2629 = vmatpush.bf16.msra.mxu0 %v2170
    %2630 = vmatpush.bf16.msra.mxu0 %v2164
    %2631 = vmatmul.bf16.gmra.mxu0 %v1387
    %v2632 = vpop.f32.mrf.mxu0
    %v2633 = vadd.f32 0.0, %v2632
    %v2634 = vpop.f32.mrf.mxu0
    %v2635 = vadd.f32 0.0, %v2634
    %2636 = vmatmul.bf16.gmra.mxu0 %v1391
    %v2637 = vpop.f32.mrf.mxu0
    %v2638 = vadd.f32 0.0, %v2637
    %v2639 = vpop.f32.mrf.mxu0
    %v2640 = vadd.f32 0.0, %v2639
    %2641 = vdwg.mxu0
    %2642 = vmatpush.bf16.msra.mxu0 %v2254
    %2643 = vmatpush.bf16.msra.mxu0 %v2248
    %2644 = vmatpush.bf16.msra.mxu0 %v2242
    %2645 = vmatpush.bf16.msra.mxu0 %v2236
    %2646 = vmatpush.bf16.msra.mxu0 %v2230
    %2647 = vmatpush.bf16.msra.mxu0 %v2224
    %2648 = vmatpush.bf16.msra.mxu0 %v2218
    %2649 = vmatpush.bf16.msra.mxu0 %v2212
    %2650 = vmatmul.bf16.gmra.mxu0 %v1388
    %v2651 = vpop.f32.mrf.mxu0
    %v2652 = vadd.f32 %v2633, %v2651
    %v2653 = vpop.f32.mrf.mxu0
    %v2654 = vadd.f32 %v2635, %v2653
    %2655 = vmatmul.bf16.gmra.mxu0 %v1392
    %v2656 = vpop.f32.mrf.mxu0
    %v2657 = vadd.f32 %v2638, %v2656
    %v2658 = vpop.f32.mrf.mxu0
    %v2659 = vadd.f32 %v2640, %v2658
    %2660 = vdwg.mxu0
    %2661 = vmatpush.bf16.msra.mxu0 %v2302
    %2662 = vmatpush.bf16.msra.mxu0 %v2296
    %2663 = vmatpush.bf16.msra.mxu0 %v2290
    %2664 = vmatpush.bf16.msra.mxu0 %v2284
    %2665 = vmatpush.bf16.msra.mxu0 %v2278
    %2666 = vmatpush.bf16.msra.mxu0 %v2272
    %2667 = vmatpush.bf16.msra.mxu0 %v2266
    %2668 = vmatpush.bf16.msra.mxu0 %v2260
    %2669 = vmatmul.bf16.gmra.mxu0 %v1389
    %v2670 = vpop.f32.mrf.mxu0
    %v2671 = vadd.f32 %v2652, %v2670
    %v2672 = vpop.f32.mrf.mxu0
    %v2673 = vadd.f32 %v2654, %v2672
    %2674 = vmatmul.bf16.gmra.mxu0 %v1393
    %v2675 = vpop.f32.mrf.mxu0
    %v2676 = vadd.f32 %v2657, %v2675
    %v2677 = vpop.f32.mrf.mxu0
    %v2678 = vadd.f32 %v2659, %v2677
    %2679 = vdwg.mxu0
    %2680 = vmatpush.bf16.msra.mxu0 %v2350
    %2681 = vmatpush.bf16.msra.mxu0 %v2344
    %2682 = vmatpush.bf16.msra.mxu0 %v2338
    %2683 = vmatpush.bf16.msra.mxu0 %v2332
    %2684 = vmatpush.bf16.msra.mxu0 %v2326
    %2685 = vmatpush.bf16.msra.mxu0 %v2320
    %2686 = vmatpush.bf16.msra.mxu0 %v2314
    %2687 = vmatpush.bf16.msra.mxu0 %v2308
    %2688 = vmatmul.bf16.gmra.mxu0 %v1390
    %v2689 = vpop.f32.mrf.mxu0
    %v2690 = vadd.f32 %v2671, %v2689
    %v2691 = vpop.f32.mrf.mxu0
    %v2692 = vadd.f32 %v2673, %v2691
    %2693 = vmatmul.bf16.gmra.mxu0 %v1394
    %v2694 = vpop.f32.mrf.mxu0
    %v2695 = vadd.f32 %v2676, %v2694
    %v2696 = vpop.f32.mrf.mxu0
    %v2697 = vadd.f32 %v2678, %v2696
    %2698 = vdwg.mxu0
    %2699 = vmatpush.bf16.msra.mxu0 %v2207
    %2700 = vmatpush.bf16.msra.mxu0 %v2201
    %2701 = vmatpush.bf16.msra.mxu0 %v2195
    %2702 = vmatpush.bf16.msra.mxu0 %v2189
    %2703 = vmatpush.bf16.msra.mxu0 %v2183
    %2704 = vmatpush.bf16.msra.mxu0 %v2177
    %2705 = vmatpush.bf16.msra.mxu0 %v2171
    %2706 = vmatpush.bf16.msra.mxu0 %v2165
    %2707 = vmatmul.bf16.gmra.mxu0 %v1387
    %v2708 = vpop.f32.mrf.mxu0
    %v2709 = vadd.f32 0.0, %v2708
    %v2710 = vpop.f32.mrf.mxu0
    %v2711 = vadd.f32 0.0, %v2710
    %2712 = vmatmul.bf16.gmra.mxu0 %v1391
    %v2713 = vpop.f32.mrf.mxu0
    %v2714 = vadd.f32 0.0, %v2713
    %v2715 = vpop.f32.mrf.mxu0
    %v2716 = vadd.f32 0.0, %v2715
    %2717 = vdwg.mxu0
    %2718 = vmatpush.bf16.msra.mxu0 %v2255
    %2719 = vmatpush.bf16.msra.mxu0 %v2249
    %2720 = vmatpush.bf16.msra.mxu0 %v2243
    %2721 = vmatpush.bf16.msra.mxu0 %v2237
    %2722 = vmatpush.bf16.msra.mxu0 %v2231
    %2723 = vmatpush.bf16.msra.mxu0 %v2225
    %2724 = vmatpush.bf16.msra.mxu0 %v2219
    %2725 = vmatpush.bf16.msra.mxu0 %v2213
    %2726 = vmatmul.bf16.gmra.mxu0 %v1388
    %v2727 = vpop.f32.mrf.mxu0
    %v2728 = vadd.f32 %v2709, %v2727
    %v2729 = vpop.f32.mrf.mxu0
    %v2730 = vadd.f32 %v2711, %v2729
    %2731 = vmatmul.bf16.gmra.mxu0 %v1392
    %v2732 = vpop.f32.mrf.mxu0
    %v2733 = vadd.f32 %v2714, %v2732
    %v2734 = vpop.f32.mrf.mxu0
    %v2735 = vadd.f32 %v2716, %v2734
    %2736 = vdwg.mxu0
    %2737 = vmatpush.bf16.msra.mxu0 %v2303
    %2738 = vmatpush.bf16.msra.mxu0 %v2297
    %2739 = vmatpush.bf16.msra.mxu0 %v2291
    %2740 = vmatpush.bf16.msra.mxu0 %v2285
    %2741 = vmatpush.bf16.msra.mxu0 %v2279
    %2742 = vmatpush.bf16.msra.mxu0 %v2273
    %2743 = vmatpush.bf16.msra.mxu0 %v2267
    %2744 = vmatpush.bf16.msra.mxu0 %v2261
    %2745 = vmatmul.bf16.gmra.mxu0 %v1389
    %v2746 = vpop.f32.mrf.mxu0
    %v2747 = vadd.f32 %v2728, %v2746
    %v2748 = vpop.f32.mrf.mxu0
    %v2749 = vadd.f32 %v2730, %v2748
    %2750 = vmatmul.bf16.gmra.mxu0 %v1393
    %v2751 = vpop.f32.mrf.mxu0
    %v2752 = vadd.f32 %v2733, %v2751
    %v2753 = vpop.f32.mrf.mxu0
    %v2754 = vadd.f32 %v2735, %v2753
    %2755 = vdwg.mxu0
    %2756 = vmatpush.bf16.msra.mxu0 %v2351
    %2757 = vmatpush.bf16.msra.mxu0 %v2345
    %2758 = vmatpush.bf16.msra.mxu0 %v2339
    %2759 = vmatpush.bf16.msra.mxu0 %v2333
    %2760 = vmatpush.bf16.msra.mxu0 %v2327
    %2761 = vmatpush.bf16.msra.mxu0 %v2321
    %2762 = vmatpush.bf16.msra.mxu0 %v2315
    %2763 = vmatpush.bf16.msra.mxu0 %v2309
    %2764 = vmatmul.bf16.gmra.mxu0 %v1390
    %v2765 = vpop.f32.mrf.mxu0
    %v2766 = vadd.f32 %v2747, %v2765
    %v2767 = vpop.f32.mrf.mxu0
    %v2768 = vadd.f32 %v2749, %v2767
    %2769 = vmatmul.bf16.gmra.mxu0 %v1394
    %v2770 = vpop.f32.mrf.mxu0
    %v2771 = vadd.f32 %v2752, %v2770
    %v2772 = vpop.f32.mrf.mxu0
    %v2773 = vadd.f32 %v2754, %v2772
    %2774 = vdwg.mxu0
    %2775 = vmatpush.bf16.msra.mxu0 %v2208
    %2776 = vmatpush.bf16.msra.mxu0 %v2202
    %2777 = vmatpush.bf16.msra.mxu0 %v2196
    %2778 = vmatpush.bf16.msra.mxu0 %v2190
    %2779 = vmatpush.bf16.msra.mxu0 %v2184
    %2780 = vmatpush.bf16.msra.mxu0 %v2178
    %2781 = vmatpush.bf16.msra.mxu0 %v2172
    %2782 = vmatpush.bf16.msra.mxu0 %v2166
    %2783 = vmatmul.bf16.gmra.mxu0 %v1387
    %v2784 = vpop.f32.mrf.mxu0
    %v2785 = vadd.f32 0.0, %v2784
    %v2786 = vpop.f32.mrf.mxu0
    %v2787 = vadd.f32 0.0, %v2786
    %2788 = vmatmul.bf16.gmra.mxu0 %v1391
    %v2789 = vpop.f32.mrf.mxu0
    %v2790 = vadd.f32 0.0, %v2789
    %v2791 = vpop.f32.mrf.mxu0
    %v2792 = vadd.f32 0.0, %v2791
    %2793 = vdwg.mxu0
    %2794 = vmatpush.bf16.msra.mxu0 %v2256
    %2795 = vmatpush.bf16.msra.mxu0 %v2250
    %2796 = vmatpush.bf16.msra.mxu0 %v2244
    %2797 = vmatpush.bf16.msra.mxu0 %v2238
    %2798 = vmatpush.bf16.msra.mxu0 %v2232
    %2799 = vmatpush.bf16.msra.mxu0 %v2226
    %2800 = vmatpush.bf16.msra.mxu0 %v2220
    %2801 = vmatpush.bf16.msra.mxu0 %v2214
    %2802 = vmatmul.bf16.gmra.mxu0 %v1388
    %v2803 = vpop.f32.mrf.mxu0
    %v2804 = vadd.f32 %v2785, %v2803
    %v2805 = vpop.f32.mrf.mxu0
    %v2806 = vadd.f32 %v2787, %v2805
    %2807 = vmatmul.bf16.gmra.mxu0 %v1392
    %v2808 = vpop.f32.mrf.mxu0
    %v2809 = vadd.f32 %v2790, %v2808
    %v2810 = vpop.f32.mrf.mxu0
    %v2811 = vadd.f32 %v2792, %v2810
    %2812 = vdwg.mxu0
    %2813 = vmatpush.bf16.msra.mxu0 %v2304
    %2814 = vmatpush.bf16.msra.mxu0 %v2298
    %2815 = vmatpush.bf16.msra.mxu0 %v2292
    %2816 = vmatpush.bf16.msra.mxu0 %v2286
    %2817 = vmatpush.bf16.msra.mxu0 %v2280
    %2818 = vmatpush.bf16.msra.mxu0 %v2274
    %2819 = vmatpush.bf16.msra.mxu0 %v2268
    %2820 = vmatpush.bf16.msra.mxu0 %v2262
    %2821 = vmatmul.bf16.gmra.mxu0 %v1389
    %v2822 = vpop.f32.mrf.mxu0
    %v2823 = vadd.f32 %v2804, %v2822
    %v2824 = vpop.f32.mrf.mxu0
    %v2825 = vadd.f32 %v2806, %v2824
    %2826 = vmatmul.bf16.gmra.mxu0 %v1393
    %v2827 = vpop.f32.mrf.mxu0
    %v2828 = vadd.f32 %v2809, %v2827
    %v2829 = vpop.f32.mrf.mxu0
    %v2830 = vadd.f32 %v2811, %v2829
    %2831 = vdwg.mxu0
    %2832 = vmatpush.bf16.msra.mxu0 %v2352
    %2833 = vmatpush.bf16.msra.mxu0 %v2346
    %2834 = vmatpush.bf16.msra.mxu0 %v2340
    %2835 = vmatpush.bf16.msra.mxu0 %v2334
    %2836 = vmatpush.bf16.msra.mxu0 %v2328
    %2837 = vmatpush.bf16.msra.mxu0 %v2322
    %2838 = vmatpush.bf16.msra.mxu0 %v2316
    %2839 = vmatpush.bf16.msra.mxu0 %v2310
    %2840 = vmatmul.bf16.gmra.mxu0 %v1390
    %v2841 = vpop.f32.mrf.mxu0
    %v2842 = vadd.f32 %v2823, %v2841
    %v2843 = vpop.f32.mrf.mxu0
    %v2844 = vadd.f32 %v2825, %v2843
    %2845 = vmatmul.bf16.gmra.mxu0 %v1394
    %v2846 = vpop.f32.mrf.mxu0
    %v2847 = vadd.f32 %v2828, %v2846
    %v2848 = vpop.f32.mrf.mxu0
    %v2849 = vadd.f32 %v2830, %v2848
    %2850 = vdwg.mxu0
    %2851 = vmatpush.bf16.msra.mxu0 %v2209
    %2852 = vmatpush.bf16.msra.mxu0 %v2203
    %2853 = vmatpush.bf16.msra.mxu0 %v2197
    %2854 = vmatpush.bf16.msra.mxu0 %v2191
    %2855 = vmatpush.bf16.msra.mxu0 %v2185
    %2856 = vmatpush.bf16.msra.mxu0 %v2179
    %2857 = vmatpush.bf16.msra.mxu0 %v2173
    %2858 = vmatpush.bf16.msra.mxu0 %v2167
    %2859 = vmatmul.bf16.gmra.mxu0 %v1387
    %v2860 = vpop.f32.mrf.mxu0
    %v2861 = vadd.f32 0.0, %v2860
    %v2862 = vpop.f32.mrf.mxu0
    %v2863 = vadd.f32 0.0, %v2862
    %2864 = vmatmul.bf16.gmra.mxu0 %v1391
    %v2865 = vpop.f32.mrf.mxu0
    %v2866 = vadd.f32 0.0, %v2865
    %v2867 = vpop.f32.mrf.mxu0
    %v2868 = vadd.f32 0.0, %v2867
    %2869 = vdwg.mxu0
    %2870 = vmatpush.bf16.msra.mxu0 %v2257
    %2871 = vmatpush.bf16.msra.mxu0 %v2251
    %2872 = vmatpush.bf16.msra.mxu0 %v2245
    %2873 = vmatpush.bf16.msra.mxu0 %v2239
    %2874 = vmatpush.bf16.msra.mxu0 %v2233
    %2875 = vmatpush.bf16.msra.mxu0 %v2227
    %2876 = vmatpush.bf16.msra.mxu0 %v2221
    %2877 = vmatpush.bf16.msra.mxu0 %v2215
    %2878 = vmatmul.bf16.gmra.mxu0 %v1388
    %v2879 = vpop.f32.mrf.mxu0
    %v2880 = vadd.f32 %v2861, %v2879
    %v2881 = vpop.f32.mrf.mxu0
    %v2882 = vadd.f32 %v2863, %v2881
    %2883 = vmatmul.bf16.gmra.mxu0 %v1392
    %v2884 = vpop.f32.mrf.mxu0
    %v2885 = vadd.f32 %v2866, %v2884
    %v2886 = vpop.f32.mrf.mxu0
    %v2887 = vadd.f32 %v2868, %v2886
    %2888 = vdwg.mxu0
    %2889 = vmatpush.bf16.msra.mxu0 %v2305
    %2890 = vmatpush.bf16.msra.mxu0 %v2299
    %2891 = vmatpush.bf16.msra.mxu0 %v2293
    %2892 = vmatpush.bf16.msra.mxu0 %v2287
    %2893 = vmatpush.bf16.msra.mxu0 %v2281
    %2894 = vmatpush.bf16.msra.mxu0 %v2275
    %2895 = vmatpush.bf16.msra.mxu0 %v2269
    %2896 = vmatpush.bf16.msra.mxu0 %v2263
    %2897 = vmatmul.bf16.gmra.mxu0 %v1389
    %v2898 = vpop.f32.mrf.mxu0
    %v2899 = vadd.f32 %v2880, %v2898
    %v2900 = vpop.f32.mrf.mxu0
    %v2901 = vadd.f32 %v2882, %v2900
    %2902 = vmatmul.bf16.gmra.mxu0 %v1393
    %v2903 = vpop.f32.mrf.mxu0
    %v2904 = vadd.f32 %v2885, %v2903
    %v2905 = vpop.f32.mrf.mxu0
    %v2906 = vadd.f32 %v2887, %v2905
    %2907 = vdwg.mxu0
    %2908 = vmatpush.bf16.msra.mxu0 %v2353
    %2909 = vmatpush.bf16.msra.mxu0 %v2347
    %2910 = vmatpush.bf16.msra.mxu0 %v2341
    %2911 = vmatpush.bf16.msra.mxu0 %v2335
    %2912 = vmatpush.bf16.msra.mxu0 %v2329
    %2913 = vmatpush.bf16.msra.mxu0 %v2323
    %2914 = vmatpush.bf16.msra.mxu0 %v2317
    %2915 = vmatpush.bf16.msra.mxu0 %v2311
    %2916 = vmatmul.bf16.gmra.mxu0 %v1390
    %v2917 = vpop.f32.mrf.mxu0
    %v2918 = vadd.f32 %v2899, %v2917
    %v2919 = vpop.f32.mrf.mxu0
    %v2920 = vadd.f32 %v2901, %v2919
    %2921 = vmatmul.bf16.gmra.mxu0 %v1394
    %v2922 = vpop.f32.mrf.mxu0
    %v2923 = vadd.f32 %v2904, %v2922
    %v2924 = vpop.f32.mrf.mxu0
    %v2925 = vadd.f32 %v2906, %v2924
    %2926 = vdwg.mxu0
    %2927 = vmatpush.bf16.msra.mxu0 %v2210
    %2928 = vmatpush.bf16.msra.mxu0 %v2204
    %2929 = vmatpush.bf16.msra.mxu0 %v2198
    %2930 = vmatpush.bf16.msra.mxu0 %v2192
    %2931 = vmatpush.bf16.msra.mxu0 %v2186
    %2932 = vmatpush.bf16.msra.mxu0 %v2180
    %2933 = vmatpush.bf16.msra.mxu0 %v2174
    %2934 = vmatpush.bf16.msra.mxu0 %v2168
    %2935 = vmatmul.bf16.gmra.mxu0 %v1387
    %v2936 = vpop.f32.mrf.mxu0
    %v2937 = vadd.f32 0.0, %v2936
    %v2938 = vpop.f32.mrf.mxu0
    %v2939 = vadd.f32 0.0, %v2938
    %2940 = vmatmul.bf16.gmra.mxu0 %v1391
    %v2941 = vpop.f32.mrf.mxu0
    %v2942 = vadd.f32 0.0, %v2941
    %v2943 = vpop.f32.mrf.mxu0
    %v2944 = vadd.f32 0.0, %v2943
    %2945 = vdwg.mxu0
    %2946 = vmatpush.bf16.msra.mxu0 %v2258
    %2947 = vmatpush.bf16.msra.mxu0 %v2252
    %2948 = vmatpush.bf16.msra.mxu0 %v2246
    %2949 = vmatpush.bf16.msra.mxu0 %v2240
    %2950 = vmatpush.bf16.msra.mxu0 %v2234
    %2951 = vmatpush.bf16.msra.mxu0 %v2228
    %2952 = vmatpush.bf16.msra.mxu0 %v2222
    %2953 = vmatpush.bf16.msra.mxu0 %v2216
    %2954 = vmatmul.bf16.gmra.mxu0 %v1388
    %v2955 = vpop.f32.mrf.mxu0
    %v2956 = vadd.f32 %v2937, %v2955
    %v2957 = vpop.f32.mrf.mxu0
    %v2958 = vadd.f32 %v2939, %v2957
    %2959 = vmatmul.bf16.gmra.mxu0 %v1392
    %v2960 = vpop.f32.mrf.mxu0
    %v2961 = vadd.f32 %v2942, %v2960
    %v2962 = vpop.f32.mrf.mxu0
    %v2963 = vadd.f32 %v2944, %v2962
    %2964 = vdwg.mxu0
    %2965 = vmatpush.bf16.msra.mxu0 %v2306
    %2966 = vmatpush.bf16.msra.mxu0 %v2300
    %2967 = vmatpush.bf16.msra.mxu0 %v2294
    %2968 = vmatpush.bf16.msra.mxu0 %v2288
    %2969 = vmatpush.bf16.msra.mxu0 %v2282
    %2970 = vmatpush.bf16.msra.mxu0 %v2276
    %2971 = vmatpush.bf16.msra.mxu0 %v2270
    %2972 = vmatpush.bf16.msra.mxu0 %v2264
    %2973 = vmatmul.bf16.gmra.mxu0 %v1389
    %v2974 = vpop.f32.mrf.mxu0
    %v2975 = vadd.f32 %v2956, %v2974
    %v2976 = vpop.f32.mrf.mxu0
    %v2977 = vadd.f32 %v2958, %v2976
    %2978 = vmatmul.bf16.gmra.mxu0 %v1393
    %v2979 = vpop.f32.mrf.mxu0
    %v2980 = vadd.f32 %v2961, %v2979
    %v2981 = vpop.f32.mrf.mxu0
    %v2982 = vadd.f32 %v2963, %v2981
    %2983 = vdwg.mxu0
    %2984 = vmatpush.bf16.msra.mxu0 %v2354
    %2985 = vmatpush.bf16.msra.mxu0 %v2348
    %2986 = vmatpush.bf16.msra.mxu0 %v2342
    %2987 = vmatpush.bf16.msra.mxu0 %v2336
    %2988 = vmatpush.bf16.msra.mxu0 %v2330
    %2989 = vmatpush.bf16.msra.mxu0 %v2324
    %2990 = vmatpush.bf16.msra.mxu0 %v2318
    %2991 = vmatpush.bf16.msra.mxu0 %v2312
    %2992 = vmatmul.bf16.gmra.mxu0 %v1390
    %v2993 = vpop.f32.mrf.mxu0
    %v2994 = vadd.f32 %v2975, %v2993
    %v2995 = vpop.f32.mrf.mxu0
    %v2996 = vadd.f32 %v2977, %v2995
    %2997 = vmatmul.bf16.gmra.mxu0 %v1394
    %v2998 = vpop.f32.mrf.mxu0
    %v2999 = vadd.f32 %v2980, %v2998
    %v3000 = vpop.f32.mrf.mxu0
    %v3001 = vadd.f32 %v2982, %v3000
    %3002 = vdwg.mxu0
    %v3003 = vadd.f32 %v2614, %v2616
    %v3004 = vadd.f32 %v3003, %v2619
    %v3005 = vadd.f32 %v3004, %v2621
    %v3006 = vrot.slane %v3005, 4
    %v3007 = vadd.f32 %v3005, %v3006
    %v3008 = vrot.slane %v3007, 2
    %v3009 = vadd.f32 %v3007, %v3008
    %v3010 = vrot.slane %v3009, 1
    %v3011 = vadd.f32 %v3009, %v3010
    %v3012 = vadd.f32 %v2690, %v2692
    %v3013 = vadd.f32 %v3012, %v2695
    %v3014 = vadd.f32 %v3013, %v2697
    %v3015 = vrot.slane %v3014, 4
    %v3016 = vadd.f32 %v3014, %v3015
    %v3017 = vrot.slane %v3016, 2
    %v3018 = vadd.f32 %v3016, %v3017
    %v3019 = vrot.slane %v3018, 1
    %v3020 = vadd.f32 %v3018, %v3019
    %v3021 = vadd.f32 %v2766, %v2768
    %v3022 = vadd.f32 %v3021, %v2771
    %v3023 = vadd.f32 %v3022, %v2773
    %v3024 = vrot.slane %v3023, 4
    %v3025 = vadd.f32 %v3023, %v3024
    %v3026 = vrot.slane %v3025, 2
    %v3027 = vadd.f32 %v3025, %v3026
    %v3028 = vrot.slane %v3027, 1
    %v3029 = vadd.f32 %v3027, %v3028
    %v3030 = vadd.f32 %v2842, %v2844
    %v3031 = vadd.f32 %v3030, %v2847
    %v3032 = vadd.f32 %v3031, %v2849
    %v3033 = vrot.slane %v3032, 4
    %v3034 = vadd.f32 %v3032, %v3033
    %v3035 = vrot.slane %v3034, 2
    %v3036 = vadd.f32 %v3034, %v3035
    %v3037 = vrot.slane %v3036, 1
    %v3038 = vadd.f32 %v3036, %v3037
    %v3039 = vadd.f32 %v2918, %v2920
    %v3040 = vadd.f32 %v3039, %v2923
    %v3041 = vadd.f32 %v3040, %v2925
    %v3042 = vrot.slane %v3041, 4
    %v3043 = vadd.f32 %v3041, %v3042
    %v3044 = vrot.slane %v3043, 2
    %v3045 = vadd.f32 %v3043, %v3044
    %v3046 = vrot.slane %v3045, 1
    %v3047 = vadd.f32 %v3045, %v3046
    %v3048 = vadd.f32 %v2994, %v2996
    %v3049 = vadd.f32 %v3048, %v2999
    %v3050 = vadd.f32 %v3049, %v3001
    %v3051 = vrot.slane %v3050, 4
    %v3052 = vadd.f32 %v3050, %v3051
    %v3053 = vrot.slane %v3052, 2
    %v3054 = vadd.f32 %v3052, %v3053
    %v3055 = vrot.slane %v3054, 1
    %v3056 = vadd.f32 %v3054, %v3055
    %v3057 = vmul.f32 %v2614, %v2614
    %v3058 = vmul.f32 %v2690, %v2690
    %v3059 = vmul.f32 %v2766, %v2766
    %v3060 = vmul.f32 %v2842, %v2842
    %v3061 = vmul.f32 %v2918, %v2918
    %v3062 = vmul.f32 %v2994, %v2994
    %v3063 = vmul.f32 %v2616, %v2616
    %v3064 = vmul.f32 %v2692, %v2692
    %v3065 = vmul.f32 %v2768, %v2768
    %v3066 = vmul.f32 %v2844, %v2844
    %v3067 = vmul.f32 %v2920, %v2920
    %v3068 = vmul.f32 %v2996, %v2996
    %v3069 = vmul.f32 %v2619, %v2619
    %v3070 = vmul.f32 %v2695, %v2695
    %v3071 = vmul.f32 %v2771, %v2771
    %v3072 = vmul.f32 %v2847, %v2847
    %v3073 = vmul.f32 %v2923, %v2923
    %v3074 = vmul.f32 %v2999, %v2999
    %v3075 = vmul.f32 %v2621, %v2621
    %v3076 = vmul.f32 %v2697, %v2697
    %v3077 = vmul.f32 %v2773, %v2773
    %v3078 = vmul.f32 %v2849, %v2849
    %v3079 = vmul.f32 %v2925, %v2925
    %v3080 = vmul.f32 %v3001, %v3001
    %v3081 = vadd.f32 %v3057, %v3063
    %v3082 = vadd.f32 %v3081, %v3069
    %v3083 = vadd.f32 %v3082, %v3075
    %v3084 = vrot.slane %v3083, 4
    %v3085 = vadd.f32 %v3083, %v3084
    %v3086 = vrot.slane %v3085, 2
    %v3087 = vadd.f32 %v3085, %v3086
    %v3088 = vrot.slane %v3087, 1
    %v3089 = vadd.f32 %v3087, %v3088
    %v3090 = vadd.f32 %v3058, %v3064
    %v3091 = vadd.f32 %v3090, %v3070
    %v3092 = vadd.f32 %v3091, %v3076
    %v3093 = vrot.slane %v3092, 4
    %v3094 = vadd.f32 %v3092, %v3093
    %v3095 = vrot.slane %v3094, 2
    %v3096 = vadd.f32 %v3094, %v3095
    %v3097 = vrot.slane %v3096, 1
    %v3098 = vadd.f32 %v3096, %v3097
    %v3099 = vadd.f32 %v3059, %v3065
    %v3100 = vadd.f32 %v3099, %v3071
    %v3101 = vadd.f32 %v3100, %v3077
    %v3102 = vrot.slane %v3101, 4
    %v3103 = vadd.f32 %v3101, %v3102
    %v3104 = vrot.slane %v3103, 2
    %v3105 = vadd.f32 %v3103, %v3104
    %v3106 = vrot.slane %v3105, 1
    %v3107 = vadd.f32 %v3105, %v3106
    %v3108 = vadd.f32 %v3060, %v3066
    %v3109 = vadd.f32 %v3108, %v3072
    %v3110 = vadd.f32 %v3109, %v3078
    %v3111 = vrot.slane %v3110, 4
    %v3112 = vadd.f32 %v3110, %v3111
    %v3113 = vrot.slane %v3112, 2
    %v3114 = vadd.f32 %v3112, %v3113
    %v3115 = vrot.slane %v3114, 1
    %v3116 = vadd.f32 %v3114, %v3115
    %v3117 = vadd.f32 %v3061, %v3067
    %v3118 = vadd.f32 %v3117, %v3073
    %v3119 = vadd.f32 %v3118, %v3079
    %v3120 = vrot.slane %v3119, 4
    %v3121 = vadd.f32 %v3119, %v3120
    %v3122 = vrot.slane %v3121, 2
    %v3123 = vadd.f32 %v3121, %v3122
    %v3124 = vrot.slane %v3123, 1
    %v3125 = vadd.f32 %v3123, %v3124
    %v3126 = vadd.f32 %v3062, %v3068
    %v3127 = vadd.f32 %v3126, %v3074
    %v3128 = vadd.f32 %v3127, %v3080
    %v3129 = vrot.slane %v3128, 4
    %v3130 = vadd.f32 %v3128, %v3129
    %v3131 = vrot.slane %v3130, 2
    %v3132 = vadd.f32 %v3130, %v3131
    %v3133 = vrot.slane %v3132, 1
    %v3134 = vadd.f32 %v3132, %v3133
    %v3135 = vmul.f32 %v3011, 0.03125
    %v3136 = vmul.f32 %v3020, 0.03125
    %v3137 = vmul.f32 %v3029, 0.03125
    %v3138 = vmul.f32 %v3038, 0.03125
    %v3139 = vmul.f32 %v3047, 0.03125
    %v3140 = vmul.f32 %v3056, 0.03125
    %v3141 = vmul.f32 %v3089, 0.03125
    %v3142 = vmul.f32 %v3098, 0.03125
    %v3143 = vmul.f32 %v3107, 0.03125
    %v3144 = vmul.f32 %v3116, 0.03125
    %v3145 = vmul.f32 %v3125, 0.03125
    %v3146 = vmul.f32 %v3134, 0.03125
    %v3147 = vmul.f32 %v3135, %v3135
    %v3148 = vmul.f32 %v3136, %v3136
    %v3149 = vmul.f32 %v3137, %v3137
    %v3150 = vmul.f32 %v3138, %v3138
    %v3151 = vmul.f32 %v3139, %v3139
    %v3152 = vmul.f32 %v3140, %v3140
    %v3153 = vsub.f32 %v3141, %v3147
    %v3154 = vsub.f32 %v3142, %v3148
    %v3155 = vsub.f32 %v3143, %v3149
    %v3156 = vsub.f32 %v3144, %v3150
    %v3157 = vsub.f32 %v3145, %v3151
    %v3158 = vsub.f32 %v3146, %v3152
    %v3159 = vmax.f32 %v3153, 0.0
    %v3160 = vmax.f32 %v3154, 0.0
    %v3161 = vmax.f32 %v3155, 0.0
    %v3162 = vmax.f32 %v3156, 0.0
    %v3163 = vmax.f32 %v3157, 0.0
    %v3164 = vmax.f32 %v3158, 0.0
    %v3165 = vld [vmem:[%s8] sm:$0x3f]
    %v3166 = vadd.f32 %v3159, 1e-05
    %v3167 = vadd.f32 %v3160, 1e-05
    %v3168 = vadd.f32 %v3161, 1e-05
    %v3169 = vadd.f32 %v3162, 1e-05
    %v3170 = vadd.f32 %v3163, 1e-05
    %v3171 = vadd.f32 %v3164, 1e-05
    %v3172 = vrsqrt.pop %v3166
    %v3173 = vmul.f32 %v3172, %v3166
    %v3174 = vmul.f32 %v3173, %v3172
    %v3175 = vmul.f32 0.5, %v3174
    %v3176 = vsub.f32 1.5, %v3175
    %v3177 = vmul.f32 %v3172, %v3176
    %vm3178 = vweird.f32 %v3166
    %vm3179 = vweird.f32 %v3172
    %vm3180 = vmor %vm3178, %vm3179
    %v3181 = vsel %vm3180, %v3172, %v3177
    %v3182 = vrsqrt.pop %v3167
    %v3183 = vmul.f32 %v3182, %v3167
    %v3184 = vmul.f32 %v3183, %v3182
    %v3185 = vmul.f32 0.5, %v3184
    %v3186 = vsub.f32 1.5, %v3185
    %v3187 = vmul.f32 %v3182, %v3186
    %vm3188 = vweird.f32 %v3167
    %vm3189 = vweird.f32 %v3182
    %vm3190 = vmor %vm3188, %vm3189
    %v3191 = vsel %vm3190, %v3182, %v3187
    %v3192 = vrsqrt.pop %v3168
    %v3193 = vmul.f32 %v3192, %v3168
    %v3194 = vmul.f32 %v3193, %v3192
    %v3195 = vmul.f32 0.5, %v3194
    %v3196 = vsub.f32 1.5, %v3195
    %v3197 = vmul.f32 %v3192, %v3196
    %vm3198 = vweird.f32 %v3168
    %vm3199 = vweird.f32 %v3192
    %vm3200 = vmor %vm3198, %vm3199
    %v3201 = vsel %vm3200, %v3192, %v3197
    %v3202 = vrsqrt.pop %v3169
    %v3203 = vmul.f32 %v3202, %v3169
    %v3204 = vmul.f32 %v3203, %v3202
    %v3205 = vmul.f32 0.5, %v3204
    %v3206 = vsub.f32 1.5, %v3205
    %v3207 = vmul.f32 %v3202, %v3206
    %vm3208 = vweird.f32 %v3169
    %vm3209 = vweird.f32 %v3202
    %vm3210 = vmor %vm3208, %vm3209
    %v3211 = vsel %vm3210, %v3202, %v3207
    %v3212 = vrsqrt.pop %v3170
    %v3213 = vmul.f32 %v3212, %v3170
    %v3214 = vmul.f32 %v3213, %v3212
    %v3215 = vmul.f32 0.5, %v3214
    %v3216 = vsub.f32 1.5, %v3215
    %v3217 = vmul.f32 %v3212, %v3216
    %vm3218 = vweird.f32 %v3170
    %vm3219 = vweird.f32 %v3212
    %vm3220 = vmor %vm3218, %vm3219
    %v3221 = vsel %vm3220, %v3212, %v3217
    %v3222 = vrsqrt.pop %v3171
    %v3223 = vmul.f32 %v3222, %v3171
    %v3224 = vmul.f32 %v3223, %v3222
    %v3225 = vmul.f32 0.5, %v3224
    %v3226 = vsub.f32 1.5, %v3225
    %v3227 = vmul.f32 %v3222, %v3226
    %vm3228 = vweird.f32 %v3171
    %vm3229 = vweird.f32 %v3222
    %vm3230 = vmor %vm3228, %vm3229
    %v3231 = vsel %vm3230, %v3222, %v3227
    %v3238 = vrot.slane %v3191, 7
    %v3239 = vrot.slane %v3201, 6
    %v3240 = vrot.slane %v3211, 5
    %v3241 = vrot.slane %v3221, 4
    %v3242 = vrot.slane %v3231, 3
    %v3243 = vsel %vm346, %v3181, %v3238
    %v3244 = vsel %vm1164, %v3243, %v3239
    %vm3245 = vcmask 1043459
    %v3246 = vsel %vm3245, %v3240, %v3241
    %vm3247 = vcmask 1044483
    %v3248 = vsel %vm3247, %v3246, %v3242
    %vm3249 = vcmask 1042432
    %v3250 = vsel %vm3249, %v3244, %v3248
    %v3252 = vmul.f32 %v3165, %v3250
    %v3253 = vld [vmem:[#allocation16] sm:$0x3f]
    %v3255 = vperm.slane %v3252, 0
    %v3256 = vperm.slane %v3252, 1
    %v3257 = vperm.slane %v3252, 2
    %v3258 = vperm.slane %v3252, 3
    %v3259 = vperm.slane %v3252, 4
    %v3260 = vperm.slane %v3252, 5
    %v3267 = vmul.f32 %v3135, %v3255
    %v3268 = vmul.f32 %v3136, %v3256
    %v3269 = vmul.f32 %v3137, %v3257
    %v3270 = vmul.f32 %v3138, %v3258
    %v3271 = vmul.f32 %v3139, %v3259
    %v3272 = vmul.f32 %v3140, %v3260
    %v3279 = vrot.slane %v3268, 7
    %v3280 = vrot.slane %v3269, 6
    %v3281 = vrot.slane %v3270, 5
    %v3282 = vrot.slane %v3271, 4
    %v3283 = vrot.slane %v3272, 3
    %v3284 = vsel %vm346, %v3267, %v3279
    %v3285 = vsel %vm1164, %v3284, %v3280
    %v3286 = vsel %vm3245, %v3281, %v3282
    %v3287 = vsel %vm3247, %v3286, %v3283
    %v3288 = vsel %vm3249, %v3285, %v3287
    %v3290 = vsub.f32 %v3253, %v3288
    %v3291 = vmul.f32 %v2614, %v3255
    %v3292 = vmul.f32 %v2690, %v3256
    %v3293 = vmul.f32 %v2766, %v3257
    %v3294 = vmul.f32 %v2842, %v3258
    %v3295 = vmul.f32 %v2918, %v3259
    %v3296 = vmul.f32 %v2994, %v3260
    %v3297 = vmul.f32 %v2616, %v3255
    %v3298 = vmul.f32 %v2692, %v3256
    %v3299 = vmul.f32 %v2768, %v3257
    %v3300 = vmul.f32 %v2844, %v3258
    %v3301 = vmul.f32 %v2920, %v3259
    %v3302 = vmul.f32 %v2996, %v3260
    %v3303 = vmul.f32 %v2619, %v3255
    %v3304 = vmul.f32 %v2695, %v3256
    %v3305 = vmul.f32 %v2771, %v3257
    %v3306 = vmul.f32 %v2847, %v3258
    %v3307 = vmul.f32 %v2923, %v3259
    %v3308 = vmul.f32 %v2999, %v3260
    %v3309 = vmul.f32 %v2621, %v3255
    %v3310 = vmul.f32 %v2697, %v3256
    %v3311 = vmul.f32 %v2773, %v3257
    %v3312 = vmul.f32 %v2849, %v3258
    %v3313 = vmul.f32 %v2925, %v3259
    %v3314 = vmul.f32 %v3001, %v3260
    %v3316 = vperm.slane %v3290, 0
    %v3317 = vperm.slane %v3290, 1
    %v3318 = vperm.slane %v3290, 2
    %v3319 = vperm.slane %v3290, 3
    %v3320 = vperm.slane %v3290, 4
    %v3321 = vperm.slane %v3290, 5
    %v3328 = vadd.f32 %v3291, %v3316
    %v3329 = vadd.f32 %v3292, %v3317
    %v3330 = vadd.f32 %v3293, %v3318
    %v3331 = vadd.f32 %v3294, %v3319
    %v3332 = vadd.f32 %v3295, %v3320
    %v3333 = vadd.f32 %v3296, %v3321
    %v3334 = vadd.f32 %v3297, %v3316
    %v3335 = vadd.f32 %v3298, %v3317
    %v3336 = vadd.f32 %v3299, %v3318
    %v3337 = vadd.f32 %v3300, %v3319
    %v3338 = vadd.f32 %v3301, %v3320
    %v3339 = vadd.f32 %v3302, %v3321
    %v3340 = vadd.f32 %v3303, %v3316
    %v3341 = vadd.f32 %v3304, %v3317
    %v3342 = vadd.f32 %v3305, %v3318
    %v3343 = vadd.f32 %v3306, %v3319
    %v3344 = vadd.f32 %v3307, %v3320
    %v3345 = vadd.f32 %v3308, %v3321
    %v3346 = vadd.f32 %v3309, %v3316
    %v3347 = vadd.f32 %v3310, %v3317
    %v3348 = vadd.f32 %v3311, %v3318
    %v3349 = vadd.f32 %v3312, %v3319
    %v3350 = vadd.f32 %v3313, %v3320
    %v3351 = vadd.f32 %v3314, %v3321
    %v3352 = vtanh.pop %v3328
    %v3353 = vtanh.pop %v3329
    %v3354 = vtanh.pop %v3330
    %v3355 = vtanh.pop %v3331
    %v3356 = vtanh.pop %v3332
    %v3357 = vtanh.pop %v3333
    %v3358 = vtanh.pop %v3334
    %v3359 = vtanh.pop %v3335
    %v3360 = vtanh.pop %v3336
    %v3361 = vtanh.pop %v3337
    %v3362 = vtanh.pop %v3338
    %v3363 = vtanh.pop %v3339
    %v3364 = vtanh.pop %v3340
    %v3365 = vtanh.pop %v3341
    %v3366 = vtanh.pop %v3342
    %v3367 = vtanh.pop %v3343
    %v3368 = vtanh.pop %v3344
    %v3369 = vtanh.pop %v3345
    %v3370 = vtanh.pop %v3346
    %v3371 = vtanh.pop %v3347
    %v3372 = vtanh.pop %v3348
    %v3373 = vtanh.pop %v3349
    %v3374 = vtanh.pop %v3350
    %v3375 = vtanh.pop %v3351
    %3376 = vst [vmem:[#allocation17] sm:$0xff] %v3352
    %3377 = vst [vmem:[#allocation17 + $0x8] sm:$0xff] %v3353
    %3378 = vst [vmem:[#allocation17 + $0x10] sm:$0xff] %v3354
    %3379 = vst [vmem:[#allocation17 + $0x18] sm:$0xff] %v3355
    %3380 = vst [vmem:[#allocation17 + $0x20] sm:$0xff] %v3356
    %3381 = vst [vmem:[#allocation17 + $0x28] sm:$0xff] %v3357
    %3382 = vst [vmem:[#allocation17 + $0x30] sm:$0xff] %v3358
    %3383 = vst [vmem:[#allocation17 + $0x38] sm:$0xff] %v3359
    %3384 = vst [vmem:[#allocation17 + $0x40] sm:$0xff] %v3360
    %3385 = vst [vmem:[#allocation17 + $0x48] sm:$0xff] %v3361
    %3386 = vst [vmem:[#allocation17 + $0x50] sm:$0xff] %v3362
    %3387 = vst [vmem:[#allocation17 + $0x58] sm:$0xff] %v3363
    %3388 = vst [vmem:[#allocation17 + $0x60] sm:$0xff] %v3364
    %3389 = vst [vmem:[#allocation17 + $0x68] sm:$0xff] %v3365
    %3390 = vst [vmem:[#allocation17 + $0x70] sm:$0xff] %v3366
    %3391 = vst [vmem:[#allocation17 + $0x78] sm:$0xff] %v3367
    %3392 = vst [vmem:[#allocation17 + $0x80] sm:$0xff] %v3368
    %3393 = vst [vmem:[#allocation17 + $0x88] sm:$0xff] %v3369
    %3394 = vst [vmem:[#allocation17 + $0x90] sm:$0xff] %v3370
    %3395 = vst [vmem:[#allocation17 + $0x98] sm:$0xff] %v3371
    %3396 = vst [vmem:[#allocation17 + $0xa0] sm:$0xff] %v3372
    %3397 = vst [vmem:[#allocation17 + $0xa8] sm:$0xff] %v3373
    %3398 = vst [vmem:[#allocation17 + $0xb0] sm:$0xff] %v3374
    %3399 = vst [vmem:[#allocation17 + $0xb8] sm:$0xff] %v3375
    // Predicated region
    $region78: #{tpu_custom_call.1} parent=1 // pred_check
      _
    $region79: #{tpu_custom_call.1} parent=1 // pred_check_branch
      %3401 = sbr.rel (0) target = $region81
    $region80: #{tpu_custom_call.1} parent=1 // pred_region
      %3403 = vsyncadd [#allocation4], 0
      %s3404 = sshll.u32 [#allocation17], 4
      %s3405 = int_to_ptr.vmem [resolvable:$true] %s3404
      %s3406 = sshll.u32 %s10, 4
      %s3407 = int_to_ptr.hbm [resolvable:$true] %s3406
      %3412 = dma.vmem_to_hbm [thread:$0]  %s3405, 3072, %s3407, [#allocation4], 768, 768, 48
    $region81: #{tpu_custom_call.1} parent=1 // pred_fallthru
      _
    // Predicated region
    $region82: #{tpu_custom_call.1} parent=1 // pred_check
      _
    $region83: #{tpu_custom_call.1} parent=1 // pred_check_branch
      %3414 = sbr.rel (0) target = $region85
    $region84: #{tpu_custom_call.1} parent=1 // pred_region
      %3416 = dma.done [#allocation4], 3072
    $region85: #{tpu_custom_call.1} parent=1 // pred_fallthru
      _
    %3417 = vsyncpa [#allocation3], 1
    %3418 = vsyncpa [#allocation6], 1
    %3419 = vsyncpa [#allocation9], 1
    %3420 = vsyncpa [#allocation12], 1
    %3421 = vsyncpa [#allocation15], 1
    %3422 = vsyncpa [#allocation4], 1

</llo_original>
